<compile_context>
chip_gen: v5e
topology: v5e:2x2
jax: 0.10.0
libtpu: 0.0.40
codegen_flags: <defaults>
</compile_context>

<pallas_src>
import jax
import jax.numpy as jnp
from jax.experimental import pallas as pl
from jax.experimental.pallas import tpu as pltpu  # noqa: F401


# ----------------------------- Pallas kernels -------------------------------
def _conv_gemm_kernel(w_ref, p_ref, b_ref, o_ref):
    # out[Cout, M] = relu(W[Cout, K] @ P[K, M] + b[Cout, 1]); f32 accumulate/epilogue.
    acc = jnp.dot(w_ref[...], p_ref[...], preferred_element_type=jnp.float32)
    acc = jnp.maximum(acc + b_ref[...], 0.0)
    o_ref[...] = acc.astype(o_ref.dtype)


def conv_gemm(wT, pT, b):
    """Transposed conv-as-GEMM: (Cout,K)@(K,M) + b, ReLU, bf16 lane-dense output."""
    Cout, K = wT.shape
    K2, M = pT.shape
    assert K == K2, (K, K2)
    return pl.pallas_call(
        _conv_gemm_kernel,
        out_shape=jax.ShapeDtypeStruct((Cout, M), jnp.bfloat16),
        in_specs=[
            pl.BlockSpec((Cout, K), lambda: (0, 0)),
            pl.BlockSpec((K, M), lambda: (0, 0)),
            pl.BlockSpec((Cout, 1), lambda: (0, 0)),
        ],
        out_specs=pl.BlockSpec((Cout, M), lambda: (0, 0)),
    )(wT, pT, b)


def _head_kernel(x_ref, fcw_ref, fcb_ref, semw_ref, semb_ref, clsw_ref, clsb_ref,
                 o_ref):
    # fc -> semantic_branch -> cls, no activations (matches AE.forward).
    z = jnp.dot(x_ref[...], fcw_ref[...],
                preferred_element_type=jnp.float32) + fcb_ref[...]
    z = jnp.dot(z.astype(jnp.bfloat16), semw_ref[...],
                preferred_element_type=jnp.float32) + semb_ref[...]
    z = jnp.dot(z.astype(jnp.bfloat16), clsw_ref[...],
                preferred_element_type=jnp.float32) + clsb_ref[...]
    o_ref[...] = z


def fused_head(flat, fcw, fcb, semw, semb, clsw, clsb):
    M = flat.shape[0]
    C = clsw.shape[1]

    def full(shape):
        return pl.BlockSpec(shape, lambda: (0, 0))

    return pl.pallas_call(
        _head_kernel,
        out_shape=jax.ShapeDtypeStruct((M, C), jnp.float32),
        in_specs=[full(flat.shape), full(fcw.shape), full(fcb.shape),
                  full(semw.shape), full(semb.shape),
                  full(clsw.shape), full(clsb.shape)],
        out_specs=full((M, C)),
    )(flat, fcw, fcb, semw, semb, clsw, clsb)


# ------------------------------ JAX glue -------------------------------------
def nearest_resize_hw(x, out_h, out_w):
    # PyTorch F.interpolate(mode='nearest'): src = floor(dst * in / out). x: (...,H,W)
    H, W = x.shape[-2], x.shape[-1]
    ih = (jnp.arange(out_h) * H // out_h).astype(jnp.int32)
    iw = (jnp.arange(out_w) * W // out_w).astype(jnp.int32)
    x = jnp.take(x, ih, axis=-2)
    x = jnp.take(x, iw, axis=-1)
    return x


def im2col_T_cnhw(x, ksize, stride, pad):
    """x: (C, N, H, W) -> patches^T (C*KH*KW, N*OH*OW).

    Row order (c, kh, kw) matches W.reshape(Cout, Cin*KH*KW); column order
    (n, oh, ow). Channel-leading input means no transpose is needed here.
    """
    C, N, H, W = x.shape
    OH = (H + 2 * pad - ksize) // stride + 1
    OW = (W + 2 * pad - ksize) // stride + 1
    xp = jnp.pad(x, ((0, 0), (0, 0), (pad, pad), (pad, pad)))
    cols = [
        xp[:, :, kh:kh + stride * OH:stride, kw:kw + stride * OW:stride]
        for kh in range(ksize) for kw in range(ksize)
    ]                                            # each (C, N, OH, OW)
    pat = jnp.stack(cols, axis=1)                # (C, KH*KW, N, OH, OW)
    return pat.reshape(C * ksize * ksize, N * OH * OW), OH, OW


# ----------------------------- parameters ------------------------------------
def init_params(key, num_classes=10, hidden=512):
    def dense(k, fin, fout):
        lim = 1.0 / jnp.sqrt(jnp.float32(fin))
        kw, kb = jax.random.split(k)
        w = jax.random.uniform(kw, (fin, fout), jnp.float32, -lim, lim)
        b = jax.random.uniform(kb, (fout,), jnp.float32, -lim, lim)
        return w, b

    def conv(k, cin, cout, ksz):
        fan_in = cin * ksz * ksz
        lim = 1.0 / jnp.sqrt(jnp.float32(fan_in))
        kw, kb = jax.random.split(k)
        w = jax.random.uniform(kw, (cout, cin, ksz, ksz), jnp.float32, -lim, lim)
        b = jax.random.uniform(kb, (cout,), jnp.float32, -lim, lim)
        return w, b

    ks = jax.random.split(key, 6)
    p = {}
    p["conv1_w"], p["conv1_b"] = conv(ks[0], 3, 16, 3)
    p["conv2_w"], p["conv2_b"] = conv(ks[1], 16, 32, 3)
    p["fc_w"], p["fc_b"] = dense(ks[2], 32 * 8 * 8, hidden)
    p["sem_w"], p["sem_b"] = dense(ks[3], hidden, hidden)     # semantic_branch
    p["cls_w"], p["cls_b"] = dense(ks[4], hidden, num_classes)
    return p


def prepare_params(p):
    """One-time layout / dtype prep (hoisted out of the per-forward path)."""
    w1 = p["conv1_w"].reshape(16, 3 * 3 * 3)          # (Cout, K=27), order (cin,kh,kw)
    w1 = jnp.pad(w1, ((0, 0), (0, 5)))                # zero-pad K 27 -> 32 once
    w2 = p["conv2_w"].reshape(32, 16 * 3 * 3)         # (32, 144)
    return {
        "w1": w1.astype(jnp.bfloat16),
        "b1": p["conv1_b"].reshape(16, 1).astype(jnp.float32),
        "w2": w2.astype(jnp.bfloat16),
        "b2": p["conv2_b"].reshape(32, 1).astype(jnp.float32),
        "fc_w": p["fc_w"].astype(jnp.bfloat16),
        "fc_b": p["fc_b"].reshape(1, -1).astype(jnp.float32),
        "sem_w": p["sem_w"].astype(jnp.bfloat16),
        "sem_b": p["sem_b"].reshape(1, -1).astype(jnp.float32),
        "cls_w": p["cls_w"].astype(jnp.bfloat16),
        "cls_b": p["cls_b"].reshape(1, -1).astype(jnp.float32),
    }


# ------------------------------ AE forward ------------------------------------
def ae_forward(prep, x):
    N = x.shape[0]
    # CNN_encoder_simple: interpolate(32,32) -> conv1+ReLU -> conv2+ReLU -> fc
    xc = x.astype(jnp.bfloat16).transpose(1, 0, 2, 3)       # channel-leading (C,N,H,W)
    xc = nearest_resize_hw(xc, 32, 32)                      # (3, N, 32, 32)

    p1, oh1, ow1 = im2col_T_cnhw(xc, 3, 2, 1)               # (27, N*256)
    p1 = jnp.pad(p1, ((0, 5), (0, 0)))                      # K pad 27 -> 32 (matches w1)
    h1 = conv_gemm(prep["w1"], p1, prep["b1"])              # (16, N*256) bf16, ReLU'd
    h1 = h1.reshape(16, N, oh1, ow1)                        # stays channel-leading

    p2, oh2, ow2 = im2col_T_cnhw(h1, 3, 2, 1)               # (144, N*64), no transpose
    h2 = conv_gemm(prep["w2"], p2, prep["b2"])              # (32, N*64) bf16, ReLU'd

    # PyTorch x.view(-1, 32*8*8): per-sample (C, H, W) order -> single tiny transpose.
    flat = (h2.reshape(32, N, oh2 * ow2)
              .transpose(1, 0, 2)
              .reshape(N, 32 * oh2 * ow2))                  # (N, 2048) bf16

    # AE.forward: fc -> semantic_branch -> cls (no activations), fused in one kernel.
    return fused_head(flat, prep["fc_w"], prep["fc_b"],
                      prep["sem_w"], prep["sem_b"],
                      prep["cls_w"], prep["cls_b"])


if __name__ == "__main__":
    key = jax.random.PRNGKey(0)
    k_param, k_x = jax.random.split(key)
    num_classes = 10
    params = init_params(k_param, num_classes=num_classes, hidden=512)
    prep = prepare_params(params)                 # one-time weight layout / bf16 cast
    x = jax.random.normal(k_x, (2, 3, 16, 16), jnp.float32)  # NCHW input

    fwd = jax.jit(ae_forward)
    out = fwd(prep, x)
    jax.block_until_ready(out)
    assert out.shape == (2, num_classes), out.shape
    print("KERNEL_OK")
</pallas_src>

<mosaic_0001>
module attributes {stable_mosaic.version = 11 : i64} {
  func.func @_conv_gemm_kernel(%arg0: memref<16x32xbf16, #tpu.memory_space<vmem>>, %arg1: memref<32x512xbf16, #tpu.memory_space<vmem>>, %arg2: memref<16x1xf32, #tpu.memory_space<vmem>>, %arg3: memref<16x512xbf16, #tpu.memory_space<vmem>>) attributes {dimension_semantics = [], scalar_prefetch = 0 : i64, scratch_operands = 0 : i64, tpu.core_type = #tpu.core_type<tc>} {
    %c0 = arith.constant 0 : index
    %c0_0 = arith.constant 0 : index
    %0 = vector.load %arg0[%c0, %c0_0] : memref<16x32xbf16, #tpu.memory_space<vmem>>, vector<16x32xbf16>
    %c0_1 = arith.constant 0 : index
    %c0_2 = arith.constant 0 : index
    %1 = vector.load %arg1[%c0_1, %c0_2] : memref<32x512xbf16, #tpu.memory_space<vmem>>, vector<32x512xbf16>
    %cst = arith.constant dense<0.000000e+00> : vector<16x512xf32>
    %2 = tpu.matmul %0, %1, %cst {dimension_numbers = #tpu.dot_dimension_numbers<[1], [0], [0], [1], [0, 0, 1, 1], [], []>} : vector<16x32xbf16>, vector<32x512xbf16>, vector<16x512xf32> -> vector<16x512xf32>
    %c0_3 = arith.constant 0 : index
    %c0_4 = arith.constant 0 : index
    %3 = vector.load %arg2[%c0_3, %c0_4] : memref<16x1xf32, #tpu.memory_space<vmem>>, vector<16x1xf32>
    %4 = vector.broadcast %3 : vector<16x1xf32> to vector<16x512xf32>
    %5 = arith.addf %2, %4 : vector<16x512xf32>
    %cst_5 = arith.constant 0.000000e+00 : f32
    %6 = vector.broadcast %cst_5 : f32 to vector<16x512xf32>
    %7 = arith.maximumf %5, %6 : vector<16x512xf32>
    %8 = arith.truncf %7 : vector<16x512xf32> to vector<16x512xbf16>
    %c0_6 = arith.constant 0 : index
    %c0_7 = arith.constant 0 : index
    %9 = vector.load %arg3[%c0_6, %c0_7] : memref<16x512xbf16, #tpu.memory_space<vmem>>, vector<16x512xbf16>
    tpu.vector_store %arg3[%c0_6, %c0_7], %8 {strides = array<i32>} : memref<16x512xbf16, #tpu.memory_space<vmem>>, vector<16x512xbf16>,
    return
  }
}

module attributes {stable_mosaic.version = 11 : i64} {
  func.func @_conv_gemm_kernel(%arg0: memref<32x144xbf16, #tpu.memory_space<vmem>>, %arg1: memref<144x128xbf16, #tpu.memory_space<vmem>>, %arg2: memref<32x1xf32, #tpu.memory_space<vmem>>, %arg3: memref<32x128xbf16, #tpu.memory_space<vmem>>) attributes {dimension_semantics = [], scalar_prefetch = 0 : i64, scratch_operands = 0 : i64, tpu.core_type = #tpu.core_type<tc>} {
    %c0 = arith.constant 0 : index
    %c0_0 = arith.constant 0 : index
    %0 = vector.load %arg0[%c0, %c0_0] : memref<32x144xbf16, #tpu.memory_space<vmem>>, vector<32x144xbf16>
    %c0_1 = arith.constant 0 : index
    %c0_2 = arith.constant 0 : index
    %1 = vector.load %arg1[%c0_1, %c0_2] : memref<144x128xbf16, #tpu.memory_space<vmem>>, vector<144x128xbf16>
    %cst = arith.constant dense<0.000000e+00> : vector<32x128xf32>
    %2 = tpu.matmul %0, %1, %cst {dimension_numbers = #tpu.dot_dimension_numbers<[1], [0], [0], [1], [0, 0, 1, 1], [], []>} : vector<32x144xbf16>, vector<144x128xbf16>, vector<32x128xf32> -> vector<32x128xf32>
    %c0_3 = arith.constant 0 : index
    %c0_4 = arith.constant 0 : index
    %3 = vector.load %arg2[%c0_3, %c0_4] : memref<32x1xf32, #tpu.memory_space<vmem>>, vector<32x1xf32>
    %4 = vector.broadcast %3 : vector<32x1xf32> to vector<32x128xf32>
    %5 = arith.addf %2, %4 : vector<32x128xf32>
    %cst_5 = arith.constant 0.000000e+00 : f32
    %6 = vector.broadcast %cst_5 : f32 to vector<32x128xf32>
    %7 = arith.maximumf %5, %6 : vector<32x128xf32>
    %8 = arith.truncf %7 : vector<32x128xf32> to vector<32x128xbf16>
    %c0_6 = arith.constant 0 : index
    %c0_7 = arith.constant 0 : index
    %9 = vector.load %arg3[%c0_6, %c0_7] : memref<32x128xbf16, #tpu.memory_space<vmem>>, vector<32x128xbf16>
    tpu.vector_store %arg3[%c0_6, %c0_7], %8 {strides = array<i32>} : memref<32x128xbf16, #tpu.memory_space<vmem>>, vector<32x128xbf16>,
    return
  }
}

module attributes {stable_mosaic.version = 11 : i64} {
  func.func @_head_kernel(%arg0: memref<2x2048xbf16, #tpu.memory_space<vmem>>, %arg1: memref<2048x512xbf16, #tpu.memory_space<vmem>>, %arg2: memref<1x512xf32, #tpu.memory_space<vmem>>, %arg3: memref<512x512xbf16, #tpu.memory_space<vmem>>, %arg4: memref<1x512xf32, #tpu.memory_space<vmem>>, %arg5: memref<512x10xbf16, #tpu.memory_space<vmem>>, %arg6: memref<1x10xf32, #tpu.memory_space<vmem>>, %arg7: memref<2x10xf32, #tpu.memory_space<vmem>>) attributes {dimension_semantics = [], scalar_prefetch = 0 : i64, scratch_operands = 0 : i64, tpu.core_type = #tpu.core_type<tc>} {
    %c0 = arith.constant 0 : index
    %c0_0 = arith.constant 0 : index
    %0 = vector.load %arg0[%c0, %c0_0] : memref<2x2048xbf16, #tpu.memory_space<vmem>>, vector<2x2048xbf16>
    %c0_1 = arith.constant 0 : index
    %c0_2 = arith.constant 0 : index
    %1 = vector.load %arg1[%c0_1, %c0_2] : memref<2048x512xbf16, #tpu.memory_space<vmem>>, vector<2048x512xbf16>
    %cst = arith.constant dense<0.000000e+00> : vector<2x512xf32>
    %2 = tpu.matmul %0, %1, %cst {dimension_numbers = #tpu.dot_dimension_numbers<[1], [0], [0], [1], [0, 0, 1, 1], [], []>} : vector<2x2048xbf16>, vector<2048x512xbf16>, vector<2x512xf32> -> vector<2x512xf32>
    %c0_3 = arith.constant 0 : index
    %c0_4 = arith.constant 0 : index
    %3 = vector.load %arg2[%c0_3, %c0_4] : memref<1x512xf32, #tpu.memory_space<vmem>>, vector<1x512xf32>
    %4 = vector.broadcast %3 : vector<1x512xf32> to vector<2x512xf32>
    %5 = arith.addf %2, %4 : vector<2x512xf32>
    %6 = arith.truncf %5 : vector<2x512xf32> to vector<2x512xbf16>
    %c0_5 = arith.constant 0 : index
    %c0_6 = arith.constant 0 : index
    %7 = vector.load %arg3[%c0_5, %c0_6] : memref<512x512xbf16, #tpu.memory_space<vmem>>, vector<512x512xbf16>
    %cst_7 = arith.constant dense<0.000000e+00> : vector<2x512xf32>
    %8 = tpu.matmul %6, %7, %cst_7 {dimension_numbers = #tpu.dot_dimension_numbers<[1], [0], [0], [1], [0, 0, 1, 1], [], []>} : vector<2x512xbf16>, vector<512x512xbf16>, vector<2x512xf32> -> vector<2x512xf32>
    %c0_8 = arith.constant 0 : index
    %c0_9 = arith.constant 0 : index
    %9 = vector.load %arg4[%c0_8, %c0_9] : memref<1x512xf32, #tpu.memory_space<vmem>>, vector<1x512xf32>
    %10 = vector.broadcast %9 : vector<1x512xf32> to vector<2x512xf32>
    %11 = arith.addf %8, %10 : vector<2x512xf32>
    %12 = arith.truncf %11 : vector<2x512xf32> to vector<2x512xbf16>
    %c0_10 = arith.constant 0 : index
    %c0_11 = arith.constant 0 : index
    %13 = vector.load %arg5[%c0_10, %c0_11] : memref<512x10xbf16, #tpu.memory_space<vmem>>, vector<512x10xbf16>
    %cst_12 = arith.constant dense<0.000000e+00> : vector<2x10xf32>
    %14 = tpu.matmul %12, %13, %cst_12 {dimension_numbers = #tpu.dot_dimension_numbers<[1], [0], [0], [1], [0, 0, 1, 1], [], []>} : vector<2x512xbf16>, vector<512x10xbf16>, vector<2x10xf32> -> vector<2x10xf32>
    %c0_13 = arith.constant 0 : index
    %c0_14 = arith.constant 0 : index
    %15 = vector.load %arg6[%c0_13, %c0_14] : memref<1x10xf32, #tpu.memory_space<vmem>>, vector<1x10xf32>
    %16 = vector.broadcast %15 : vector<1x10xf32> to vector<2x10xf32>
    %17 = arith.addf %14, %16 : vector<2x10xf32>
    %c0_15 = arith.constant 0 : index
    %c0_16 = arith.constant 0 : index
    %18 = vector.load %arg7[%c0_15, %c0_16] : memref<2x10xf32, #tpu.memory_space<vmem>>, vector<2x10xf32>
    tpu.vector_store %arg7[%c0_15, %c0_16], %17 {strides = array<i32>} : memref<2x10xf32, #tpu.memory_space<vmem>>, vector<2x10xf32>,
    return
  }
}

</mosaic_0001>

<llo_original>
// kernel: ae_forward.3
$region0: #{ae_forward.3}
  #allocation0 [shape = 'u32[]', space=smem, size = 0x4, offset = 0x4, fixed_abs, tag = 'smem constant byte address 0x4 - core index']
  #allocation1 [shape = 'u32[72,128]{1,0:T(1,128)}', space=vmem, size = 0x9000, scoped, tag = 'internal scratch']
  %s0 = inlined_call_operand.vmem [shape: bf16[16,32], index: 0, kind: input, shape index: {}]
  %s1 = inlined_call_operand.vmem [shape: bf16[32,512], index: 1, kind: input, shape index: {}]
  %s2 = inlined_call_operand.vmem [shape: f32[16,1], index: 2, kind: input, shape index: {}]
  %s3 = inlined_call_operand.vmem [shape: bf16[16,512], index: 3, kind: output, shape index: {}]
  %s4 = sld [smem:[#allocation0]]
  $region22: #{ae_forward.3} parent=0
    _
  %s6 = ssub.s32 1, %s4
  %s7 = scalar_select 0, %s6, %s4
  // Predicated region
  $region2: #{ae_forward.3} parent=0 // pred_check
    _
  $region3: #{ae_forward.3} parent=0 // pred_check_branch
    %9 = sbr.rel (0) target = $region5
  $region4: #{ae_forward.3} parent=0 // pred_region
    _
  $region5: #{ae_forward.3} parent=0 // pred_fallthru
    _
  // Predicated region
  $region6: #{ae_forward.3} parent=0 // pred_check
    _
  $region7: #{ae_forward.3} parent=0 // pred_check_branch
    %11 = sbr.rel (0) target = $region9
  $region8: #{ae_forward.3} parent=0 // pred_region
    _
  $region9: #{ae_forward.3} parent=0 // pred_fallthru
    _
  // Predicated region
  $region10: #{ae_forward.3} parent=0 // pred_check
    _
  $region11: #{ae_forward.3} parent=0 // pred_check_branch
    %13 = sbr.rel (0) target = $region13
  $region12: #{ae_forward.3} parent=0 // pred_region
    _
  $region13: #{ae_forward.3} parent=0 // pred_fallthru
    _
  %v15 = vld [vmem:[%s0] sm:$0xf]
  %v16 = vld [vmem:[%s0 + $0x4] sm:$0xf]
  %v17 = vld [vmem:[%s1] sm:$0xff]
  %v18 = vld [vmem:[%s1 + $0x8] sm:$0xff]
  %v19 = vld [vmem:[%s1 + $0x10] sm:$0xff]
  %v20 = vld [vmem:[%s1 + $0x18] sm:$0xff]
  %v21 = vld [vmem:[%s1 + $0x20] sm:$0xff]
  %v22 = vld [vmem:[%s1 + $0x28] sm:$0xff]
  %v23 = vld [vmem:[%s1 + $0x30] sm:$0xff]
  %v24 = vld [vmem:[%s1 + $0x38] sm:$0xff]
  %v25 = vld [vmem:[%s2] sm:$0xff]
  %v26 = vld [vmem:[%s2 + $0x8] sm:$0xff]
  %28 = vset.pattern.permute.xlu0 0
  %29 = vperm.xlu0 %28, %v25
  %v30 = vpop.permute.xlu0 %29
  %33 = vset.pattern.permute.xlu0 0
  %34 = vperm.xlu0 %33, %v26
  %v35 = vpop.permute.xlu0 %34
  %v39 = vunpack.c.l.b16 %v15
  %v40 = vunpack.c.l.b16 %v16
  %v41 = vpack.c.b16 %v40, %v39
  %v50 = vunpack.c.l.b16 %v17
  %v51 = vunpack.c.h.b16 %v17
  %v52 = vunpack.c.l.b16 %v18
  %v53 = vunpack.c.h.b16 %v18
  %v54 = vunpack.c.l.b16 %v19
  %v55 = vunpack.c.h.b16 %v19
  %v56 = vunpack.c.l.b16 %v20
  %v57 = vunpack.c.h.b16 %v20
  %v58 = vunpack.c.l.b16 %v21
  %v59 = vunpack.c.h.b16 %v21
  %v60 = vunpack.c.l.b16 %v22
  %v61 = vunpack.c.h.b16 %v22
  %v62 = vunpack.c.l.b16 %v23
  %v63 = vunpack.c.h.b16 %v23
  %v64 = vunpack.c.l.b16 %v24
  %v65 = vunpack.c.h.b16 %v24
  %v66 = vpack.c.b16 %v54, %v50
  %v67 = vpack.c.b16 %v55, %v51
  %v68 = vpack.c.b16 %v56, %v52
  %v69 = vpack.c.b16 %v57, %v53
  %v70 = vpack.c.b16 %v62, %v58
  %v71 = vpack.c.b16 %v63, %v59
  %v72 = vpack.c.b16 %v64, %v60
  %v73 = vpack.c.b16 %v65, %v61
  %vm82 = vcmask 261120
  %v84 = vsel %vm82, %v41, 0
  %86 = vmatpush.bf16.msra.mxu0 0
  %87 = vmatpush.bf16.msra.mxu0 0
  %88 = vmatpush.bf16.msra.mxu0 0
  %89 = vmatpush.bf16.msra.mxu0 0
  %90 = vmatpush.bf16.msra.mxu0 0
  %91 = vmatpush.bf16.msra.mxu0 0
  %92 = vmatpush.bf16.msra.mxu0 %v70
  %93 = vmatpush.bf16.msra.mxu0 %v66
  %94 = vmatmul.bf16.gmra.mxu0 %v84
  %v95 = vpop.f32.mrf.mxu0
  %v96 = vadd.f32 %v30, %v95
  %v97 = vpop.f32.mrf.mxu0
  %v98 = vadd.f32 %v35, %v97
  %99 = vdwg.mxu0
  %100 = vmatpush.bf16.msra.mxu0 0
  %101 = vmatpush.bf16.msra.mxu0 0
  %102 = vmatpush.bf16.msra.mxu0 0
  %103 = vmatpush.bf16.msra.mxu0 0
  %104 = vmatpush.bf16.msra.mxu0 0
  %105 = vmatpush.bf16.msra.mxu0 0
  %106 = vmatpush.bf16.msra.mxu0 %v71
  %107 = vmatpush.bf16.msra.mxu0 %v67
  %108 = vmatmul.bf16.gmra.mxu0 %v84
  %v109 = vpop.f32.mrf.mxu0
  %v110 = vadd.f32 %v30, %v109
  %v111 = vpop.f32.mrf.mxu0
  %v112 = vadd.f32 %v35, %v111
  %113 = vdwg.mxu0
  %114 = vmatpush.bf16.msra.mxu0 0
  %115 = vmatpush.bf16.msra.mxu0 0
  %116 = vmatpush.bf16.msra.mxu0 0
  %117 = vmatpush.bf16.msra.mxu0 0
  %118 = vmatpush.bf16.msra.mxu0 0
  %119 = vmatpush.bf16.msra.mxu0 0
  %120 = vmatpush.bf16.msra.mxu0 %v72
  %121 = vmatpush.bf16.msra.mxu0 %v68
  %122 = vmatmul.bf16.gmra.mxu0 %v84
  %v123 = vpop.f32.mrf.mxu0
  %v124 = vadd.f32 %v30, %v123
  %v125 = vpop.f32.mrf.mxu0
  %v126 = vadd.f32 %v35, %v125
  %127 = vdwg.mxu0
  %128 = vmatpush.bf16.msra.mxu0 0
  %129 = vmatpush.bf16.msra.mxu0 0
  %130 = vmatpush.bf16.msra.mxu0 0
  %131 = vmatpush.bf16.msra.mxu0 0
  %132 = vmatpush.bf16.msra.mxu0 0
  %133 = vmatpush.bf16.msra.mxu0 0
  %134 = vmatpush.bf16.msra.mxu0 %v73
  %135 = vmatpush.bf16.msra.mxu0 %v69
  %136 = vmatmul.bf16.gmra.mxu0 %v84
  %v137 = vpop.f32.mrf.mxu0
  %v138 = vadd.f32 %v30, %v137
  %v139 = vpop.f32.mrf.mxu0
  %v140 = vadd.f32 %v35, %v139
  %141 = vdwg.mxu0
  %v142 = vmax.f32 %v96, 0.0
  %v143 = vmax.f32 %v110, 0.0
  %v144 = vmax.f32 %v124, 0.0
  %v145 = vmax.f32 %v138, 0.0
  %v146 = vmax.f32 %v98, 0.0
  %v147 = vmax.f32 %v112, 0.0
  %v148 = vmax.f32 %v126, 0.0
  %v149 = vmax.f32 %v140, 0.0
  %v150 = vpack.c.bf16 %v143, %v142
  %v151 = vpack.c.bf16 %v145, %v144
  %v152 = vpack.c.bf16 %v147, %v146
  %v153 = vpack.c.bf16 %v149, %v148
  %154 = vst [vmem:[%s3] sm:$0xff] %v150
  %155 = vst [vmem:[%s3 + $0x8] sm:$0xff] %v151
  %156 = vst [vmem:[%s3 + $0x10] sm:$0xff] %v152
  %157 = vst [vmem:[%s3 + $0x18] sm:$0xff] %v153
  // Predicated region
  $region14: #{ae_forward.3} parent=0 // pred_check
    _
  $region15: #{ae_forward.3} parent=0 // pred_check_branch
    %159 = sbr.rel (0) target = $region17
  $region16: #{ae_forward.3} parent=0 // pred_region
    _
  $region17: #{ae_forward.3} parent=0 // pred_fallthru
    _
  // Predicated region
  $region18: #{ae_forward.3} parent=0 // pred_check
    _
  $region19: #{ae_forward.3} parent=0 // pred_check_branch
    %161 = sbr.rel (0) target = $region21
  $region20: #{ae_forward.3} parent=0 // pred_region
    _
  $region21: #{ae_forward.3} parent=0 // pred_fallthru
    _

// kernel: ae_forward.4
$region0: #{ae_forward.4}
  #allocation0 [shape = 'u32[]', space=smem, size = 0x4, offset = 0x4, fixed_abs, tag = 'smem constant byte address 0x4 - core index']
  #allocation1 [shape = 'u32[72,128]{1,0:T(1,128)}', space=vmem, size = 0x9000, scoped, tag = 'internal scratch']
  %s0 = inlined_call_operand.vmem [shape: bf16[32,144], index: 0, kind: input, shape index: {}]
  %s1 = inlined_call_operand.vmem [shape: bf16[144,128], index: 1, kind: input, shape index: {}]
  %s2 = inlined_call_operand.vmem [shape: f32[32,1], index: 2, kind: input, shape index: {}]
  %s3 = inlined_call_operand.vmem [shape: bf16[32,128], index: 3, kind: output, shape index: {}]
  %s4 = sld [smem:[#allocation0]]
  $region22: #{ae_forward.4} parent=0
    _
  %s6 = ssub.s32 1, %s4
  %s7 = scalar_select 0, %s6, %s4
  // Predicated region
  $region2: #{ae_forward.4} parent=0 // pred_check
    _
  $region3: #{ae_forward.4} parent=0 // pred_check_branch
    %9 = sbr.rel (0) target = $region5
  $region4: #{ae_forward.4} parent=0 // pred_region
    _
  $region5: #{ae_forward.4} parent=0 // pred_fallthru
    _
  // Predicated region
  $region6: #{ae_forward.4} parent=0 // pred_check
    _
  $region7: #{ae_forward.4} parent=0 // pred_check_branch
    %11 = sbr.rel (0) target = $region9
  $region8: #{ae_forward.4} parent=0 // pred_region
    _
  $region9: #{ae_forward.4} parent=0 // pred_fallthru
    _
  // Predicated region
  $region10: #{ae_forward.4} parent=0 // pred_check
    _
  $region11: #{ae_forward.4} parent=0 // pred_check_branch
    %13 = sbr.rel (0) target = $region13
  $region12: #{ae_forward.4} parent=0 // pred_region
    _
  $region13: #{ae_forward.4} parent=0 // pred_fallthru
    _
  %v15 = vld [vmem:[%s0] sm:$0xff]
  %v16 = vld [vmem:[%s0 + $0x8] sm:$0xff]
  %v17 = vld [vmem:[%s0 + $0x10] sm:$0xff]
  %v18 = vld [vmem:[%s0 + $0x18] sm:$0xff]
  %v19 = vld [vmem:[%s1] sm:$0xf]
  %v20 = vld [vmem:[%s1 + $0x4] sm:$0xf]
  %v21 = vld [vmem:[%s1 + $0x8] sm:$0xf]
  %v22 = vld [vmem:[%s1 + $0xc] sm:$0xf]
  %v23 = vld [vmem:[%s1 + $0x10] sm:$0xf]
  %v24 = vld [vmem:[%s1 + $0x14] sm:$0xf]
  %v25 = vld [vmem:[%s1 + $0x18] sm:$0xf]
  %v26 = vld [vmem:[%s1 + $0x1c] sm:$0xf]
  %v27 = vld [vmem:[%s1 + $0x20] sm:$0xf]
  %v28 = vld [vmem:[%s1 + $0x24] sm:$0xf]
  %v29 = vld [vmem:[%s1 + $0x28] sm:$0xf]
  %v30 = vld [vmem:[%s1 + $0x2c] sm:$0xf]
  %v31 = vld [vmem:[%s1 + $0x30] sm:$0xf]
  %v32 = vld [vmem:[%s1 + $0x34] sm:$0xf]
  %v33 = vld [vmem:[%s1 + $0x38] sm:$0xf]
  %v34 = vld [vmem:[%s1 + $0x3c] sm:$0xf]
  %v35 = vld [vmem:[%s1 + $0x40] sm:$0xf]
  %v36 = vld [vmem:[%s1 + $0x44] sm:$0xf]
  %v37 = vld [vmem:[%s2] sm:$0xff]
  %v38 = vld [vmem:[%s2 + $0x8] sm:$0xff]
  %v39 = vld [vmem:[%s2 + $0x10] sm:$0xff]
  %v40 = vld [vmem:[%s2 + $0x18] sm:$0xff]
  %42 = vset.pattern.permute.xlu0 0
  %43 = vperm.xlu0 %42, %v37
  %v44 = vpop.permute.xlu0 %43
  %47 = vset.pattern.permute.xlu0 0
  %48 = vperm.xlu0 %47, %v38
  %v49 = vpop.permute.xlu0 %48
  %52 = vset.pattern.permute.xlu0 0
  %53 = vperm.xlu0 %52, %v39
  %v54 = vpop.permute.xlu0 %53
  %57 = vset.pattern.permute.xlu0 0
  %58 = vperm.xlu0 %57, %v40
  %v59 = vpop.permute.xlu0 %58
  %v65 = vunpack.c.l.b16 %v15
  %v66 = vunpack.c.h.b16 %v15
  %v67 = vunpack.c.l.b16 %v16
  %v68 = vunpack.c.h.b16 %v16
  %v69 = vunpack.c.l.b16 %v17
  %v70 = vunpack.c.h.b16 %v17
  %v71 = vunpack.c.l.b16 %v18
  %v72 = vunpack.c.h.b16 %v18
  %v73 = vpack.c.b16 %v67, %v65
  %v74 = vpack.c.b16 %v68, %v66
  %v75 = vpack.c.b16 %v71, %v69
  %v76 = vpack.c.b16 %v72, %v70
  %v97 = vunpack.c.l.b16 %v19
  %v98 = vunpack.c.l.b16 %v20
  %v99 = vunpack.c.l.b16 %v21
  %v100 = vunpack.c.l.b16 %v22
  %v101 = vunpack.c.l.b16 %v23
  %v102 = vunpack.c.l.b16 %v24
  %v103 = vunpack.c.l.b16 %v25
  %v104 = vunpack.c.l.b16 %v26
  %v105 = vunpack.c.l.b16 %v27
  %v106 = vunpack.c.l.b16 %v28
  %v107 = vunpack.c.l.b16 %v29
  %v108 = vunpack.c.l.b16 %v30
  %v109 = vunpack.c.l.b16 %v31
  %v110 = vunpack.c.l.b16 %v32
  %v111 = vunpack.c.l.b16 %v33
  %v112 = vunpack.c.l.b16 %v34
  %v113 = vunpack.c.l.b16 %v35
  %v114 = vunpack.c.l.b16 %v36
  %v115 = vpack.c.b16 %v98, %v97
  %v116 = vpack.c.b16 %v100, %v99
  %v117 = vpack.c.b16 %v102, %v101
  %v118 = vpack.c.b16 %v104, %v103
  %v119 = vpack.c.b16 %v106, %v105
  %v120 = vpack.c.b16 %v108, %v107
  %v121 = vpack.c.b16 %v110, %v109
  %v122 = vpack.c.b16 %v112, %v111
  %v123 = vpack.c.b16 %v114, %v113
  %vm133 = vcmask 130048
  %v135 = vsel %vm133, %v74, 0
  %v138 = vsel %vm133, %v76, 0
  %140 = vmatpush.bf16.msra.mxu0 %v122
  %141 = vmatpush.bf16.msra.mxu0 %v121
  %142 = vmatpush.bf16.msra.mxu0 %v120
  %143 = vmatpush.bf16.msra.mxu0 %v119
  %144 = vmatpush.bf16.msra.mxu0 %v118
  %145 = vmatpush.bf16.msra.mxu0 %v117
  %146 = vmatpush.bf16.msra.mxu0 %v116
  %147 = vmatpush.bf16.msra.mxu0 %v115
  %148 = vmatmul.bf16.gmra.mxu0 %v73
  %v149 = vpop.f32.mrf.mxu0
  %v150 = vadd.f32 %v44, %v149
  %v151 = vpop.f32.mrf.mxu0
  %v152 = vadd.f32 %v49, %v151
  %153 = vmatmul.bf16.gmra.mxu0 %v75
  %v154 = vpop.f32.mrf.mxu0
  %v155 = vadd.f32 %v54, %v154
  %v156 = vpop.f32.mrf.mxu0
  %v157 = vadd.f32 %v59, %v156
  %158 = vdwg.mxu0
  %159 = vmatpush.bf16.msra.mxu0 0
  %160 = vmatpush.bf16.msra.mxu0 0
  %161 = vmatpush.bf16.msra.mxu0 0
  %162 = vmatpush.bf16.msra.mxu0 0
  %163 = vmatpush.bf16.msra.mxu0 0
  %164 = vmatpush.bf16.msra.mxu0 0
  %165 = vmatpush.bf16.msra.mxu0 0
  %166 = vmatpush.bf16.msra.mxu0 %v123
  %167 = vmatmul.bf16.gmra.mxu0 %v135
  %v168 = vpop.f32.mrf.mxu0
  %v169 = vadd.f32 %v150, %v168
  %v170 = vpop.f32.mrf.mxu0
  %v171 = vadd.f32 %v152, %v170
  %172 = vmatmul.bf16.gmra.mxu0 %v138
  %v173 = vpop.f32.mrf.mxu0
  %v174 = vadd.f32 %v155, %v173
  %v175 = vpop.f32.mrf.mxu0
  %v176 = vadd.f32 %v157, %v175
  %177 = vdwg.mxu0
  %v178 = vmax.f32 %v169, 0.0
  %v179 = vmax.f32 %v171, 0.0
  %v180 = vmax.f32 %v174, 0.0
  %v181 = vmax.f32 %v176, 0.0
  %v182 = vpack.c.bf16 %v178, %v178
  %v183 = vpack.c.bf16 %v179, %v179
  %v184 = vpack.c.bf16 %v180, %v180
  %v185 = vpack.c.bf16 %v181, %v181
  %186 = vst [vmem:[%s3] sm:$0xf] %v182
  %187 = vst [vmem:[%s3 + $0x4] sm:$0xf] %v183
  %188 = vst [vmem:[%s3 + $0x8] sm:$0xf] %v184
  %189 = vst [vmem:[%s3 + $0xc] sm:$0xf] %v185
  // Predicated region
  $region14: #{ae_forward.4} parent=0 // pred_check
    _
  $region15: #{ae_forward.4} parent=0 // pred_check_branch
    %191 = sbr.rel (0) target = $region17
  $region16: #{ae_forward.4} parent=0 // pred_region
    _
  $region17: #{ae_forward.4} parent=0 // pred_fallthru
    _
  // Predicated region
  $region18: #{ae_forward.4} parent=0 // pred_check
    _
  $region19: #{ae_forward.4} parent=0 // pred_check_branch
    %193 = sbr.rel (0) target = $region21
  $region20: #{ae_forward.4} parent=0 // pred_region
    _
  $region21: #{ae_forward.4} parent=0 // pred_fallthru
    _

// kernel: ae_forward.5
$region0: #{ae_forward.5}
  #allocation0 [shape = 'u32[]', space=smem, size = 0x4, offset = 0x4, fixed_abs, tag = 'smem constant byte address 0x4 - core index']
  #allocation1 [shape = 'u32[72,128]{1,0:T(1,128)}', space=vmem, size = 0x9000, scoped, tag = 'internal scratch']
  %s0 = inlined_call_operand.vmem [shape: bf16[2,2048], index: 0, kind: input, shape index: {}]
  %s1 = inlined_call_operand.vmem [shape: bf16[2048,512], index: 1, kind: input, shape index: {}]
  %s2 = inlined_call_operand.vmem [shape: f32[1,512], index: 2, kind: input, shape index: {}]
  %s3 = inlined_call_operand.vmem [shape: bf16[512,512], index: 3, kind: input, shape index: {}]
  %s4 = inlined_call_operand.vmem [shape: f32[1,512], index: 4, kind: input, shape index: {}]
  %s5 = inlined_call_operand.vmem [shape: bf16[512,10], index: 5, kind: input, shape index: {}]
  %s6 = inlined_call_operand.vmem [shape: f32[1,10], index: 6, kind: input, shape index: {}]
  %s7 = inlined_call_operand.hbm [shape: f32[2,10], index: 7, kind: output, shape index: {}]
  %s8 = sld [smem:[#allocation0]]
  $region38: #{ae_forward.5} parent=0
    _
  %s10 = ssub.s32 1, %s8
  %s11 = scalar_select 0, %s10, %s8
  $region1: #{ae_forward.5} parent=0
    #allocation2 [shape = 'u8[1024]{0}', space=vmem, size = 0x400, scoped, tag = 'output window, operand 0, single buffered']
    #allocation3 [shape = 's32[1]{0}', space=sflag, size = 0x4, scoped, tag = 'scoped memory for ae_forward.5']
    %12 = vsyncpa [#allocation3], 0
    // Predicated region
    $region2: #{ae_forward.5} parent=1 // pred_check
      _
    $region3: #{ae_forward.5} parent=1 // pred_check_branch
      %14 = sbr.rel (0) target = $region5
    $region4: #{ae_forward.5} parent=1 // pred_region
      _
    $region5: #{ae_forward.5} parent=1 // pred_fallthru
      _
    // Predicated region
    $region6: #{ae_forward.5} parent=1 // pred_check
      _
    $region7: #{ae_forward.5} parent=1 // pred_check_branch
      %16 = sbr.rel (0) target = $region9
    $region8: #{ae_forward.5} parent=1 // pred_region
      _
    $region9: #{ae_forward.5} parent=1 // pred_fallthru
      _
    // Predicated region
    $region10: #{ae_forward.5} parent=1 // pred_check
      _
    $region11: #{ae_forward.5} parent=1 // pred_check_branch
      %18 = sbr.rel (0) target = $region13
    $region12: #{ae_forward.5} parent=1 // pred_region
      _
    $region13: #{ae_forward.5} parent=1 // pred_fallthru
      _
    // Predicated region
    $region14: #{ae_forward.5} parent=1 // pred_check
      _
    $region15: #{ae_forward.5} parent=1 // pred_check_branch
      %20 = sbr.rel (0) target = $region17
    $region16: #{ae_forward.5} parent=1 // pred_region
      _
    $region17: #{ae_forward.5} parent=1 // pred_fallthru
      _
    // Predicated region
    $region18: #{ae_forward.5} parent=1 // pred_check
      _
    $region19: #{ae_forward.5} parent=1 // pred_check_branch
      %22 = sbr.rel (0) target = $region21
    $region20: #{ae_forward.5} parent=1 // pred_region
      _
    $region21: #{ae_forward.5} parent=1 // pred_fallthru
      _
    // Predicated region
    $region22: #{ae_forward.5} parent=1 // pred_check
      _
    $region23: #{ae_forward.5} parent=1 // pred_check_branch
      %24 = sbr.rel (0) target = $region25
    $region24: #{ae_forward.5} parent=1 // pred_region
      _
    $region25: #{ae_forward.5} parent=1 // pred_fallthru
      _
    // Predicated region
    $region26: #{ae_forward.5} parent=1 // pred_check
      _
    $region27: #{ae_forward.5} parent=1 // pred_check_branch
      %26 = sbr.rel (0) target = $region29
    $region28: #{ae_forward.5} parent=1 // pred_region
      _
    $region29: #{ae_forward.5} parent=1 // pred_fallthru
      _
    %v27 = vld [vmem:[%s0] sm:$0xff]
    %v28 = vld [vmem:[%s0 + $0x8] sm:$0xff]
    %v29 = vld [vmem:[%s1] sm:$0xff]
    %v30 = vld [vmem:[%s1 + $0x8] sm:$0xff]
    %v31 = vld [vmem:[%s1 + $0x10] sm:$0xff]
    %v32 = vld [vmem:[%s1 + $0x18] sm:$0xff]
    %v33 = vld [vmem:[%s1 + $0x20] sm:$0xff]
    %v34 = vld [vmem:[%s1 + $0x28] sm:$0xff]
    %v35 = vld [vmem:[%s1 + $0x30] sm:$0xff]
    %v36 = vld [vmem:[%s1 + $0x38] sm:$0xff]
    %v37 = vld [vmem:[%s1 + $0x40] sm:$0xff]
    %v38 = vld [vmem:[%s1 + $0x48] sm:$0xff]
    %v39 = vld [vmem:[%s1 + $0x50] sm:$0xff]
    %v40 = vld [vmem:[%s1 + $0x58] sm:$0xff]
    %v41 = vld [vmem:[%s1 + $0x60] sm:$0xff]
    %v42 = vld [vmem:[%s1 + $0x68] sm:$0xff]
    %v43 = vld [vmem:[%s1 + $0x70] sm:$0xff]
    %v44 = vld [vmem:[%s1 + $0x78] sm:$0xff]
    %v45 = vld [vmem:[%s1 + $0x80] sm:$0xff]
    %v46 = vld [vmem:[%s1 + $0x88] sm:$0xff]
    %v47 = vld [vmem:[%s1 + $0x90] sm:$0xff]
    %v48 = vld [vmem:[%s1 + $0x98] sm:$0xff]
    %v49 = vld [vmem:[%s1 + $0xa0] sm:$0xff]
    %v50 = vld [vmem:[%s1 + $0xa8] sm:$0xff]
    %v51 = vld [vmem:[%s1 + $0xb0] sm:$0xff]
    %v52 = vld [vmem:[%s1 + $0xb8] sm:$0xff]
    %v53 = vld [vmem:[%s1 + $0xc0] sm:$0xff]
    %v54 = vld [vmem:[%s1 + $0xc8] sm:$0xff]
    %v55 = vld [vmem:[%s1 + $0xd0] sm:$0xff]
    %v56 = vld [vmem:[%s1 + $0xd8] sm:$0xff]
    %v57 = vld [vmem:[%s1 + $0xe0] sm:$0xff]
    %v58 = vld [vmem:[%s1 + $0xe8] sm:$0xff]
    %v59 = vld [vmem:[%s1 + $0xf0] sm:$0xff]
    %v60 = vld [vmem:[%s1 + $0xf8] sm:$0xff]
    %v61 = vld [vmem:[%s1 + $0x100] sm:$0xff]
    %v62 = vld [vmem:[%s1 + $0x108] sm:$0xff]
    %v63 = vld [vmem:[%s1 + $0x110] sm:$0xff]
    %v64 = vld [vmem:[%s1 + $0x118] sm:$0xff]
    %v65 = vld [vmem:[%s1 + $0x120] sm:$0xff]
    %v66 = vld [vmem:[%s1 + $0x128] sm:$0xff]
    %v67 = vld [vmem:[%s1 + $0x130] sm:$0xff]
    %v68 = vld [vmem:[%s1 + $0x138] sm:$0xff]
    %v69 = vld [vmem:[%s1 + $0x140] sm:$0xff]
    %v70 = vld [vmem:[%s1 + $0x148] sm:$0xff]
    %v71 = vld [vmem:[%s1 + $0x150] sm:$0xff]
    %v72 = vld [vmem:[%s1 + $0x158] sm:$0xff]
    %v73 = vld [vmem:[%s1 + $0x160] sm:$0xff]
    %v74 = vld [vmem:[%s1 + $0x168] sm:$0xff]
    %v75 = vld [vmem:[%s1 + $0x170] sm:$0xff]
    %v76 = vld [vmem:[%s1 + $0x178] sm:$0xff]
    %v77 = vld [vmem:[%s1 + $0x180] sm:$0xff]
    %v78 = vld [vmem:[%s1 + $0x188] sm:$0xff]
    %v79 = vld [vmem:[%s1 + $0x190] sm:$0xff]
    %v80 = vld [vmem:[%s1 + $0x198] sm:$0xff]
    %v81 = vld [vmem:[%s1 + $0x1a0] sm:$0xff]
    %v82 = vld [vmem:[%s1 + $0x1a8] sm:$0xff]
    %v83 = vld [vmem:[%s1 + $0x1b0] sm:$0xff]
    %v84 = vld [vmem:[%s1 + $0x1b8] sm:$0xff]
    %v85 = vld [vmem:[%s1 + $0x1c0] sm:$0xff]
    %v86 = vld [vmem:[%s1 + $0x1c8] sm:$0xff]
    %v87 = vld [vmem:[%s1 + $0x1d0] sm:$0xff]
    %v88 = vld [vmem:[%s1 + $0x1d8] sm:$0xff]
    %v89 = vld [vmem:[%s1 + $0x1e0] sm:$0xff]
    %v90 = vld [vmem:[%s1 + $0x1e8] sm:$0xff]
    %v91 = vld [vmem:[%s1 + $0x1f0] sm:$0xff]
    %v92 = vld [vmem:[%s1 + $0x1f8] sm:$0xff]
    %v93 = vld [vmem:[%s1 + $0x200] sm:$0xff]
    %v94 = vld [vmem:[%s1 + $0x208] sm:$0xff]
    %v95 = vld [vmem:[%s1 + $0x210] sm:$0xff]
    %v96 = vld [vmem:[%s1 + $0x218] sm:$0xff]
    %v97 = vld [vmem:[%s1 + $0x220] sm:$0xff]
    %v98 = vld [vmem:[%s1 + $0x228] sm:$0xff]
    %v99 = vld [vmem:[%s1 + $0x230] sm:$0xff]
    %v100 = vld [vmem:[%s1 + $0x238] sm:$0xff]
    %v101 = vld [vmem:[%s1 + $0x240] sm:$0xff]
    %v102 = vld [vmem:[%s1 + $0x248] sm:$0xff]
    %v103 = vld [vmem:[%s1 + $0x250] sm:$0xff]
    %v104 = vld [vmem:[%s1 + $0x258] sm:$0xff]
    %v105 = vld [vmem:[%s1 + $0x260] sm:$0xff]
    %v106 = vld [vmem:[%s1 + $0x268] sm:$0xff]
    %v107 = vld [vmem:[%s1 + $0x270] sm:$0xff]
    %v108 = vld [vmem:[%s1 + $0x278] sm:$0xff]
    %v109 = vld [vmem:[%s1 + $0x280] sm:$0xff]
    %v110 = vld [vmem:[%s1 + $0x288] sm:$0xff]
    %v111 = vld [vmem:[%s1 + $0x290] sm:$0xff]
    %v112 = vld [vmem:[%s1 + $0x298] sm:$0xff]
    %v113 = vld [vmem:[%s1 + $0x2a0] sm:$0xff]
    %v114 = vld [vmem:[%s1 + $0x2a8] sm:$0xff]
    %v115 = vld [vmem:[%s1 + $0x2b0] sm:$0xff]
    %v116 = vld [vmem:[%s1 + $0x2b8] sm:$0xff]
    %v117 = vld [vmem:[%s1 + $0x2c0] sm:$0xff]
    %v118 = vld [vmem:[%s1 + $0x2c8] sm:$0xff]
    %v119 = vld [vmem:[%s1 + $0x2d0] sm:$0xff]
    %v120 = vld [vmem:[%s1 + $0x2d8] sm:$0xff]
    %v121 = vld [vmem:[%s1 + $0x2e0] sm:$0xff]
    %v122 = vld [vmem:[%s1 + $0x2e8] sm:$0xff]
    %v123 = vld [vmem:[%s1 + $0x2f0] sm:$0xff]
    %v124 = vld [vmem:[%s1 + $0x2f8] sm:$0xff]
    %v125 = vld [vmem:[%s1 + $0x300] sm:$0xff]
    %v126 = vld [vmem:[%s1 + $0x308] sm:$0xff]
    %v127 = vld [vmem:[%s1 + $0x310] sm:$0xff]
    %v128 = vld [vmem:[%s1 + $0x318] sm:$0xff]
    %v129 = vld [vmem:[%s1 + $0x320] sm:$0xff]
    %v130 = vld [vmem:[%s1 + $0x328] sm:$0xff]
    %v131 = vld [vmem:[%s1 + $0x330] sm:$0xff]
    %v132 = vld [vmem:[%s1 + $0x338] sm:$0xff]
    %v133 = vld [vmem:[%s1 + $0x340] sm:$0xff]
    %v134 = vld [vmem:[%s1 + $0x348] sm:$0xff]
    %v135 = vld [vmem:[%s1 + $0x350] sm:$0xff]
    %v136 = vld [vmem:[%s1 + $0x358] sm:$0xff]
    %v137 = vld [vmem:[%s1 + $0x360] sm:$0xff]
    %v138 = vld [vmem:[%s1 + $0x368] sm:$0xff]
    %v139 = vld [vmem:[%s1 + $0x370] sm:$0xff]
    %v140 = vld [vmem:[%s1 + $0x378] sm:$0xff]
    %v141 = vld [vmem:[%s1 + $0x380] sm:$0xff]
    %v142 = vld [vmem:[%s1 + $0x388] sm:$0xff]
    %v143 = vld [vmem:[%s1 + $0x390] sm:$0xff]
    %v144 = vld [vmem:[%s1 + $0x398] sm:$0xff]
    %v145 = vld [vmem:[%s1 + $0x3a0] sm:$0xff]
    %v146 = vld [vmem:[%s1 + $0x3a8] sm:$0xff]
    %v147 = vld [vmem:[%s1 + $0x3b0] sm:$0xff]
    %v148 = vld [vmem:[%s1 + $0x3b8] sm:$0xff]
    %v149 = vld [vmem:[%s1 + $0x3c0] sm:$0xff]
    %v150 = vld [vmem:[%s1 + $0x3c8] sm:$0xff]
    %v151 = vld [vmem:[%s1 + $0x3d0] sm:$0xff]
    %v152 = vld [vmem:[%s1 + $0x3d8] sm:$0xff]
    %v153 = vld [vmem:[%s1 + $0x3e0] sm:$0xff]
    %v154 = vld [vmem:[%s1 + $0x3e8] sm:$0xff]
    %v155 = vld [vmem:[%s1 + $0x3f0] sm:$0xff]
    %v156 = vld [vmem:[%s1 + $0x3f8] sm:$0xff]
    %v157 = vld [vmem:[%s1 + $0x400] sm:$0xff]
    %v158 = vld [vmem:[%s1 + $0x408] sm:$0xff]
    %v159 = vld [vmem:[%s1 + $0x410] sm:$0xff]
    %v160 = vld [vmem:[%s1 + $0x418] sm:$0xff]
    %v161 = vld [vmem:[%s1 + $0x420] sm:$0xff]
    %v162 = vld [vmem:[%s1 + $0x428] sm:$0xff]
    %v163 = vld [vmem:[%s1 + $0x430] sm:$0xff]
    %v164 = vld [vmem:[%s1 + $0x438] sm:$0xff]
    %v165 = vld [vmem:[%s1 + $0x440] sm:$0xff]
    %v166 = vld [vmem:[%s1 + $0x448] sm:$0xff]
    %v167 = vld [vmem:[%s1 + $0x450] sm:$0xff]
    %v168 = vld [vmem:[%s1 + $0x458] sm:$0xff]
    %v169 = vld [vmem:[%s1 + $0x460] sm:$0xff]
    %v170 = vld [vmem:[%s1 + $0x468] sm:$0xff]
    %v171 = vld [vmem:[%s1 + $0x470] sm:$0xff]
    %v172 = vld [vmem:[%s1 + $0x478] sm:$0xff]
    %v173 = vld [vmem:[%s1 + $0x480] sm:$0xff]
    %v174 = vld [vmem:[%s1 + $0x488] sm:$0xff]
    %v175 = vld [vmem:[%s1 + $0x490] sm:$0xff]
    %v176 = vld [vmem:[%s1 + $0x498] sm:$0xff]
    %v177 = vld [vmem:[%s1 + $0x4a0] sm:$0xff]
    %v178 = vld [vmem:[%s1 + $0x4a8] sm:$0xff]
    %v179 = vld [vmem:[%s1 + $0x4b0] sm:$0xff]
    %v180 = vld [vmem:[%s1 + $0x4b8] sm:$0xff]
    %v181 = vld [vmem:[%s1 + $0x4c0] sm:$0xff]
    %v182 = vld [vmem:[%s1 + $0x4c8] sm:$0xff]
    %v183 = vld [vmem:[%s1 + $0x4d0] sm:$0xff]
    %v184 = vld [vmem:[%s1 + $0x4d8] sm:$0xff]
    %v185 = vld [vmem:[%s1 + $0x4e0] sm:$0xff]
    %v186 = vld [vmem:[%s1 + $0x4e8] sm:$0xff]
    %v187 = vld [vmem:[%s1 + $0x4f0] sm:$0xff]
    %v188 = vld [vmem:[%s1 + $0x4f8] sm:$0xff]
    %v189 = vld [vmem:[%s1 + $0x500] sm:$0xff]
    %v190 = vld [vmem:[%s1 + $0x508] sm:$0xff]
    %v191 = vld [vmem:[%s1 + $0x510] sm:$0xff]
    %v192 = vld [vmem:[%s1 + $0x518] sm:$0xff]
    %v193 = vld [vmem:[%s1 + $0x520] sm:$0xff]
    %v194 = vld [vmem:[%s1 + $0x528] sm:$0xff]
    %v195 = vld [vmem:[%s1 + $0x530] sm:$0xff]
    %v196 = vld [vmem:[%s1 + $0x538] sm:$0xff]
    %v197 = vld [vmem:[%s1 + $0x540] sm:$0xff]
    %v198 = vld [vmem:[%s1 + $0x548] sm:$0xff]
    %v199 = vld [vmem:[%s1 + $0x550] sm:$0xff]
    %v200 = vld [vmem:[%s1 + $0x558] sm:$0xff]
    %v201 = vld [vmem:[%s1 + $0x560] sm:$0xff]
    %v202 = vld [vmem:[%s1 + $0x568] sm:$0xff]
    %v203 = vld [vmem:[%s1 + $0x570] sm:$0xff]
    %v204 = vld [vmem:[%s1 + $0x578] sm:$0xff]
    %v205 = vld [vmem:[%s1 + $0x580] sm:$0xff]
    %v206 = vld [vmem:[%s1 + $0x588] sm:$0xff]
    %v207 = vld [vmem:[%s1 + $0x590] sm:$0xff]
    %v208 = vld [vmem:[%s1 + $0x598] sm:$0xff]
    %v209 = vld [vmem:[%s1 + $0x5a0] sm:$0xff]
    %v210 = vld [vmem:[%s1 + $0x5a8] sm:$0xff]
    %v211 = vld [vmem:[%s1 + $0x5b0] sm:$0xff]
    %v212 = vld [vmem:[%s1 + $0x5b8] sm:$0xff]
    %v213 = vld [vmem:[%s1 + $0x5c0] sm:$0xff]
    %v214 = vld [vmem:[%s1 + $0x5c8] sm:$0xff]
    %v215 = vld [vmem:[%s1 + $0x5d0] sm:$0xff]
    %v216 = vld [vmem:[%s1 + $0x5d8] sm:$0xff]
    %v217 = vld [vmem:[%s1 + $0x5e0] sm:$0xff]
    %v218 = vld [vmem:[%s1 + $0x5e8] sm:$0xff]
    %v219 = vld [vmem:[%s1 + $0x5f0] sm:$0xff]
    %v220 = vld [vmem:[%s1 + $0x5f8] sm:$0xff]
    %v221 = vld [vmem:[%s1 + $0x600] sm:$0xff]
    %v222 = vld [vmem:[%s1 + $0x608] sm:$0xff]
    %v223 = vld [vmem:[%s1 + $0x610] sm:$0xff]
    %v224 = vld [vmem:[%s1 + $0x618] sm:$0xff]
    %v225 = vld [vmem:[%s1 + $0x620] sm:$0xff]
    %v226 = vld [vmem:[%s1 + $0x628] sm:$0xff]
    %v227 = vld [vmem:[%s1 + $0x630] sm:$0xff]
    %v228 = vld [vmem:[%s1 + $0x638] sm:$0xff]
    %v229 = vld [vmem:[%s1 + $0x640] sm:$0xff]
    %v230 = vld [vmem:[%s1 + $0x648] sm:$0xff]
    %v231 = vld [vmem:[%s1 + $0x650] sm:$0xff]
    %v232 = vld [vmem:[%s1 + $0x658] sm:$0xff]
    %v233 = vld [vmem:[%s1 + $0x660] sm:$0xff]
    %v234 = vld [vmem:[%s1 + $0x668] sm:$0xff]
    %v235 = vld [vmem:[%s1 + $0x670] sm:$0xff]
    %v236 = vld [vmem:[%s1 + $0x678] sm:$0xff]
    %v237 = vld [vmem:[%s1 + $0x680] sm:$0xff]
    %v238 = vld [vmem:[%s1 + $0x688] sm:$0xff]
    %v239 = vld [vmem:[%s1 + $0x690] sm:$0xff]
    %v240 = vld [vmem:[%s1 + $0x698] sm:$0xff]
    %v241 = vld [vmem:[%s1 + $0x6a0] sm:$0xff]
    %v242 = vld [vmem:[%s1 + $0x6a8] sm:$0xff]
    %v243 = vld [vmem:[%s1 + $0x6b0] sm:$0xff]
    %v244 = vld [vmem:[%s1 + $0x6b8] sm:$0xff]
    %v245 = vld [vmem:[%s1 + $0x6c0] sm:$0xff]
    %v246 = vld [vmem:[%s1 + $0x6c8] sm:$0xff]
    %v247 = vld [vmem:[%s1 + $0x6d0] sm:$0xff]
    %v248 = vld [vmem:[%s1 + $0x6d8] sm:$0xff]
    %v249 = vld [vmem:[%s1 + $0x6e0] sm:$0xff]
    %v250 = vld [vmem:[%s1 + $0x6e8] sm:$0xff]
    %v251 = vld [vmem:[%s1 + $0x6f0] sm:$0xff]
    %v252 = vld [vmem:[%s1 + $0x6f8] sm:$0xff]
    %v253 = vld [vmem:[%s1 + $0x700] sm:$0xff]
    %v254 = vld [vmem:[%s1 + $0x708] sm:$0xff]
    %v255 = vld [vmem:[%s1 + $0x710] sm:$0xff]
    %v256 = vld [vmem:[%s1 + $0x718] sm:$0xff]
    %v257 = vld [vmem:[%s1 + $0x720] sm:$0xff]
    %v258 = vld [vmem:[%s1 + $0x728] sm:$0xff]
    %v259 = vld [vmem:[%s1 + $0x730] sm:$0xff]
    %v260 = vld [vmem:[%s1 + $0x738] sm:$0xff]
    %v261 = vld [vmem:[%s1 + $0x740] sm:$0xff]
    %v262 = vld [vmem:[%s1 + $0x748] sm:$0xff]
    %v263 = vld [vmem:[%s1 + $0x750] sm:$0xff]
    %v264 = vld [vmem:[%s1 + $0x758] sm:$0xff]
    %v265 = vld [vmem:[%s1 + $0x760] sm:$0xff]
    %v266 = vld [vmem:[%s1 + $0x768] sm:$0xff]
    %v267 = vld [vmem:[%s1 + $0x770] sm:$0xff]
    %v268 = vld [vmem:[%s1 + $0x778] sm:$0xff]
    %v269 = vld [vmem:[%s1 + $0x780] sm:$0xff]
    %v270 = vld [vmem:[%s1 + $0x788] sm:$0xff]
    %v271 = vld [vmem:[%s1 + $0x790] sm:$0xff]
    %v272 = vld [vmem:[%s1 + $0x798] sm:$0xff]
    %v273 = vld [vmem:[%s1 + $0x7a0] sm:$0xff]
    %v274 = vld [vmem:[%s1 + $0x7a8] sm:$0xff]
    %v275 = vld [vmem:[%s1 + $0x7b0] sm:$0xff]
    %v276 = vld [vmem:[%s1 + $0x7b8] sm:$0xff]
    %v277 = vld [vmem:[%s1 + $0x7c0] sm:$0xff]
    %v278 = vld [vmem:[%s1 + $0x7c8] sm:$0xff]
    %v279 = vld [vmem:[%s1 + $0x7d0] sm:$0xff]
    %v280 = vld [vmem:[%s1 + $0x7d8] sm:$0xff]
    %v281 = vld [vmem:[%s1 + $0x7e0] sm:$0xff]
    %v282 = vld [vmem:[%s1 + $0x7e8] sm:$0xff]
    %v283 = vld [vmem:[%s1 + $0x7f0] sm:$0xff]
    %v284 = vld [vmem:[%s1 + $0x7f8] sm:$0xff]
    %v285 = vld [vmem:[%s1 + $0x800] sm:$0xff]
    %v286 = vld [vmem:[%s1 + $0x808] sm:$0xff]
    %v287 = vld [vmem:[%s1 + $0x810] sm:$0xff]
    %v288 = vld [vmem:[%s1 + $0x818] sm:$0xff]
    %v289 = vld [vmem:[%s1 + $0x820] sm:$0xff]
    %v290 = vld [vmem:[%s1 + $0x828] sm:$0xff]
    %v291 = vld [vmem:[%s1 + $0x830] sm:$0xff]
    %v292 = vld [vmem:[%s1 + $0x838] sm:$0xff]
    %v293 = vld [vmem:[%s1 + $0x840] sm:$0xff]
    %v294 = vld [vmem:[%s1 + $0x848] sm:$0xff]
    %v295 = vld [vmem:[%s1 + $0x850] sm:$0xff]
    %v296 = vld [vmem:[%s1 + $0x858] sm:$0xff]
    %v297 = vld [vmem:[%s1 + $0x860] sm:$0xff]
    %v298 = vld [vmem:[%s1 + $0x868] sm:$0xff]
    %v299 = vld [vmem:[%s1 + $0x870] sm:$0xff]
    %v300 = vld [vmem:[%s1 + $0x878] sm:$0xff]
    %v301 = vld [vmem:[%s1 + $0x880] sm:$0xff]
    %v302 = vld [vmem:[%s1 + $0x888] sm:$0xff]
    %v303 = vld [vmem:[%s1 + $0x890] sm:$0xff]
    %v304 = vld [vmem:[%s1 + $0x898] sm:$0xff]
    %v305 = vld [vmem:[%s1 + $0x8a0] sm:$0xff]
    %v306 = vld [vmem:[%s1 + $0x8a8] sm:$0xff]
    %v307 = vld [vmem:[%s1 + $0x8b0] sm:$0xff]
    %v308 = vld [vmem:[%s1 + $0x8b8] sm:$0xff]
    %v309 = vld [vmem:[%s1 + $0x8c0] sm:$0xff]
    %v310 = vld [vmem:[%s1 + $0x8c8] sm:$0xff]
    %v311 = vld [vmem:[%s1 + $0x8d0] sm:$0xff]
    %v312 = vld [vmem:[%s1 + $0x8d8] sm:$0xff]
    %v313 = vld [vmem:[%s1 + $0x8e0] sm:$0xff]
    %v314 = vld [vmem:[%s1 + $0x8e8] sm:$0xff]
    %v315 = vld [vmem:[%s1 + $0x8f0] sm:$0xff]
    %v316 = vld [vmem:[%s1 + $0x8f8] sm:$0xff]
    %v317 = vld [vmem:[%s1 + $0x900] sm:$0xff]
    %v318 = vld [vmem:[%s1 + $0x908] sm:$0xff]
    %v319 = vld [vmem:[%s1 + $0x910] sm:$0xff]
    %v320 = vld [vmem:[%s1 + $0x918] sm:$0xff]
    %v321 = vld [vmem:[%s1 + $0x920] sm:$0xff]
    %v322 = vld [vmem:[%s1 + $0x928] sm:$0xff]
    %v323 = vld [vmem:[%s1 + $0x930] sm:$0xff]
    %v324 = vld [vmem:[%s1 + $0x938] sm:$0xff]
    %v325 = vld [vmem:[%s1 + $0x940] sm:$0xff]
    %v326 = vld [vmem:[%s1 + $0x948] sm:$0xff]
    %v327 = vld [vmem:[%s1 + $0x950] sm:$0xff]
    %v328 = vld [vmem:[%s1 + $0x958] sm:$0xff]
    %v329 = vld [vmem:[%s1 + $0x960] sm:$0xff]
    %v330 = vld [vmem:[%s1 + $0x968] sm:$0xff]
    %v331 = vld [vmem:[%s1 + $0x970] sm:$0xff]
    %v332 = vld [vmem:[%s1 + $0x978] sm:$0xff]
    %v333 = vld [vmem:[%s1 + $0x980] sm:$0xff]
    %v334 = vld [vmem:[%s1 + $0x988] sm:$0xff]
    %v335 = vld [vmem:[%s1 + $0x990] sm:$0xff]
    %v336 = vld [vmem:[%s1 + $0x998] sm:$0xff]
    %v337 = vld [vmem:[%s1 + $0x9a0] sm:$0xff]
    %v338 = vld [vmem:[%s1 + $0x9a8] sm:$0xff]
    %v339 = vld [vmem:[%s1 + $0x9b0] sm:$0xff]
    %v340 = vld [vmem:[%s1 + $0x9b8] sm:$0xff]
    %v341 = vld [vmem:[%s1 + $0x9c0] sm:$0xff]
    %v342 = vld [vmem:[%s1 + $0x9c8] sm:$0xff]
    %v343 = vld [vmem:[%s1 + $0x9d0] sm:$0xff]
    %v344 = vld [vmem:[%s1 + $0x9d8] sm:$0xff]
    %v345 = vld [vmem:[%s1 + $0x9e0] sm:$0xff]
    %v346 = vld [vmem:[%s1 + $0x9e8] sm:$0xff]
    %v347 = vld [vmem:[%s1 + $0x9f0] sm:$0xff]
    %v348 = vld [vmem:[%s1 + $0x9f8] sm:$0xff]
    %v349 = vld [vmem:[%s1 + $0xa00] sm:$0xff]
    %v350 = vld [vmem:[%s1 + $0xa08] sm:$0xff]
    %v351 = vld [vmem:[%s1 + $0xa10] sm:$0xff]
    %v352 = vld [vmem:[%s1 + $0xa18] sm:$0xff]
    %v353 = vld [vmem:[%s1 + $0xa20] sm:$0xff]
    %v354 = vld [vmem:[%s1 + $0xa28] sm:$0xff]
    %v355 = vld [vmem:[%s1 + $0xa30] sm:$0xff]
    %v356 = vld [vmem:[%s1 + $0xa38] sm:$0xff]
    %v357 = vld [vmem:[%s1 + $0xa40] sm:$0xff]
    %v358 = vld [vmem:[%s1 + $0xa48] sm:$0xff]
    %v359 = vld [vmem:[%s1 + $0xa50] sm:$0xff]
    %v360 = vld [vmem:[%s1 + $0xa58] sm:$0xff]
    %v361 = vld [vmem:[%s1 + $0xa60] sm:$0xff]
    %v362 = vld [vmem:[%s1 + $0xa68] sm:$0xff]
    %v363 = vld [vmem:[%s1 + $0xa70] sm:$0xff]
    %v364 = vld [vmem:[%s1 + $0xa78] sm:$0xff]
    %v365 = vld [vmem:[%s1 + $0xa80] sm:$0xff]
    %v366 = vld [vmem:[%s1 + $0xa88] sm:$0xff]
    %v367 = vld [vmem:[%s1 + $0xa90] sm:$0xff]
    %v368 = vld [vmem:[%s1 + $0xa98] sm:$0xff]
    %v369 = vld [vmem:[%s1 + $0xaa0] sm:$0xff]
    %v370 = vld [vmem:[%s1 + $0xaa8] sm:$0xff]
    %v371 = vld [vmem:[%s1 + $0xab0] sm:$0xff]
    %v372 = vld [vmem:[%s1 + $0xab8] sm:$0xff]
    %v373 = vld [vmem:[%s1 + $0xac0] sm:$0xff]
    %v374 = vld [vmem:[%s1 + $0xac8] sm:$0xff]
    %v375 = vld [vmem:[%s1 + $0xad0] sm:$0xff]
    %v376 = vld [vmem:[%s1 + $0xad8] sm:$0xff]
    %v377 = vld [vmem:[%s1 + $0xae0] sm:$0xff]
    %v378 = vld [vmem:[%s1 + $0xae8] sm:$0xff]
    %v379 = vld [vmem:[%s1 + $0xaf0] sm:$0xff]
    %v380 = vld [vmem:[%s1 + $0xaf8] sm:$0xff]
    %v381 = vld [vmem:[%s1 + $0xb00] sm:$0xff]
    %v382 = vld [vmem:[%s1 + $0xb08] sm:$0xff]
    %v383 = vld [vmem:[%s1 + $0xb10] sm:$0xff]
    %v384 = vld [vmem:[%s1 + $0xb18] sm:$0xff]
    %v385 = vld [vmem:[%s1 + $0xb20] sm:$0xff]
    %v386 = vld [vmem:[%s1 + $0xb28] sm:$0xff]
    %v387 = vld [vmem:[%s1 + $0xb30] sm:$0xff]
    %v388 = vld [vmem:[%s1 + $0xb38] sm:$0xff]
    %v389 = vld [vmem:[%s1 + $0xb40] sm:$0xff]
    %v390 = vld [vmem:[%s1 + $0xb48] sm:$0xff]
    %v391 = vld [vmem:[%s1 + $0xb50] sm:$0xff]
    %v392 = vld [vmem:[%s1 + $0xb58] sm:$0xff]
    %v393 = vld [vmem:[%s1 + $0xb60] sm:$0xff]
    %v394 = vld [vmem:[%s1 + $0xb68] sm:$0xff]
    %v395 = vld [vmem:[%s1 + $0xb70] sm:$0xff]
    %v396 = vld [vmem:[%s1 + $0xb78] sm:$0xff]
    %v397 = vld [vmem:[%s1 + $0xb80] sm:$0xff]
    %v398 = vld [vmem:[%s1 + $0xb88] sm:$0xff]
    %v399 = vld [vmem:[%s1 + $0xb90] sm:$0xff]
    %v400 = vld [vmem:[%s1 + $0xb98] sm:$0xff]
    %v401 = vld [vmem:[%s1 + $0xba0] sm:$0xff]
    %v402 = vld [vmem:[%s1 + $0xba8] sm:$0xff]
    %v403 = vld [vmem:[%s1 + $0xbb0] sm:$0xff]
    %v404 = vld [vmem:[%s1 + $0xbb8] sm:$0xff]
    %v405 = vld [vmem:[%s1 + $0xbc0] sm:$0xff]
    %v406 = vld [vmem:[%s1 + $0xbc8] sm:$0xff]
    %v407 = vld [vmem:[%s1 + $0xbd0] sm:$0xff]
    %v408 = vld [vmem:[%s1 + $0xbd8] sm:$0xff]
    %v409 = vld [vmem:[%s1 + $0xbe0] sm:$0xff]
    %v410 = vld [vmem:[%s1 + $0xbe8] sm:$0xff]
    %v411 = vld [vmem:[%s1 + $0xbf0] sm:$0xff]
    %v412 = vld [vmem:[%s1 + $0xbf8] sm:$0xff]
    %v413 = vld [vmem:[%s1 + $0xc00] sm:$0xff]
    %v414 = vld [vmem:[%s1 + $0xc08] sm:$0xff]
    %v415 = vld [vmem:[%s1 + $0xc10] sm:$0xff]
    %v416 = vld [vmem:[%s1 + $0xc18] sm:$0xff]
    %v417 = vld [vmem:[%s1 + $0xc20] sm:$0xff]
    %v418 = vld [vmem:[%s1 + $0xc28] sm:$0xff]
    %v419 = vld [vmem:[%s1 + $0xc30] sm:$0xff]
    %v420 = vld [vmem:[%s1 + $0xc38] sm:$0xff]
    %v421 = vld [vmem:[%s1 + $0xc40] sm:$0xff]
    %v422 = vld [vmem:[%s1 + $0xc48] sm:$0xff]
    %v423 = vld [vmem:[%s1 + $0xc50] sm:$0xff]
    %v424 = vld [vmem:[%s1 + $0xc58] sm:$0xff]
    %v425 = vld [vmem:[%s1 + $0xc60] sm:$0xff]
    %v426 = vld [vmem:[%s1 + $0xc68] sm:$0xff]
    %v427 = vld [vmem:[%s1 + $0xc70] sm:$0xff]
    %v428 = vld [vmem:[%s1 + $0xc78] sm:$0xff]
    %v429 = vld [vmem:[%s1 + $0xc80] sm:$0xff]
    %v430 = vld [vmem:[%s1 + $0xc88] sm:$0xff]
    %v431 = vld [vmem:[%s1 + $0xc90] sm:$0xff]
    %v432 = vld [vmem:[%s1 + $0xc98] sm:$0xff]
    %v433 = vld [vmem:[%s1 + $0xca0] sm:$0xff]
    %v434 = vld [vmem:[%s1 + $0xca8] sm:$0xff]
    %v435 = vld [vmem:[%s1 + $0xcb0] sm:$0xff]
    %v436 = vld [vmem:[%s1 + $0xcb8] sm:$0xff]
    %v437 = vld [vmem:[%s1 + $0xcc0] sm:$0xff]
    %v438 = vld [vmem:[%s1 + $0xcc8] sm:$0xff]
    %v439 = vld [vmem:[%s1 + $0xcd0] sm:$0xff]
    %v440 = vld [vmem:[%s1 + $0xcd8] sm:$0xff]
    %v441 = vld [vmem:[%s1 + $0xce0] sm:$0xff]
    %v442 = vld [vmem:[%s1 + $0xce8] sm:$0xff]
    %v443 = vld [vmem:[%s1 + $0xcf0] sm:$0xff]
    %v444 = vld [vmem:[%s1 + $0xcf8] sm:$0xff]
    %v445 = vld [vmem:[%s1 + $0xd00] sm:$0xff]
    %v446 = vld [vmem:[%s1 + $0xd08] sm:$0xff]
    %v447 = vld [vmem:[%s1 + $0xd10] sm:$0xff]
    %v448 = vld [vmem:[%s1 + $0xd18] sm:$0xff]
    %v449 = vld [vmem:[%s1 + $0xd20] sm:$0xff]
    %v450 = vld [vmem:[%s1 + $0xd28] sm:$0xff]
    %v451 = vld [vmem:[%s1 + $0xd30] sm:$0xff]
    %v452 = vld [vmem:[%s1 + $0xd38] sm:$0xff]
    %v453 = vld [vmem:[%s1 + $0xd40] sm:$0xff]
    %v454 = vld [vmem:[%s1 + $0xd48] sm:$0xff]
    %v455 = vld [vmem:[%s1 + $0xd50] sm:$0xff]
    %v456 = vld [vmem:[%s1 + $0xd58] sm:$0xff]
    %v457 = vld [vmem:[%s1 + $0xd60] sm:$0xff]
    %v458 = vld [vmem:[%s1 + $0xd68] sm:$0xff]
    %v459 = vld [vmem:[%s1 + $0xd70] sm:$0xff]
    %v460 = vld [vmem:[%s1 + $0xd78] sm:$0xff]
    %v461 = vld [vmem:[%s1 + $0xd80] sm:$0xff]
    %v462 = vld [vmem:[%s1 + $0xd88] sm:$0xff]
    %v463 = vld [vmem:[%s1 + $0xd90] sm:$0xff]
    %v464 = vld [vmem:[%s1 + $0xd98] sm:$0xff]
    %v465 = vld [vmem:[%s1 + $0xda0] sm:$0xff]
    %v466 = vld [vmem:[%s1 + $0xda8] sm:$0xff]
    %v467 = vld [vmem:[%s1 + $0xdb0] sm:$0xff]
    %v468 = vld [vmem:[%s1 + $0xdb8] sm:$0xff]
    %v469 = vld [vmem:[%s1 + $0xdc0] sm:$0xff]
    %v470 = vld [vmem:[%s1 + $0xdc8] sm:$0xff]
    %v471 = vld [vmem:[%s1 + $0xdd0] sm:$0xff]
    %v472 = vld [vmem:[%s1 + $0xdd8] sm:$0xff]
    %v473 = vld [vmem:[%s1 + $0xde0] sm:$0xff]
    %v474 = vld [vmem:[%s1 + $0xde8] sm:$0xff]
    %v475 = vld [vmem:[%s1 + $0xdf0] sm:$0xff]
    %v476 = vld [vmem:[%s1 + $0xdf8] sm:$0xff]
    %v477 = vld [vmem:[%s1 + $0xe00] sm:$0xff]
    %v478 = vld [vmem:[%s1 + $0xe08] sm:$0xff]
    %v479 = vld [vmem:[%s1 + $0xe10] sm:$0xff]
    %v480 = vld [vmem:[%s1 + $0xe18] sm:$0xff]
    %v481 = vld [vmem:[%s1 + $0xe20] sm:$0xff]
    %v482 = vld [vmem:[%s1 + $0xe28] sm:$0xff]
    %v483 = vld [vmem:[%s1 + $0xe30] sm:$0xff]
    %v484 = vld [vmem:[%s1 + $0xe38] sm:$0xff]
    %v485 = vld [vmem:[%s1 + $0xe40] sm:$0xff]
    %v486 = vld [vmem:[%s1 + $0xe48] sm:$0xff]
    %v487 = vld [vmem:[%s1 + $0xe50] sm:$0xff]
    %v488 = vld [vmem:[%s1 + $0xe58] sm:$0xff]
    %v489 = vld [vmem:[%s1 + $0xe60] sm:$0xff]
    %v490 = vld [vmem:[%s1 + $0xe68] sm:$0xff]
    %v491 = vld [vmem:[%s1 + $0xe70] sm:$0xff]
    %v492 = vld [vmem:[%s1 + $0xe78] sm:$0xff]
    %v493 = vld [vmem:[%s1 + $0xe80] sm:$0xff]
    %v494 = vld [vmem:[%s1 + $0xe88] sm:$0xff]
    %v495 = vld [vmem:[%s1 + $0xe90] sm:$0xff]
    %v496 = vld [vmem:[%s1 + $0xe98] sm:$0xff]
    %v497 = vld [vmem:[%s1 + $0xea0] sm:$0xff]
    %v498 = vld [vmem:[%s1 + $0xea8] sm:$0xff]
    %v499 = vld [vmem:[%s1 + $0xeb0] sm:$0xff]
    %v500 = vld [vmem:[%s1 + $0xeb8] sm:$0xff]
    %v501 = vld [vmem:[%s1 + $0xec0] sm:$0xff]
    %v502 = vld [vmem:[%s1 + $0xec8] sm:$0xff]
    %v503 = vld [vmem:[%s1 + $0xed0] sm:$0xff]
    %v504 = vld [vmem:[%s1 + $0xed8] sm:$0xff]
    %v505 = vld [vmem:[%s1 + $0xee0] sm:$0xff]
    %v506 = vld [vmem:[%s1 + $0xee8] sm:$0xff]
    %v507 = vld [vmem:[%s1 + $0xef0] sm:$0xff]
    %v508 = vld [vmem:[%s1 + $0xef8] sm:$0xff]
    %v509 = vld [vmem:[%s1 + $0xf00] sm:$0xff]
    %v510 = vld [vmem:[%s1 + $0xf08] sm:$0xff]
    %v511 = vld [vmem:[%s1 + $0xf10] sm:$0xff]
    %v512 = vld [vmem:[%s1 + $0xf18] sm:$0xff]
    %v513 = vld [vmem:[%s1 + $0xf20] sm:$0xff]
    %v514 = vld [vmem:[%s1 + $0xf28] sm:$0xff]
    %v515 = vld [vmem:[%s1 + $0xf30] sm:$0xff]
    %v516 = vld [vmem:[%s1 + $0xf38] sm:$0xff]
    %v517 = vld [vmem:[%s1 + $0xf40] sm:$0xff]
    %v518 = vld [vmem:[%s1 + $0xf48] sm:$0xff]
    %v519 = vld [vmem:[%s1 + $0xf50] sm:$0xff]
    %v520 = vld [vmem:[%s1 + $0xf58] sm:$0xff]
    %v521 = vld [vmem:[%s1 + $0xf60] sm:$0xff]
    %v522 = vld [vmem:[%s1 + $0xf68] sm:$0xff]
    %v523 = vld [vmem:[%s1 + $0xf70] sm:$0xff]
    %v524 = vld [vmem:[%s1 + $0xf78] sm:$0xff]
    %v525 = vld [vmem:[%s1 + $0xf80] sm:$0xff]
    %v526 = vld [vmem:[%s1 + $0xf88] sm:$0xff]
    %v527 = vld [vmem:[%s1 + $0xf90] sm:$0xff]
    %v528 = vld [vmem:[%s1 + $0xf98] sm:$0xff]
    %v529 = vld [vmem:[%s1 + $0xfa0] sm:$0xff]
    %v530 = vld [vmem:[%s1 + $0xfa8] sm:$0xff]
    %v531 = vld [vmem:[%s1 + $0xfb0] sm:$0xff]
    %v532 = vld [vmem:[%s1 + $0xfb8] sm:$0xff]
    %v533 = vld [vmem:[%s1 + $0xfc0] sm:$0xff]
    %v534 = vld [vmem:[%s1 + $0xfc8] sm:$0xff]
    %v535 = vld [vmem:[%s1 + $0xfd0] sm:$0xff]
    %v536 = vld [vmem:[%s1 + $0xfd8] sm:$0xff]
    %v537 = vld [vmem:[%s1 + $0xfe0] sm:$0xff]
    %v538 = vld [vmem:[%s1 + $0xfe8] sm:$0xff]
    %v539 = vld [vmem:[%s1 + $0xff0] sm:$0xff]
    %v540 = vld [vmem:[%s1 + $0xff8] sm:$0xff]
    %v541 = vld [vmem:[%s2] sm:$0xf]
    %v543 = vperm.slane %v541, 0
    %v544 = vperm.slane %v541, 1
    %v545 = vperm.slane %v541, 2
    %v546 = vperm.slane %v541, 3
    %552 = vst [vmem:[#allocation1] ss:$9 sm:$0xff] %v27
    %v553 = vld [vmem:[#allocation1] sm:$0xff]
    %v554 = vld [vmem:[#allocation1 + $0x9] sm:$0xff]
    %v555 = vld [vmem:[#allocation1 + $0x12] sm:$0xff]
    %v556 = vld [vmem:[#allocation1 + $0x1b] sm:$0xff]
    %v557 = vld [vmem:[#allocation1 + $0x24] sm:$0xff]
    %v558 = vld [vmem:[#allocation1 + $0x2d] sm:$0xff]
    %v559 = vld [vmem:[#allocation1 + $0x36] sm:$0xff]
    %v560 = vld [vmem:[#allocation1 + $0x3f] sm:$0xff]
    %562 = vst [vmem:[#allocation1] ss:$9 sm:$0xff] %v28
    %v563 = vld [vmem:[#allocation1] sm:$0xff]
    %v564 = vld [vmem:[#allocation1 + $0x9] sm:$0xff]
    %v565 = vld [vmem:[#allocation1 + $0x12] sm:$0xff]
    %v566 = vld [vmem:[#allocation1 + $0x1b] sm:$0xff]
    %v567 = vld [vmem:[#allocation1 + $0x24] sm:$0xff]
    %v568 = vld [vmem:[#allocation1 + $0x2d] sm:$0xff]
    %v569 = vld [vmem:[#allocation1 + $0x36] sm:$0xff]
    %v570 = vld [vmem:[#allocation1 + $0x3f] sm:$0xff]
    %v1099 = vunpack.c.l.b16 %v29
    %v1100 = vunpack.c.h.b16 %v29
    %v1101 = vunpack.c.l.b16 %v30
    %v1102 = vunpack.c.h.b16 %v30
    %v1103 = vunpack.c.l.b16 %v31
    %v1104 = vunpack.c.h.b16 %v31
    %v1105 = vunpack.c.l.b16 %v32
    %v1106 = vunpack.c.h.b16 %v32
    %v1107 = vunpack.c.l.b16 %v33
    %v1108 = vunpack.c.h.b16 %v33
    %v1109 = vunpack.c.l.b16 %v34
    %v1110 = vunpack.c.h.b16 %v34
    %v1111 = vunpack.c.l.b16 %v35
    %v1112 = vunpack.c.h.b16 %v35
    %v1113 = vunpack.c.l.b16 %v36
    %v1114 = vunpack.c.h.b16 %v36
    %v1115 = vunpack.c.l.b16 %v37
    %v1116 = vunpack.c.h.b16 %v37
    %v1117 = vunpack.c.l.b16 %v38
    %v1118 = vunpack.c.h.b16 %v38
    %v1119 = vunpack.c.l.b16 %v39
    %v1120 = vunpack.c.h.b16 %v39
    %v1121 = vunpack.c.l.b16 %v40
    %v1122 = vunpack.c.h.b16 %v40
    %v1123 = vunpack.c.l.b16 %v41
    %v1124 = vunpack.c.h.b16 %v41
    %v1125 = vunpack.c.l.b16 %v42
    %v1126 = vunpack.c.h.b16 %v42
    %v1127 = vunpack.c.l.b16 %v43
    %v1128 = vunpack.c.h.b16 %v43
    %v1129 = vunpack.c.l.b16 %v44
    %v1130 = vunpack.c.h.b16 %v44
    %v1131 = vunpack.c.l.b16 %v45
    %v1132 = vunpack.c.h.b16 %v45
    %v1133 = vunpack.c.l.b16 %v46
    %v1134 = vunpack.c.h.b16 %v46
    %v1135 = vunpack.c.l.b16 %v47
    %v1136 = vunpack.c.h.b16 %v47
    %v1137 = vunpack.c.l.b16 %v48
    %v1138 = vunpack.c.h.b16 %v48
    %v1139 = vunpack.c.l.b16 %v49
    %v1140 = vunpack.c.h.b16 %v49
    %v1141 = vunpack.c.l.b16 %v50
    %v1142 = vunpack.c.h.b16 %v50
    %v1143 = vunpack.c.l.b16 %v51
    %v1144 = vunpack.c.h.b16 %v51
    %v1145 = vunpack.c.l.b16 %v52
    %v1146 = vunpack.c.h.b16 %v52
    %v1147 = vunpack.c.l.b16 %v53
    %v1148 = vunpack.c.h.b16 %v53
    %v1149 = vunpack.c.l.b16 %v54
    %v1150 = vunpack.c.h.b16 %v54
    %v1151 = vunpack.c.l.b16 %v55
    %v1152 = vunpack.c.h.b16 %v55
    %v1153 = vunpack.c.l.b16 %v56
    %v1154 = vunpack.c.h.b16 %v56
    %v1155 = vunpack.c.l.b16 %v57
    %v1156 = vunpack.c.h.b16 %v57
    %v1157 = vunpack.c.l.b16 %v58
    %v1158 = vunpack.c.h.b16 %v58
    %v1159 = vunpack.c.l.b16 %v59
    %v1160 = vunpack.c.h.b16 %v59
    %v1161 = vunpack.c.l.b16 %v60
    %v1162 = vunpack.c.h.b16 %v60
    %v1163 = vunpack.c.l.b16 %v61
    %v1164 = vunpack.c.h.b16 %v61
    %v1165 = vunpack.c.l.b16 %v62
    %v1166 = vunpack.c.h.b16 %v62
    %v1167 = vunpack.c.l.b16 %v63
    %v1168 = vunpack.c.h.b16 %v63
    %v1169 = vunpack.c.l.b16 %v64
    %v1170 = vunpack.c.h.b16 %v64
    %v1171 = vunpack.c.l.b16 %v65
    %v1172 = vunpack.c.h.b16 %v65
    %v1173 = vunpack.c.l.b16 %v66
    %v1174 = vunpack.c.h.b16 %v66
    %v1175 = vunpack.c.l.b16 %v67
    %v1176 = vunpack.c.h.b16 %v67
    %v1177 = vunpack.c.l.b16 %v68
    %v1178 = vunpack.c.h.b16 %v68
    %v1179 = vunpack.c.l.b16 %v69
    %v1180 = vunpack.c.h.b16 %v69
    %v1181 = vunpack.c.l.b16 %v70
    %v1182 = vunpack.c.h.b16 %v70
    %v1183 = vunpack.c.l.b16 %v71
    %v1184 = vunpack.c.h.b16 %v71
    %v1185 = vunpack.c.l.b16 %v72
    %v1186 = vunpack.c.h.b16 %v72
    %v1187 = vunpack.c.l.b16 %v73
    %v1188 = vunpack.c.h.b16 %v73
    %v1189 = vunpack.c.l.b16 %v74
    %v1190 = vunpack.c.h.b16 %v74
    %v1191 = vunpack.c.l.b16 %v75
    %v1192 = vunpack.c.h.b16 %v75
    %v1193 = vunpack.c.l.b16 %v76
    %v1194 = vunpack.c.h.b16 %v76
    %v1195 = vunpack.c.l.b16 %v77
    %v1196 = vunpack.c.h.b16 %v77
    %v1197 = vunpack.c.l.b16 %v78
    %v1198 = vunpack.c.h.b16 %v78
    %v1199 = vunpack.c.l.b16 %v79
    %v1200 = vunpack.c.h.b16 %v79
    %v1201 = vunpack.c.l.b16 %v80
    %v1202 = vunpack.c.h.b16 %v80
    %v1203 = vunpack.c.l.b16 %v81
    %v1204 = vunpack.c.h.b16 %v81
    %v1205 = vunpack.c.l.b16 %v82
    %v1206 = vunpack.c.h.b16 %v82
    %v1207 = vunpack.c.l.b16 %v83
    %v1208 = vunpack.c.h.b16 %v83
    %v1209 = vunpack.c.l.b16 %v84
    %v1210 = vunpack.c.h.b16 %v84
    %v1211 = vunpack.c.l.b16 %v85
    %v1212 = vunpack.c.h.b16 %v85
    %v1213 = vunpack.c.l.b16 %v86
    %v1214 = vunpack.c.h.b16 %v86
    %v1215 = vunpack.c.l.b16 %v87
    %v1216 = vunpack.c.h.b16 %v87
    %v1217 = vunpack.c.l.b16 %v88
    %v1218 = vunpack.c.h.b16 %v88
    %v1219 = vunpack.c.l.b16 %v89
    %v1220 = vunpack.c.h.b16 %v89
    %v1221 = vunpack.c.l.b16 %v90
    %v1222 = vunpack.c.h.b16 %v90
    %v1223 = vunpack.c.l.b16 %v91
    %v1224 = vunpack.c.h.b16 %v91
    %v1225 = vunpack.c.l.b16 %v92
    %v1226 = vunpack.c.h.b16 %v92
    %v1227 = vunpack.c.l.b16 %v93
    %v1228 = vunpack.c.h.b16 %v93
    %v1229 = vunpack.c.l.b16 %v94
    %v1230 = vunpack.c.h.b16 %v94
    %v1231 = vunpack.c.l.b16 %v95
    %v1232 = vunpack.c.h.b16 %v95
    %v1233 = vunpack.c.l.b16 %v96
    %v1234 = vunpack.c.h.b16 %v96
    %v1235 = vunpack.c.l.b16 %v97
    %v1236 = vunpack.c.h.b16 %v97
    %v1237 = vunpack.c.l.b16 %v98
    %v1238 = vunpack.c.h.b16 %v98
    %v1239 = vunpack.c.l.b16 %v99
    %v1240 = vunpack.c.h.b16 %v99
    %v1241 = vunpack.c.l.b16 %v100
    %v1242 = vunpack.c.h.b16 %v100
    %v1243 = vunpack.c.l.b16 %v101
    %v1244 = vunpack.c.h.b16 %v101
    %v1245 = vunpack.c.l.b16 %v102
    %v1246 = vunpack.c.h.b16 %v102
    %v1247 = vunpack.c.l.b16 %v103
    %v1248 = vunpack.c.h.b16 %v103
    %v1249 = vunpack.c.l.b16 %v104
    %v1250 = vunpack.c.h.b16 %v104
    %v1251 = vunpack.c.l.b16 %v105
    %v1252 = vunpack.c.h.b16 %v105
    %v1253 = vunpack.c.l.b16 %v106
    %v1254 = vunpack.c.h.b16 %v106
    %v1255 = vunpack.c.l.b16 %v107
    %v1256 = vunpack.c.h.b16 %v107
    %v1257 = vunpack.c.l.b16 %v108
    %v1258 = vunpack.c.h.b16 %v108
    %v1259 = vunpack.c.l.b16 %v109
    %v1260 = vunpack.c.h.b16 %v109
    %v1261 = vunpack.c.l.b16 %v110
    %v1262 = vunpack.c.h.b16 %v110
    %v1263 = vunpack.c.l.b16 %v111
    %v1264 = vunpack.c.h.b16 %v111
    %v1265 = vunpack.c.l.b16 %v112
    %v1266 = vunpack.c.h.b16 %v112
    %v1267 = vunpack.c.l.b16 %v113
    %v1268 = vunpack.c.h.b16 %v113
    %v1269 = vunpack.c.l.b16 %v114
    %v1270 = vunpack.c.h.b16 %v114
    %v1271 = vunpack.c.l.b16 %v115
    %v1272 = vunpack.c.h.b16 %v115
    %v1273 = vunpack.c.l.b16 %v116
    %v1274 = vunpack.c.h.b16 %v116
    %v1275 = vunpack.c.l.b16 %v117
    %v1276 = vunpack.c.h.b16 %v117
    %v1277 = vunpack.c.l.b16 %v118
    %v1278 = vunpack.c.h.b16 %v118
    %v1279 = vunpack.c.l.b16 %v119
    %v1280 = vunpack.c.h.b16 %v119
    %v1281 = vunpack.c.l.b16 %v120
    %v1282 = vunpack.c.h.b16 %v120
    %v1283 = vunpack.c.l.b16 %v121
    %v1284 = vunpack.c.h.b16 %v121
    %v1285 = vunpack.c.l.b16 %v122
    %v1286 = vunpack.c.h.b16 %v122
    %v1287 = vunpack.c.l.b16 %v123
    %v1288 = vunpack.c.h.b16 %v123
    %v1289 = vunpack.c.l.b16 %v124
    %v1290 = vunpack.c.h.b16 %v124
    %v1291 = vunpack.c.l.b16 %v125
    %v1292 = vunpack.c.h.b16 %v125
    %v1293 = vunpack.c.l.b16 %v126
    %v1294 = vunpack.c.h.b16 %v126
    %v1295 = vunpack.c.l.b16 %v127
    %v1296 = vunpack.c.h.b16 %v127
    %v1297 = vunpack.c.l.b16 %v128
    %v1298 = vunpack.c.h.b16 %v128
    %v1299 = vunpack.c.l.b16 %v129
    %v1300 = vunpack.c.h.b16 %v129
    %v1301 = vunpack.c.l.b16 %v130
    %v1302 = vunpack.c.h.b16 %v130
    %v1303 = vunpack.c.l.b16 %v131
    %v1304 = vunpack.c.h.b16 %v131
    %v1305 = vunpack.c.l.b16 %v132
    %v1306 = vunpack.c.h.b16 %v132
    %v1307 = vunpack.c.l.b16 %v133
    %v1308 = vunpack.c.h.b16 %v133
    %v1309 = vunpack.c.l.b16 %v134
    %v1310 = vunpack.c.h.b16 %v134
    %v1311 = vunpack.c.l.b16 %v135
    %v1312 = vunpack.c.h.b16 %v135
    %v1313 = vunpack.c.l.b16 %v136
    %v1314 = vunpack.c.h.b16 %v136
    %v1315 = vunpack.c.l.b16 %v137
    %v1316 = vunpack.c.h.b16 %v137
    %v1317 = vunpack.c.l.b16 %v138
    %v1318 = vunpack.c.h.b16 %v138
    %v1319 = vunpack.c.l.b16 %v139
    %v1320 = vunpack.c.h.b16 %v139
    %v1321 = vunpack.c.l.b16 %v140
    %v1322 = vunpack.c.h.b16 %v140
    %v1323 = vunpack.c.l.b16 %v141
    %v1324 = vunpack.c.h.b16 %v141
    %v1325 = vunpack.c.l.b16 %v142
    %v1326 = vunpack.c.h.b16 %v142
    %v1327 = vunpack.c.l.b16 %v143
    %v1328 = vunpack.c.h.b16 %v143
    %v1329 = vunpack.c.l.b16 %v144
    %v1330 = vunpack.c.h.b16 %v144
    %v1331 = vunpack.c.l.b16 %v145
    %v1332 = vunpack.c.h.b16 %v145
    %v1333 = vunpack.c.l.b16 %v146
    %v1334 = vunpack.c.h.b16 %v146
    %v1335 = vunpack.c.l.b16 %v147
    %v1336 = vunpack.c.h.b16 %v147
    %v1337 = vunpack.c.l.b16 %v148
    %v1338 = vunpack.c.h.b16 %v148
    %v1339 = vunpack.c.l.b16 %v149
    %v1340 = vunpack.c.h.b16 %v149
    %v1341 = vunpack.c.l.b16 %v150
    %v1342 = vunpack.c.h.b16 %v150
    %v1343 = vunpack.c.l.b16 %v151
    %v1344 = vunpack.c.h.b16 %v151
    %v1345 = vunpack.c.l.b16 %v152
    %v1346 = vunpack.c.h.b16 %v152
    %v1347 = vunpack.c.l.b16 %v153
    %v1348 = vunpack.c.h.b16 %v153
    %v1349 = vunpack.c.l.b16 %v154
    %v1350 = vunpack.c.h.b16 %v154
    %v1351 = vunpack.c.l.b16 %v155
    %v1352 = vunpack.c.h.b16 %v155
    %v1353 = vunpack.c.l.b16 %v156
    %v1354 = vunpack.c.h.b16 %v156
    %v1355 = vunpack.c.l.b16 %v157
    %v1356 = vunpack.c.h.b16 %v157
    %v1357 = vunpack.c.l.b16 %v158
    %v1358 = vunpack.c.h.b16 %v158
    %v1359 = vunpack.c.l.b16 %v159
    %v1360 = vunpack.c.h.b16 %v159
    %v1361 = vunpack.c.l.b16 %v160
    %v1362 = vunpack.c.h.b16 %v160
    %v1363 = vunpack.c.l.b16 %v161
    %v1364 = vunpack.c.h.b16 %v161
    %v1365 = vunpack.c.l.b16 %v162
    %v1366 = vunpack.c.h.b16 %v162
    %v1367 = vunpack.c.l.b16 %v163
    %v1368 = vunpack.c.h.b16 %v163
    %v1369 = vunpack.c.l.b16 %v164
    %v1370 = vunpack.c.h.b16 %v164
    %v1371 = vunpack.c.l.b16 %v165
    %v1372 = vunpack.c.h.b16 %v165
    %v1373 = vunpack.c.l.b16 %v166
    %v1374 = vunpack.c.h.b16 %v166
    %v1375 = vunpack.c.l.b16 %v167
    %v1376 = vunpack.c.h.b16 %v167
    %v1377 = vunpack.c.l.b16 %v168
    %v1378 = vunpack.c.h.b16 %v168
    %v1379 = vunpack.c.l.b16 %v169
    %v1380 = vunpack.c.h.b16 %v169
    %v1381 = vunpack.c.l.b16 %v170
    %v1382 = vunpack.c.h.b16 %v170
    %v1383 = vunpack.c.l.b16 %v171
    %v1384 = vunpack.c.h.b16 %v171
    %v1385 = vunpack.c.l.b16 %v172
    %v1386 = vunpack.c.h.b16 %v172
    %v1387 = vunpack.c.l.b16 %v173
    %v1388 = vunpack.c.h.b16 %v173
    %v1389 = vunpack.c.l.b16 %v174
    %v1390 = vunpack.c.h.b16 %v174
    %v1391 = vunpack.c.l.b16 %v175
    %v1392 = vunpack.c.h.b16 %v175
    %v1393 = vunpack.c.l.b16 %v176
    %v1394 = vunpack.c.h.b16 %v176
    %v1395 = vunpack.c.l.b16 %v177
    %v1396 = vunpack.c.h.b16 %v177
    %v1397 = vunpack.c.l.b16 %v178
    %v1398 = vunpack.c.h.b16 %v178
    %v1399 = vunpack.c.l.b16 %v179
    %v1400 = vunpack.c.h.b16 %v179
    %v1401 = vunpack.c.l.b16 %v180
    %v1402 = vunpack.c.h.b16 %v180
    %v1403 = vunpack.c.l.b16 %v181
    %v1404 = vunpack.c.h.b16 %v181
    %v1405 = vunpack.c.l.b16 %v182
    %v1406 = vunpack.c.h.b16 %v182
    %v1407 = vunpack.c.l.b16 %v183
    %v1408 = vunpack.c.h.b16 %v183
    %v1409 = vunpack.c.l.b16 %v184
    %v1410 = vunpack.c.h.b16 %v184
    %v1411 = vunpack.c.l.b16 %v185
    %v1412 = vunpack.c.h.b16 %v185
    %v1413 = vunpack.c.l.b16 %v186
    %v1414 = vunpack.c.h.b16 %v186
    %v1415 = vunpack.c.l.b16 %v187
    %v1416 = vunpack.c.h.b16 %v187
    %v1417 = vunpack.c.l.b16 %v188
    %v1418 = vunpack.c.h.b16 %v188
    %v1419 = vunpack.c.l.b16 %v189
    %v1420 = vunpack.c.h.b16 %v189
    %v1421 = vunpack.c.l.b16 %v190
    %v1422 = vunpack.c.h.b16 %v190
    %v1423 = vunpack.c.l.b16 %v191
    %v1424 = vunpack.c.h.b16 %v191
    %v1425 = vunpack.c.l.b16 %v192
    %v1426 = vunpack.c.h.b16 %v192
    %v1427 = vunpack.c.l.b16 %v193
    %v1428 = vunpack.c.h.b16 %v193
    %v1429 = vunpack.c.l.b16 %v194
    %v1430 = vunpack.c.h.b16 %v194
    %v1431 = vunpack.c.l.b16 %v195
    %v1432 = vunpack.c.h.b16 %v195
    %v1433 = vunpack.c.l.b16 %v196
    %v1434 = vunpack.c.h.b16 %v196
    %v1435 = vunpack.c.l.b16 %v197
    %v1436 = vunpack.c.h.b16 %v197
    %v1437 = vunpack.c.l.b16 %v198
    %v1438 = vunpack.c.h.b16 %v198
    %v1439 = vunpack.c.l.b16 %v199
    %v1440 = vunpack.c.h.b16 %v199
    %v1441 = vunpack.c.l.b16 %v200
    %v1442 = vunpack.c.h.b16 %v200
    %v1443 = vunpack.c.l.b16 %v201
    %v1444 = vunpack.c.h.b16 %v201
    %v1445 = vunpack.c.l.b16 %v202
    %v1446 = vunpack.c.h.b16 %v202
    %v1447 = vunpack.c.l.b16 %v203
    %v1448 = vunpack.c.h.b16 %v203
    %v1449 = vunpack.c.l.b16 %v204
    %v1450 = vunpack.c.h.b16 %v204
    %v1451 = vunpack.c.l.b16 %v205
    %v1452 = vunpack.c.h.b16 %v205
    %v1453 = vunpack.c.l.b16 %v206
    %v1454 = vunpack.c.h.b16 %v206
    %v1455 = vunpack.c.l.b16 %v207
    %v1456 = vunpack.c.h.b16 %v207
    %v1457 = vunpack.c.l.b16 %v208
    %v1458 = vunpack.c.h.b16 %v208
    %v1459 = vunpack.c.l.b16 %v209
    %v1460 = vunpack.c.h.b16 %v209
    %v1461 = vunpack.c.l.b16 %v210
    %v1462 = vunpack.c.h.b16 %v210
    %v1463 = vunpack.c.l.b16 %v211
    %v1464 = vunpack.c.h.b16 %v211
    %v1465 = vunpack.c.l.b16 %v212
    %v1466 = vunpack.c.h.b16 %v212
    %v1467 = vunpack.c.l.b16 %v213
    %v1468 = vunpack.c.h.b16 %v213
    %v1469 = vunpack.c.l.b16 %v214
    %v1470 = vunpack.c.h.b16 %v214
    %v1471 = vunpack.c.l.b16 %v215
    %v1472 = vunpack.c.h.b16 %v215
    %v1473 = vunpack.c.l.b16 %v216
    %v1474 = vunpack.c.h.b16 %v216
    %v1475 = vunpack.c.l.b16 %v217
    %v1476 = vunpack.c.h.b16 %v217
    %v1477 = vunpack.c.l.b16 %v218
    %v1478 = vunpack.c.h.b16 %v218
    %v1479 = vunpack.c.l.b16 %v219
    %v1480 = vunpack.c.h.b16 %v219
    %v1481 = vunpack.c.l.b16 %v220
    %v1482 = vunpack.c.h.b16 %v220
    %v1483 = vunpack.c.l.b16 %v221
    %v1484 = vunpack.c.h.b16 %v221
    %v1485 = vunpack.c.l.b16 %v222
    %v1486 = vunpack.c.h.b16 %v222
    %v1487 = vunpack.c.l.b16 %v223
    %v1488 = vunpack.c.h.b16 %v223
    %v1489 = vunpack.c.l.b16 %v224
    %v1490 = vunpack.c.h.b16 %v224
    %v1491 = vunpack.c.l.b16 %v225
    %v1492 = vunpack.c.h.b16 %v225
    %v1493 = vunpack.c.l.b16 %v226
    %v1494 = vunpack.c.h.b16 %v226
    %v1495 = vunpack.c.l.b16 %v227
    %v1496 = vunpack.c.h.b16 %v227
    %v1497 = vunpack.c.l.b16 %v228
    %v1498 = vunpack.c.h.b16 %v228
    %v1499 = vunpack.c.l.b16 %v229
    %v1500 = vunpack.c.h.b16 %v229
    %v1501 = vunpack.c.l.b16 %v230
    %v1502 = vunpack.c.h.b16 %v230
    %v1503 = vunpack.c.l.b16 %v231
    %v1504 = vunpack.c.h.b16 %v231
    %v1505 = vunpack.c.l.b16 %v232
    %v1506 = vunpack.c.h.b16 %v232
    %v1507 = vunpack.c.l.b16 %v233
    %v1508 = vunpack.c.h.b16 %v233
    %v1509 = vunpack.c.l.b16 %v234
    %v1510 = vunpack.c.h.b16 %v234
    %v1511 = vunpack.c.l.b16 %v235
    %v1512 = vunpack.c.h.b16 %v235
    %v1513 = vunpack.c.l.b16 %v236
    %v1514 = vunpack.c.h.b16 %v236
    %v1515 = vunpack.c.l.b16 %v237
    %v1516 = vunpack.c.h.b16 %v237
    %v1517 = vunpack.c.l.b16 %v238
    %v1518 = vunpack.c.h.b16 %v238
    %v1519 = vunpack.c.l.b16 %v239
    %v1520 = vunpack.c.h.b16 %v239
    %v1521 = vunpack.c.l.b16 %v240
    %v1522 = vunpack.c.h.b16 %v240
    %v1523 = vunpack.c.l.b16 %v241
    %v1524 = vunpack.c.h.b16 %v241
    %v1525 = vunpack.c.l.b16 %v242
    %v1526 = vunpack.c.h.b16 %v242
    %v1527 = vunpack.c.l.b16 %v243
    %v1528 = vunpack.c.h.b16 %v243
    %v1529 = vunpack.c.l.b16 %v244
    %v1530 = vunpack.c.h.b16 %v244
    %v1531 = vunpack.c.l.b16 %v245
    %v1532 = vunpack.c.h.b16 %v245
    %v1533 = vunpack.c.l.b16 %v246
    %v1534 = vunpack.c.h.b16 %v246
    %v1535 = vunpack.c.l.b16 %v247
    %v1536 = vunpack.c.h.b16 %v247
    %v1537 = vunpack.c.l.b16 %v248
    %v1538 = vunpack.c.h.b16 %v248
    %v1539 = vunpack.c.l.b16 %v249
    %v1540 = vunpack.c.h.b16 %v249
    %v1541 = vunpack.c.l.b16 %v250
    %v1542 = vunpack.c.h.b16 %v250
    %v1543 = vunpack.c.l.b16 %v251
    %v1544 = vunpack.c.h.b16 %v251
    %v1545 = vunpack.c.l.b16 %v252
    %v1546 = vunpack.c.h.b16 %v252
    %v1547 = vunpack.c.l.b16 %v253
    %v1548 = vunpack.c.h.b16 %v253
    %v1549 = vunpack.c.l.b16 %v254
    %v1550 = vunpack.c.h.b16 %v254
    %v1551 = vunpack.c.l.b16 %v255
    %v1552 = vunpack.c.h.b16 %v255
    %v1553 = vunpack.c.l.b16 %v256
    %v1554 = vunpack.c.h.b16 %v256
    %v1555 = vunpack.c.l.b16 %v257
    %v1556 = vunpack.c.h.b16 %v257
    %v1557 = vunpack.c.l.b16 %v258
    %v1558 = vunpack.c.h.b16 %v258
    %v1559 = vunpack.c.l.b16 %v259
    %v1560 = vunpack.c.h.b16 %v259
    %v1561 = vunpack.c.l.b16 %v260
    %v1562 = vunpack.c.h.b16 %v260
    %v1563 = vunpack.c.l.b16 %v261
    %v1564 = vunpack.c.h.b16 %v261
    %v1565 = vunpack.c.l.b16 %v262
    %v1566 = vunpack.c.h.b16 %v262
    %v1567 = vunpack.c.l.b16 %v263
    %v1568 = vunpack.c.h.b16 %v263
    %v1569 = vunpack.c.l.b16 %v264
    %v1570 = vunpack.c.h.b16 %v264
    %v1571 = vunpack.c.l.b16 %v265
    %v1572 = vunpack.c.h.b16 %v265
    %v1573 = vunpack.c.l.b16 %v266
    %v1574 = vunpack.c.h.b16 %v266
    %v1575 = vunpack.c.l.b16 %v267
    %v1576 = vunpack.c.h.b16 %v267
    %v1577 = vunpack.c.l.b16 %v268
    %v1578 = vunpack.c.h.b16 %v268
    %v1579 = vunpack.c.l.b16 %v269
    %v1580 = vunpack.c.h.b16 %v269
    %v1581 = vunpack.c.l.b16 %v270
    %v1582 = vunpack.c.h.b16 %v270
    %v1583 = vunpack.c.l.b16 %v271
    %v1584 = vunpack.c.h.b16 %v271
    %v1585 = vunpack.c.l.b16 %v272
    %v1586 = vunpack.c.h.b16 %v272
    %v1587 = vunpack.c.l.b16 %v273
    %v1588 = vunpack.c.h.b16 %v273
    %v1589 = vunpack.c.l.b16 %v274
    %v1590 = vunpack.c.h.b16 %v274
    %v1591 = vunpack.c.l.b16 %v275
    %v1592 = vunpack.c.h.b16 %v275
    %v1593 = vunpack.c.l.b16 %v276
    %v1594 = vunpack.c.h.b16 %v276
    %v1595 = vunpack.c.l.b16 %v277
    %v1596 = vunpack.c.h.b16 %v277
    %v1597 = vunpack.c.l.b16 %v278
    %v1598 = vunpack.c.h.b16 %v278
    %v1599 = vunpack.c.l.b16 %v279
    %v1600 = vunpack.c.h.b16 %v279
    %v1601 = vunpack.c.l.b16 %v280
    %v1602 = vunpack.c.h.b16 %v280
    %v1603 = vunpack.c.l.b16 %v281
    %v1604 = vunpack.c.h.b16 %v281
    %v1605 = vunpack.c.l.b16 %v282
    %v1606 = vunpack.c.h.b16 %v282
    %v1607 = vunpack.c.l.b16 %v283
    %v1608 = vunpack.c.h.b16 %v283
    %v1609 = vunpack.c.l.b16 %v284
    %v1610 = vunpack.c.h.b16 %v284
    %v1611 = vunpack.c.l.b16 %v285
    %v1612 = vunpack.c.h.b16 %v285
    %v1613 = vunpack.c.l.b16 %v286
    %v1614 = vunpack.c.h.b16 %v286
    %v1615 = vunpack.c.l.b16 %v287
    %v1616 = vunpack.c.h.b16 %v287
    %v1617 = vunpack.c.l.b16 %v288
    %v1618 = vunpack.c.h.b16 %v288
    %v1619 = vunpack.c.l.b16 %v289
    %v1620 = vunpack.c.h.b16 %v289
    %v1621 = vunpack.c.l.b16 %v290
    %v1622 = vunpack.c.h.b16 %v290
    %v1623 = vunpack.c.l.b16 %v291
    %v1624 = vunpack.c.h.b16 %v291
    %v1625 = vunpack.c.l.b16 %v292
    %v1626 = vunpack.c.h.b16 %v292
    %v1627 = vunpack.c.l.b16 %v293
    %v1628 = vunpack.c.h.b16 %v293
    %v1629 = vunpack.c.l.b16 %v294
    %v1630 = vunpack.c.h.b16 %v294
    %v1631 = vunpack.c.l.b16 %v295
    %v1632 = vunpack.c.h.b16 %v295
    %v1633 = vunpack.c.l.b16 %v296
    %v1634 = vunpack.c.h.b16 %v296
    %v1635 = vunpack.c.l.b16 %v297
    %v1636 = vunpack.c.h.b16 %v297
    %v1637 = vunpack.c.l.b16 %v298
    %v1638 = vunpack.c.h.b16 %v298
    %v1639 = vunpack.c.l.b16 %v299
    %v1640 = vunpack.c.h.b16 %v299
    %v1641 = vunpack.c.l.b16 %v300
    %v1642 = vunpack.c.h.b16 %v300
    %v1643 = vunpack.c.l.b16 %v301
    %v1644 = vunpack.c.h.b16 %v301
    %v1645 = vunpack.c.l.b16 %v302
    %v1646 = vunpack.c.h.b16 %v302
    %v1647 = vunpack.c.l.b16 %v303
    %v1648 = vunpack.c.h.b16 %v303
    %v1649 = vunpack.c.l.b16 %v304
    %v1650 = vunpack.c.h.b16 %v304
    %v1651 = vunpack.c.l.b16 %v305
    %v1652 = vunpack.c.h.b16 %v305
    %v1653 = vunpack.c.l.b16 %v306
    %v1654 = vunpack.c.h.b16 %v306
    %v1655 = vunpack.c.l.b16 %v307
    %v1656 = vunpack.c.h.b16 %v307
    %v1657 = vunpack.c.l.b16 %v308
    %v1658 = vunpack.c.h.b16 %v308
    %v1659 = vunpack.c.l.b16 %v309
    %v1660 = vunpack.c.h.b16 %v309
    %v1661 = vunpack.c.l.b16 %v310
    %v1662 = vunpack.c.h.b16 %v310
    %v1663 = vunpack.c.l.b16 %v311
    %v1664 = vunpack.c.h.b16 %v311
    %v1665 = vunpack.c.l.b16 %v312
    %v1666 = vunpack.c.h.b16 %v312
    %v1667 = vunpack.c.l.b16 %v313
    %v1668 = vunpack.c.h.b16 %v313
    %v1669 = vunpack.c.l.b16 %v314
    %v1670 = vunpack.c.h.b16 %v314
    %v1671 = vunpack.c.l.b16 %v315
    %v1672 = vunpack.c.h.b16 %v315
    %v1673 = vunpack.c.l.b16 %v316
    %v1674 = vunpack.c.h.b16 %v316
    %v1675 = vunpack.c.l.b16 %v317
    %v1676 = vunpack.c.h.b16 %v317
    %v1677 = vunpack.c.l.b16 %v318
    %v1678 = vunpack.c.h.b16 %v318
    %v1679 = vunpack.c.l.b16 %v319
    %v1680 = vunpack.c.h.b16 %v319
    %v1681 = vunpack.c.l.b16 %v320
    %v1682 = vunpack.c.h.b16 %v320
    %v1683 = vunpack.c.l.b16 %v321
    %v1684 = vunpack.c.h.b16 %v321
    %v1685 = vunpack.c.l.b16 %v322
    %v1686 = vunpack.c.h.b16 %v322
    %v1687 = vunpack.c.l.b16 %v323
    %v1688 = vunpack.c.h.b16 %v323
    %v1689 = vunpack.c.l.b16 %v324
    %v1690 = vunpack.c.h.b16 %v324
    %v1691 = vunpack.c.l.b16 %v325
    %v1692 = vunpack.c.h.b16 %v325
    %v1693 = vunpack.c.l.b16 %v326
    %v1694 = vunpack.c.h.b16 %v326
    %v1695 = vunpack.c.l.b16 %v327
    %v1696 = vunpack.c.h.b16 %v327
    %v1697 = vunpack.c.l.b16 %v328
    %v1698 = vunpack.c.h.b16 %v328
    %v1699 = vunpack.c.l.b16 %v329
    %v1700 = vunpack.c.h.b16 %v329
    %v1701 = vunpack.c.l.b16 %v330
    %v1702 = vunpack.c.h.b16 %v330
    %v1703 = vunpack.c.l.b16 %v331
    %v1704 = vunpack.c.h.b16 %v331
    %v1705 = vunpack.c.l.b16 %v332
    %v1706 = vunpack.c.h.b16 %v332
    %v1707 = vunpack.c.l.b16 %v333
    %v1708 = vunpack.c.h.b16 %v333
    %v1709 = vunpack.c.l.b16 %v334
    %v1710 = vunpack.c.h.b16 %v334
    %v1711 = vunpack.c.l.b16 %v335
    %v1712 = vunpack.c.h.b16 %v335
    %v1713 = vunpack.c.l.b16 %v336
    %v1714 = vunpack.c.h.b16 %v336
    %v1715 = vunpack.c.l.b16 %v337
    %v1716 = vunpack.c.h.b16 %v337
    %v1717 = vunpack.c.l.b16 %v338
    %v1718 = vunpack.c.h.b16 %v338
    %v1719 = vunpack.c.l.b16 %v339
    %v1720 = vunpack.c.h.b16 %v339
    %v1721 = vunpack.c.l.b16 %v340
    %v1722 = vunpack.c.h.b16 %v340
    %v1723 = vunpack.c.l.b16 %v341
    %v1724 = vunpack.c.h.b16 %v341
    %v1725 = vunpack.c.l.b16 %v342
    %v1726 = vunpack.c.h.b16 %v342
    %v1727 = vunpack.c.l.b16 %v343
    %v1728 = vunpack.c.h.b16 %v343
    %v1729 = vunpack.c.l.b16 %v344
    %v1730 = vunpack.c.h.b16 %v344
    %v1731 = vunpack.c.l.b16 %v345
    %v1732 = vunpack.c.h.b16 %v345
    %v1733 = vunpack.c.l.b16 %v346
    %v1734 = vunpack.c.h.b16 %v346
    %v1735 = vunpack.c.l.b16 %v347
    %v1736 = vunpack.c.h.b16 %v347
    %v1737 = vunpack.c.l.b16 %v348
    %v1738 = vunpack.c.h.b16 %v348
    %v1739 = vunpack.c.l.b16 %v349
    %v1740 = vunpack.c.h.b16 %v349
    %v1741 = vunpack.c.l.b16 %v350
    %v1742 = vunpack.c.h.b16 %v350
    %v1743 = vunpack.c.l.b16 %v351
    %v1744 = vunpack.c.h.b16 %v351
    %v1745 = vunpack.c.l.b16 %v352
    %v1746 = vunpack.c.h.b16 %v352
    %v1747 = vunpack.c.l.b16 %v353
    %v1748 = vunpack.c.h.b16 %v353
    %v1749 = vunpack.c.l.b16 %v354
    %v1750 = vunpack.c.h.b16 %v354
    %v1751 = vunpack.c.l.b16 %v355
    %v1752 = vunpack.c.h.b16 %v355
    %v1753 = vunpack.c.l.b16 %v356
    %v1754 = vunpack.c.h.b16 %v356
    %v1755 = vunpack.c.l.b16 %v357
    %v1756 = vunpack.c.h.b16 %v357
    %v1757 = vunpack.c.l.b16 %v358
    %v1758 = vunpack.c.h.b16 %v358
    %v1759 = vunpack.c.l.b16 %v359
    %v1760 = vunpack.c.h.b16 %v359
    %v1761 = vunpack.c.l.b16 %v360
    %v1762 = vunpack.c.h.b16 %v360
    %v1763 = vunpack.c.l.b16 %v361
    %v1764 = vunpack.c.h.b16 %v361
    %v1765 = vunpack.c.l.b16 %v362
    %v1766 = vunpack.c.h.b16 %v362
    %v1767 = vunpack.c.l.b16 %v363
    %v1768 = vunpack.c.h.b16 %v363
    %v1769 = vunpack.c.l.b16 %v364
    %v1770 = vunpack.c.h.b16 %v364
    %v1771 = vunpack.c.l.b16 %v365
    %v1772 = vunpack.c.h.b16 %v365
    %v1773 = vunpack.c.l.b16 %v366
    %v1774 = vunpack.c.h.b16 %v366
    %v1775 = vunpack.c.l.b16 %v367
    %v1776 = vunpack.c.h.b16 %v367
    %v1777 = vunpack.c.l.b16 %v368
    %v1778 = vunpack.c.h.b16 %v368
    %v1779 = vunpack.c.l.b16 %v369
    %v1780 = vunpack.c.h.b16 %v369
    %v1781 = vunpack.c.l.b16 %v370
    %v1782 = vunpack.c.h.b16 %v370
    %v1783 = vunpack.c.l.b16 %v371
    %v1784 = vunpack.c.h.b16 %v371
    %v1785 = vunpack.c.l.b16 %v372
    %v1786 = vunpack.c.h.b16 %v372
    %v1787 = vunpack.c.l.b16 %v373
    %v1788 = vunpack.c.h.b16 %v373
    %v1789 = vunpack.c.l.b16 %v374
    %v1790 = vunpack.c.h.b16 %v374
    %v1791 = vunpack.c.l.b16 %v375
    %v1792 = vunpack.c.h.b16 %v375
    %v1793 = vunpack.c.l.b16 %v376
    %v1794 = vunpack.c.h.b16 %v376
    %v1795 = vunpack.c.l.b16 %v377
    %v1796 = vunpack.c.h.b16 %v377
    %v1797 = vunpack.c.l.b16 %v378
    %v1798 = vunpack.c.h.b16 %v378
    %v1799 = vunpack.c.l.b16 %v379
    %v1800 = vunpack.c.h.b16 %v379
    %v1801 = vunpack.c.l.b16 %v380
    %v1802 = vunpack.c.h.b16 %v380
    %v1803 = vunpack.c.l.b16 %v381
    %v1804 = vunpack.c.h.b16 %v381
    %v1805 = vunpack.c.l.b16 %v382
    %v1806 = vunpack.c.h.b16 %v382
    %v1807 = vunpack.c.l.b16 %v383
    %v1808 = vunpack.c.h.b16 %v383
    %v1809 = vunpack.c.l.b16 %v384
    %v1810 = vunpack.c.h.b16 %v384
    %v1811 = vunpack.c.l.b16 %v385
    %v1812 = vunpack.c.h.b16 %v385
    %v1813 = vunpack.c.l.b16 %v386
    %v1814 = vunpack.c.h.b16 %v386
    %v1815 = vunpack.c.l.b16 %v387
    %v1816 = vunpack.c.h.b16 %v387
    %v1817 = vunpack.c.l.b16 %v388
    %v1818 = vunpack.c.h.b16 %v388
    %v1819 = vunpack.c.l.b16 %v389
    %v1820 = vunpack.c.h.b16 %v389
    %v1821 = vunpack.c.l.b16 %v390
    %v1822 = vunpack.c.h.b16 %v390
    %v1823 = vunpack.c.l.b16 %v391
    %v1824 = vunpack.c.h.b16 %v391
    %v1825 = vunpack.c.l.b16 %v392
    %v1826 = vunpack.c.h.b16 %v392
    %v1827 = vunpack.c.l.b16 %v393
    %v1828 = vunpack.c.h.b16 %v393
    %v1829 = vunpack.c.l.b16 %v394
    %v1830 = vunpack.c.h.b16 %v394
    %v1831 = vunpack.c.l.b16 %v395
    %v1832 = vunpack.c.h.b16 %v395
    %v1833 = vunpack.c.l.b16 %v396
    %v1834 = vunpack.c.h.b16 %v396
    %v1835 = vunpack.c.l.b16 %v397
    %v1836 = vunpack.c.h.b16 %v397
    %v1837 = vunpack.c.l.b16 %v398
    %v1838 = vunpack.c.h.b16 %v398
    %v1839 = vunpack.c.l.b16 %v399
    %v1840 = vunpack.c.h.b16 %v399
    %v1841 = vunpack.c.l.b16 %v400
    %v1842 = vunpack.c.h.b16 %v400
    %v1843 = vunpack.c.l.b16 %v401
    %v1844 = vunpack.c.h.b16 %v401
    %v1845 = vunpack.c.l.b16 %v402
    %v1846 = vunpack.c.h.b16 %v402
    %v1847 = vunpack.c.l.b16 %v403
    %v1848 = vunpack.c.h.b16 %v403
    %v1849 = vunpack.c.l.b16 %v404
    %v1850 = vunpack.c.h.b16 %v404
    %v1851 = vunpack.c.l.b16 %v405
    %v1852 = vunpack.c.h.b16 %v405
    %v1853 = vunpack.c.l.b16 %v406
    %v1854 = vunpack.c.h.b16 %v406
    %v1855 = vunpack.c.l.b16 %v407
    %v1856 = vunpack.c.h.b16 %v407
    %v1857 = vunpack.c.l.b16 %v408
    %v1858 = vunpack.c.h.b16 %v408
    %v1859 = vunpack.c.l.b16 %v409
    %v1860 = vunpack.c.h.b16 %v409
    %v1861 = vunpack.c.l.b16 %v410
    %v1862 = vunpack.c.h.b16 %v410
    %v1863 = vunpack.c.l.b16 %v411
    %v1864 = vunpack.c.h.b16 %v411
    %v1865 = vunpack.c.l.b16 %v412
    %v1866 = vunpack.c.h.b16 %v412
    %v1867 = vunpack.c.l.b16 %v413
    %v1868 = vunpack.c.h.b16 %v413
    %v1869 = vunpack.c.l.b16 %v414
    %v1870 = vunpack.c.h.b16 %v414
    %v1871 = vunpack.c.l.b16 %v415
    %v1872 = vunpack.c.h.b16 %v415
    %v1873 = vunpack.c.l.b16 %v416
    %v1874 = vunpack.c.h.b16 %v416
    %v1875 = vunpack.c.l.b16 %v417
    %v1876 = vunpack.c.h.b16 %v417
    %v1877 = vunpack.c.l.b16 %v418
    %v1878 = vunpack.c.h.b16 %v418
    %v1879 = vunpack.c.l.b16 %v419
    %v1880 = vunpack.c.h.b16 %v419
    %v1881 = vunpack.c.l.b16 %v420
    %v1882 = vunpack.c.h.b16 %v420
    %v1883 = vunpack.c.l.b16 %v421
    %v1884 = vunpack.c.h.b16 %v421
    %v1885 = vunpack.c.l.b16 %v422
    %v1886 = vunpack.c.h.b16 %v422
    %v1887 = vunpack.c.l.b16 %v423
    %v1888 = vunpack.c.h.b16 %v423
    %v1889 = vunpack.c.l.b16 %v424
    %v1890 = vunpack.c.h.b16 %v424
    %v1891 = vunpack.c.l.b16 %v425
    %v1892 = vunpack.c.h.b16 %v425
    %v1893 = vunpack.c.l.b16 %v426
    %v1894 = vunpack.c.h.b16 %v426
    %v1895 = vunpack.c.l.b16 %v427
    %v1896 = vunpack.c.h.b16 %v427
    %v1897 = vunpack.c.l.b16 %v428
    %v1898 = vunpack.c.h.b16 %v428
    %v1899 = vunpack.c.l.b16 %v429
    %v1900 = vunpack.c.h.b16 %v429
    %v1901 = vunpack.c.l.b16 %v430
    %v1902 = vunpack.c.h.b16 %v430
    %v1903 = vunpack.c.l.b16 %v431
    %v1904 = vunpack.c.h.b16 %v431
    %v1905 = vunpack.c.l.b16 %v432
    %v1906 = vunpack.c.h.b16 %v432
    %v1907 = vunpack.c.l.b16 %v433
    %v1908 = vunpack.c.h.b16 %v433
    %v1909 = vunpack.c.l.b16 %v434
    %v1910 = vunpack.c.h.b16 %v434
    %v1911 = vunpack.c.l.b16 %v435
    %v1912 = vunpack.c.h.b16 %v435
    %v1913 = vunpack.c.l.b16 %v436
    %v1914 = vunpack.c.h.b16 %v436
    %v1915 = vunpack.c.l.b16 %v437
    %v1916 = vunpack.c.h.b16 %v437
    %v1917 = vunpack.c.l.b16 %v438
    %v1918 = vunpack.c.h.b16 %v438
    %v1919 = vunpack.c.l.b16 %v439
    %v1920 = vunpack.c.h.b16 %v439
    %v1921 = vunpack.c.l.b16 %v440
    %v1922 = vunpack.c.h.b16 %v440
    %v1923 = vunpack.c.l.b16 %v441
    %v1924 = vunpack.c.h.b16 %v441
    %v1925 = vunpack.c.l.b16 %v442
    %v1926 = vunpack.c.h.b16 %v442
    %v1927 = vunpack.c.l.b16 %v443
    %v1928 = vunpack.c.h.b16 %v443
    %v1929 = vunpack.c.l.b16 %v444
    %v1930 = vunpack.c.h.b16 %v444
    %v1931 = vunpack.c.l.b16 %v445
    %v1932 = vunpack.c.h.b16 %v445
    %v1933 = vunpack.c.l.b16 %v446
    %v1934 = vunpack.c.h.b16 %v446
    %v1935 = vunpack.c.l.b16 %v447
    %v1936 = vunpack.c.h.b16 %v447
    %v1937 = vunpack.c.l.b16 %v448
    %v1938 = vunpack.c.h.b16 %v448
    %v1939 = vunpack.c.l.b16 %v449
    %v1940 = vunpack.c.h.b16 %v449
    %v1941 = vunpack.c.l.b16 %v450
    %v1942 = vunpack.c.h.b16 %v450
    %v1943 = vunpack.c.l.b16 %v451
    %v1944 = vunpack.c.h.b16 %v451
    %v1945 = vunpack.c.l.b16 %v452
    %v1946 = vunpack.c.h.b16 %v452
    %v1947 = vunpack.c.l.b16 %v453
    %v1948 = vunpack.c.h.b16 %v453
    %v1949 = vunpack.c.l.b16 %v454
    %v1950 = vunpack.c.h.b16 %v454
    %v1951 = vunpack.c.l.b16 %v455
    %v1952 = vunpack.c.h.b16 %v455
    %v1953 = vunpack.c.l.b16 %v456
    %v1954 = vunpack.c.h.b16 %v456
    %v1955 = vunpack.c.l.b16 %v457
    %v1956 = vunpack.c.h.b16 %v457
    %v1957 = vunpack.c.l.b16 %v458
    %v1958 = vunpack.c.h.b16 %v458
    %v1959 = vunpack.c.l.b16 %v459
    %v1960 = vunpack.c.h.b16 %v459
    %v1961 = vunpack.c.l.b16 %v460
    %v1962 = vunpack.c.h.b16 %v460
    %v1963 = vunpack.c.l.b16 %v461
    %v1964 = vunpack.c.h.b16 %v461
    %v1965 = vunpack.c.l.b16 %v462
    %v1966 = vunpack.c.h.b16 %v462
    %v1967 = vunpack.c.l.b16 %v463
    %v1968 = vunpack.c.h.b16 %v463
    %v1969 = vunpack.c.l.b16 %v464
    %v1970 = vunpack.c.h.b16 %v464
    %v1971 = vunpack.c.l.b16 %v465
    %v1972 = vunpack.c.h.b16 %v465
    %v1973 = vunpack.c.l.b16 %v466
    %v1974 = vunpack.c.h.b16 %v466
    %v1975 = vunpack.c.l.b16 %v467
    %v1976 = vunpack.c.h.b16 %v467
    %v1977 = vunpack.c.l.b16 %v468
    %v1978 = vunpack.c.h.b16 %v468
    %v1979 = vunpack.c.l.b16 %v469
    %v1980 = vunpack.c.h.b16 %v469
    %v1981 = vunpack.c.l.b16 %v470
    %v1982 = vunpack.c.h.b16 %v470
    %v1983 = vunpack.c.l.b16 %v471
    %v1984 = vunpack.c.h.b16 %v471
    %v1985 = vunpack.c.l.b16 %v472
    %v1986 = vunpack.c.h.b16 %v472
    %v1987 = vunpack.c.l.b16 %v473
    %v1988 = vunpack.c.h.b16 %v473
    %v1989 = vunpack.c.l.b16 %v474
    %v1990 = vunpack.c.h.b16 %v474
    %v1991 = vunpack.c.l.b16 %v475
    %v1992 = vunpack.c.h.b16 %v475
    %v1993 = vunpack.c.l.b16 %v476
    %v1994 = vunpack.c.h.b16 %v476
    %v1995 = vunpack.c.l.b16 %v477
    %v1996 = vunpack.c.h.b16 %v477
    %v1997 = vunpack.c.l.b16 %v478
    %v1998 = vunpack.c.h.b16 %v478
    %v1999 = vunpack.c.l.b16 %v479
    %v2000 = vunpack.c.h.b16 %v479
    %v2001 = vunpack.c.l.b16 %v480
    %v2002 = vunpack.c.h.b16 %v480
    %v2003 = vunpack.c.l.b16 %v481
    %v2004 = vunpack.c.h.b16 %v481
    %v2005 = vunpack.c.l.b16 %v482
    %v2006 = vunpack.c.h.b16 %v482
    %v2007 = vunpack.c.l.b16 %v483
    %v2008 = vunpack.c.h.b16 %v483
    %v2009 = vunpack.c.l.b16 %v484
    %v2010 = vunpack.c.h.b16 %v484
    %v2011 = vunpack.c.l.b16 %v485
    %v2012 = vunpack.c.h.b16 %v485
    %v2013 = vunpack.c.l.b16 %v486
    %v2014 = vunpack.c.h.b16 %v486
    %v2015 = vunpack.c.l.b16 %v487
    %v2016 = vunpack.c.h.b16 %v487
    %v2017 = vunpack.c.l.b16 %v488
    %v2018 = vunpack.c.h.b16 %v488
    %v2019 = vunpack.c.l.b16 %v489
    %v2020 = vunpack.c.h.b16 %v489
    %v2021 = vunpack.c.l.b16 %v490
    %v2022 = vunpack.c.h.b16 %v490
    %v2023 = vunpack.c.l.b16 %v491
    %v2024 = vunpack.c.h.b16 %v491
    %v2025 = vunpack.c.l.b16 %v492
    %v2026 = vunpack.c.h.b16 %v492
    %v2027 = vunpack.c.l.b16 %v493
    %v2028 = vunpack.c.h.b16 %v493
    %v2029 = vunpack.c.l.b16 %v494
    %v2030 = vunpack.c.h.b16 %v494
    %v2031 = vunpack.c.l.b16 %v495
    %v2032 = vunpack.c.h.b16 %v495
    %v2033 = vunpack.c.l.b16 %v496
    %v2034 = vunpack.c.h.b16 %v496
    %v2035 = vunpack.c.l.b16 %v497
    %v2036 = vunpack.c.h.b16 %v497
    %v2037 = vunpack.c.l.b16 %v498
    %v2038 = vunpack.c.h.b16 %v498
    %v2039 = vunpack.c.l.b16 %v499
    %v2040 = vunpack.c.h.b16 %v499
    %v2041 = vunpack.c.l.b16 %v500
    %v2042 = vunpack.c.h.b16 %v500
    %v2043 = vunpack.c.l.b16 %v501
    %v2044 = vunpack.c.h.b16 %v501
    %v2045 = vunpack.c.l.b16 %v502
    %v2046 = vunpack.c.h.b16 %v502
    %v2047 = vunpack.c.l.b16 %v503
    %v2048 = vunpack.c.h.b16 %v503
    %v2049 = vunpack.c.l.b16 %v504
    %v2050 = vunpack.c.h.b16 %v504
    %v2051 = vunpack.c.l.b16 %v505
    %v2052 = vunpack.c.h.b16 %v505
    %v2053 = vunpack.c.l.b16 %v506
    %v2054 = vunpack.c.h.b16 %v506
    %v2055 = vunpack.c.l.b16 %v507
    %v2056 = vunpack.c.h.b16 %v507
    %v2057 = vunpack.c.l.b16 %v508
    %v2058 = vunpack.c.h.b16 %v508
    %v2059 = vunpack.c.l.b16 %v509
    %v2060 = vunpack.c.h.b16 %v509
    %v2061 = vunpack.c.l.b16 %v510
    %v2062 = vunpack.c.h.b16 %v510
    %v2063 = vunpack.c.l.b16 %v511
    %v2064 = vunpack.c.h.b16 %v511
    %v2065 = vunpack.c.l.b16 %v512
    %v2066 = vunpack.c.h.b16 %v512
    %v2067 = vunpack.c.l.b16 %v513
    %v2068 = vunpack.c.h.b16 %v513
    %v2069 = vunpack.c.l.b16 %v514
    %v2070 = vunpack.c.h.b16 %v514
    %v2071 = vunpack.c.l.b16 %v515
    %v2072 = vunpack.c.h.b16 %v515
    %v2073 = vunpack.c.l.b16 %v516
    %v2074 = vunpack.c.h.b16 %v516
    %v2075 = vunpack.c.l.b16 %v517
    %v2076 = vunpack.c.h.b16 %v517
    %v2077 = vunpack.c.l.b16 %v518
    %v2078 = vunpack.c.h.b16 %v518
    %v2079 = vunpack.c.l.b16 %v519
    %v2080 = vunpack.c.h.b16 %v519
    %v2081 = vunpack.c.l.b16 %v520
    %v2082 = vunpack.c.h.b16 %v520
    %v2083 = vunpack.c.l.b16 %v521
    %v2084 = vunpack.c.h.b16 %v521
    %v2085 = vunpack.c.l.b16 %v522
    %v2086 = vunpack.c.h.b16 %v522
    %v2087 = vunpack.c.l.b16 %v523
    %v2088 = vunpack.c.h.b16 %v523
    %v2089 = vunpack.c.l.b16 %v524
    %v2090 = vunpack.c.h.b16 %v524
    %v2091 = vunpack.c.l.b16 %v525
    %v2092 = vunpack.c.h.b16 %v525
    %v2093 = vunpack.c.l.b16 %v526
    %v2094 = vunpack.c.h.b16 %v526
    %v2095 = vunpack.c.l.b16 %v527
    %v2096 = vunpack.c.h.b16 %v527
    %v2097 = vunpack.c.l.b16 %v528
    %v2098 = vunpack.c.h.b16 %v528
    %v2099 = vunpack.c.l.b16 %v529
    %v2100 = vunpack.c.h.b16 %v529
    %v2101 = vunpack.c.l.b16 %v530
    %v2102 = vunpack.c.h.b16 %v530
    %v2103 = vunpack.c.l.b16 %v531
    %v2104 = vunpack.c.h.b16 %v531
    %v2105 = vunpack.c.l.b16 %v532
    %v2106 = vunpack.c.h.b16 %v532
    %v2107 = vunpack.c.l.b16 %v533
    %v2108 = vunpack.c.h.b16 %v533
    %v2109 = vunpack.c.l.b16 %v534
    %v2110 = vunpack.c.h.b16 %v534
    %v2111 = vunpack.c.l.b16 %v535
    %v2112 = vunpack.c.h.b16 %v535
    %v2113 = vunpack.c.l.b16 %v536
    %v2114 = vunpack.c.h.b16 %v536
    %v2115 = vunpack.c.l.b16 %v537
    %v2116 = vunpack.c.h.b16 %v537
    %v2117 = vunpack.c.l.b16 %v538
    %v2118 = vunpack.c.h.b16 %v538
    %v2119 = vunpack.c.l.b16 %v539
    %v2120 = vunpack.c.h.b16 %v539
    %v2121 = vunpack.c.l.b16 %v540
    %v2122 = vunpack.c.h.b16 %v540
    %v2123 = vpack.c.b16 %v1103, %v1099
    %v2124 = vpack.c.b16 %v1104, %v1100
    %v2125 = vpack.c.b16 %v1105, %v1101
    %v2126 = vpack.c.b16 %v1106, %v1102
    %v2127 = vpack.c.b16 %v1111, %v1107
    %v2128 = vpack.c.b16 %v1112, %v1108
    %v2129 = vpack.c.b16 %v1113, %v1109
    %v2130 = vpack.c.b16 %v1114, %v1110
    %v2131 = vpack.c.b16 %v1119, %v1115
    %v2132 = vpack.c.b16 %v1120, %v1116
    %v2133 = vpack.c.b16 %v1121, %v1117
    %v2134 = vpack.c.b16 %v1122, %v1118
    %v2135 = vpack.c.b16 %v1127, %v1123
    %v2136 = vpack.c.b16 %v1128, %v1124
    %v2137 = vpack.c.b16 %v1129, %v1125
    %v2138 = vpack.c.b16 %v1130, %v1126
    %v2139 = vpack.c.b16 %v1135, %v1131
    %v2140 = vpack.c.b16 %v1136, %v1132
    %v2141 = vpack.c.b16 %v1137, %v1133
    %v2142 = vpack.c.b16 %v1138, %v1134
    %v2143 = vpack.c.b16 %v1143, %v1139
    %v2144 = vpack.c.b16 %v1144, %v1140
    %v2145 = vpack.c.b16 %v1145, %v1141
    %v2146 = vpack.c.b16 %v1146, %v1142
    %v2147 = vpack.c.b16 %v1151, %v1147
    %v2148 = vpack.c.b16 %v1152, %v1148
    %v2149 = vpack.c.b16 %v1153, %v1149
    %v2150 = vpack.c.b16 %v1154, %v1150
    %v2151 = vpack.c.b16 %v1159, %v1155
    %v2152 = vpack.c.b16 %v1160, %v1156
    %v2153 = vpack.c.b16 %v1161, %v1157
    %v2154 = vpack.c.b16 %v1162, %v1158
    %v2155 = vpack.c.b16 %v1167, %v1163
    %v2156 = vpack.c.b16 %v1168, %v1164
    %v2157 = vpack.c.b16 %v1169, %v1165
    %v2158 = vpack.c.b16 %v1170, %v1166
    %v2159 = vpack.c.b16 %v1175, %v1171
    %v2160 = vpack.c.b16 %v1176, %v1172
    %v2161 = vpack.c.b16 %v1177, %v1173
    %v2162 = vpack.c.b16 %v1178, %v1174
    %v2163 = vpack.c.b16 %v1183, %v1179
    %v2164 = vpack.c.b16 %v1184, %v1180
    %v2165 = vpack.c.b16 %v1185, %v1181
    %v2166 = vpack.c.b16 %v1186, %v1182
    %v2167 = vpack.c.b16 %v1191, %v1187
    %v2168 = vpack.c.b16 %v1192, %v1188
    %v2169 = vpack.c.b16 %v1193, %v1189
    %v2170 = vpack.c.b16 %v1194, %v1190
    %v2171 = vpack.c.b16 %v1199, %v1195
    %v2172 = vpack.c.b16 %v1200, %v1196
    %v2173 = vpack.c.b16 %v1201, %v1197
    %v2174 = vpack.c.b16 %v1202, %v1198
    %v2175 = vpack.c.b16 %v1207, %v1203
    %v2176 = vpack.c.b16 %v1208, %v1204
    %v2177 = vpack.c.b16 %v1209, %v1205
    %v2178 = vpack.c.b16 %v1210, %v1206
    %v2179 = vpack.c.b16 %v1215, %v1211
    %v2180 = vpack.c.b16 %v1216, %v1212
    %v2181 = vpack.c.b16 %v1217, %v1213
    %v2182 = vpack.c.b16 %v1218, %v1214
    %v2183 = vpack.c.b16 %v1223, %v1219
    %v2184 = vpack.c.b16 %v1224, %v1220
    %v2185 = vpack.c.b16 %v1225, %v1221
    %v2186 = vpack.c.b16 %v1226, %v1222
    %v2187 = vpack.c.b16 %v1231, %v1227
    %v2188 = vpack.c.b16 %v1232, %v1228
    %v2189 = vpack.c.b16 %v1233, %v1229
    %v2190 = vpack.c.b16 %v1234, %v1230
    %v2191 = vpack.c.b16 %v1239, %v1235
    %v2192 = vpack.c.b16 %v1240, %v1236
    %v2193 = vpack.c.b16 %v1241, %v1237
    %v2194 = vpack.c.b16 %v1242, %v1238
    %v2195 = vpack.c.b16 %v1247, %v1243
    %v2196 = vpack.c.b16 %v1248, %v1244
    %v2197 = vpack.c.b16 %v1249, %v1245
    %v2198 = vpack.c.b16 %v1250, %v1246
    %v2199 = vpack.c.b16 %v1255, %v1251
    %v2200 = vpack.c.b16 %v1256, %v1252
    %v2201 = vpack.c.b16 %v1257, %v1253
    %v2202 = vpack.c.b16 %v1258, %v1254
    %v2203 = vpack.c.b16 %v1263, %v1259
    %v2204 = vpack.c.b16 %v1264, %v1260
    %v2205 = vpack.c.b16 %v1265, %v1261
    %v2206 = vpack.c.b16 %v1266, %v1262
    %v2207 = vpack.c.b16 %v1271, %v1267
    %v2208 = vpack.c.b16 %v1272, %v1268
    %v2209 = vpack.c.b16 %v1273, %v1269
    %v2210 = vpack.c.b16 %v1274, %v1270
    %v2211 = vpack.c.b16 %v1279, %v1275
    %v2212 = vpack.c.b16 %v1280, %v1276
    %v2213 = vpack.c.b16 %v1281, %v1277
    %v2214 = vpack.c.b16 %v1282, %v1278
    %v2215 = vpack.c.b16 %v1287, %v1283
    %v2216 = vpack.c.b16 %v1288, %v1284
    %v2217 = vpack.c.b16 %v1289, %v1285
    %v2218 = vpack.c.b16 %v1290, %v1286
    %v2219 = vpack.c.b16 %v1295, %v1291
    %v2220 = vpack.c.b16 %v1296, %v1292
    %v2221 = vpack.c.b16 %v1297, %v1293
    %v2222 = vpack.c.b16 %v1298, %v1294
    %v2223 = vpack.c.b16 %v1303, %v1299
    %v2224 = vpack.c.b16 %v1304, %v1300
    %v2225 = vpack.c.b16 %v1305, %v1301
    %v2226 = vpack.c.b16 %v1306, %v1302
    %v2227 = vpack.c.b16 %v1311, %v1307
    %v2228 = vpack.c.b16 %v1312, %v1308
    %v2229 = vpack.c.b16 %v1313, %v1309
    %v2230 = vpack.c.b16 %v1314, %v1310
    %v2231 = vpack.c.b16 %v1319, %v1315
    %v2232 = vpack.c.b16 %v1320, %v1316
    %v2233 = vpack.c.b16 %v1321, %v1317
    %v2234 = vpack.c.b16 %v1322, %v1318
    %v2235 = vpack.c.b16 %v1327, %v1323
    %v2236 = vpack.c.b16 %v1328, %v1324
    %v2237 = vpack.c.b16 %v1329, %v1325
    %v2238 = vpack.c.b16 %v1330, %v1326
    %v2239 = vpack.c.b16 %v1335, %v1331
    %v2240 = vpack.c.b16 %v1336, %v1332
    %v2241 = vpack.c.b16 %v1337, %v1333
    %v2242 = vpack.c.b16 %v1338, %v1334
    %v2243 = vpack.c.b16 %v1343, %v1339
    %v2244 = vpack.c.b16 %v1344, %v1340
    %v2245 = vpack.c.b16 %v1345, %v1341
    %v2246 = vpack.c.b16 %v1346, %v1342
    %v2247 = vpack.c.b16 %v1351, %v1347
    %v2248 = vpack.c.b16 %v1352, %v1348
    %v2249 = vpack.c.b16 %v1353, %v1349
    %v2250 = vpack.c.b16 %v1354, %v1350
    %v2251 = vpack.c.b16 %v1359, %v1355
    %v2252 = vpack.c.b16 %v1360, %v1356
    %v2253 = vpack.c.b16 %v1361, %v1357
    %v2254 = vpack.c.b16 %v1362, %v1358
    %v2255 = vpack.c.b16 %v1367, %v1363
    %v2256 = vpack.c.b16 %v1368, %v1364
    %v2257 = vpack.c.b16 %v1369, %v1365
    %v2258 = vpack.c.b16 %v1370, %v1366
    %v2259 = vpack.c.b16 %v1375, %v1371
    %v2260 = vpack.c.b16 %v1376, %v1372
    %v2261 = vpack.c.b16 %v1377, %v1373
    %v2262 = vpack.c.b16 %v1378, %v1374
    %v2263 = vpack.c.b16 %v1383, %v1379
    %v2264 = vpack.c.b16 %v1384, %v1380
    %v2265 = vpack.c.b16 %v1385, %v1381
    %v2266 = vpack.c.b16 %v1386, %v1382
    %v2267 = vpack.c.b16 %v1391, %v1387
    %v2268 = vpack.c.b16 %v1392, %v1388
    %v2269 = vpack.c.b16 %v1393, %v1389
    %v2270 = vpack.c.b16 %v1394, %v1390
    %v2271 = vpack.c.b16 %v1399, %v1395
    %v2272 = vpack.c.b16 %v1400, %v1396
    %v2273 = vpack.c.b16 %v1401, %v1397
    %v2274 = vpack.c.b16 %v1402, %v1398
    %v2275 = vpack.c.b16 %v1407, %v1403
    %v2276 = vpack.c.b16 %v1408, %v1404
    %v2277 = vpack.c.b16 %v1409, %v1405
    %v2278 = vpack.c.b16 %v1410, %v1406
    %v2279 = vpack.c.b16 %v1415, %v1411
    %v2280 = vpack.c.b16 %v1416, %v1412
    %v2281 = vpack.c.b16 %v1417, %v1413
    %v2282 = vpack.c.b16 %v1418, %v1414
    %v2283 = vpack.c.b16 %v1423, %v1419
    %v2284 = vpack.c.b16 %v1424, %v1420
    %v2285 = vpack.c.b16 %v1425, %v1421
    %v2286 = vpack.c.b16 %v1426, %v1422
    %v2287 = vpack.c.b16 %v1431, %v1427
    %v2288 = vpack.c.b16 %v1432, %v1428
    %v2289 = vpack.c.b16 %v1433, %v1429
    %v2290 = vpack.c.b16 %v1434, %v1430
    %v2291 = vpack.c.b16 %v1439, %v1435
    %v2292 = vpack.c.b16 %v1440, %v1436
    %v2293 = vpack.c.b16 %v1441, %v1437
    %v2294 = vpack.c.b16 %v1442, %v1438
    %v2295 = vpack.c.b16 %v1447, %v1443
    %v2296 = vpack.c.b16 %v1448, %v1444
    %v2297 = vpack.c.b16 %v1449, %v1445
    %v2298 = vpack.c.b16 %v1450, %v1446
    %v2299 = vpack.c.b16 %v1455, %v1451
    %v2300 = vpack.c.b16 %v1456, %v1452
    %v2301 = vpack.c.b16 %v1457, %v1453
    %v2302 = vpack.c.b16 %v1458, %v1454
    %v2303 = vpack.c.b16 %v1463, %v1459
    %v2304 = vpack.c.b16 %v1464, %v1460
    %v2305 = vpack.c.b16 %v1465, %v1461
    %v2306 = vpack.c.b16 %v1466, %v1462
    %v2307 = vpack.c.b16 %v1471, %v1467
    %v2308 = vpack.c.b16 %v1472, %v1468
    %v2309 = vpack.c.b16 %v1473, %v1469
    %v2310 = vpack.c.b16 %v1474, %v1470
    %v2311 = vpack.c.b16 %v1479, %v1475
    %v2312 = vpack.c.b16 %v1480, %v1476
    %v2313 = vpack.c.b16 %v1481, %v1477
    %v2314 = vpack.c.b16 %v1482, %v1478
    %v2315 = vpack.c.b16 %v1487, %v1483
    %v2316 = vpack.c.b16 %v1488, %v1484
    %v2317 = vpack.c.b16 %v1489, %v1485
    %v2318 = vpack.c.b16 %v1490, %v1486
    %v2319 = vpack.c.b16 %v1495, %v1491
    %v2320 = vpack.c.b16 %v1496, %v1492
    %v2321 = vpack.c.b16 %v1497, %v1493
    %v2322 = vpack.c.b16 %v1498, %v1494
    %v2323 = vpack.c.b16 %v1503, %v1499
    %v2324 = vpack.c.b16 %v1504, %v1500
    %v2325 = vpack.c.b16 %v1505, %v1501
    %v2326 = vpack.c.b16 %v1506, %v1502
    %v2327 = vpack.c.b16 %v1511, %v1507
    %v2328 = vpack.c.b16 %v1512, %v1508
    %v2329 = vpack.c.b16 %v1513, %v1509
    %v2330 = vpack.c.b16 %v1514, %v1510
    %v2331 = vpack.c.b16 %v1519, %v1515
    %v2332 = vpack.c.b16 %v1520, %v1516
    %v2333 = vpack.c.b16 %v1521, %v1517
    %v2334 = vpack.c.b16 %v1522, %v1518
    %v2335 = vpack.c.b16 %v1527, %v1523
    %v2336 = vpack.c.b16 %v1528, %v1524
    %v2337 = vpack.c.b16 %v1529, %v1525
    %v2338 = vpack.c.b16 %v1530, %v1526
    %v2339 = vpack.c.b16 %v1535, %v1531
    %v2340 = vpack.c.b16 %v1536, %v1532
    %v2341 = vpack.c.b16 %v1537, %v1533
    %v2342 = vpack.c.b16 %v1538, %v1534
    %v2343 = vpack.c.b16 %v1543, %v1539
    %v2344 = vpack.c.b16 %v1544, %v1540
    %v2345 = vpack.c.b16 %v1545, %v1541
    %v2346 = vpack.c.b16 %v1546, %v1542
    %v2347 = vpack.c.b16 %v1551, %v1547
    %v2348 = vpack.c.b16 %v1552, %v1548
    %v2349 = vpack.c.b16 %v1553, %v1549
    %v2350 = vpack.c.b16 %v1554, %v1550
    %v2351 = vpack.c.b16 %v1559, %v1555
    %v2352 = vpack.c.b16 %v1560, %v1556
    %v2353 = vpack.c.b16 %v1561, %v1557
    %v2354 = vpack.c.b16 %v1562, %v1558
    %v2355 = vpack.c.b16 %v1567, %v1563
    %v2356 = vpack.c.b16 %v1568, %v1564
    %v2357 = vpack.c.b16 %v1569, %v1565
    %v2358 = vpack.c.b16 %v1570, %v1566
    %v2359 = vpack.c.b16 %v1575, %v1571
    %v2360 = vpack.c.b16 %v1576, %v1572
    %v2361 = vpack.c.b16 %v1577, %v1573
    %v2362 = vpack.c.b16 %v1578, %v1574
    %v2363 = vpack.c.b16 %v1583, %v1579
    %v2364 = vpack.c.b16 %v1584, %v1580
    %v2365 = vpack.c.b16 %v1585, %v1581
    %v2366 = vpack.c.b16 %v1586, %v1582
    %v2367 = vpack.c.b16 %v1591, %v1587
    %v2368 = vpack.c.b16 %v1592, %v1588
    %v2369 = vpack.c.b16 %v1593, %v1589
    %v2370 = vpack.c.b16 %v1594, %v1590
    %v2371 = vpack.c.b16 %v1599, %v1595
    %v2372 = vpack.c.b16 %v1600, %v1596
    %v2373 = vpack.c.b16 %v1601, %v1597
    %v2374 = vpack.c.b16 %v1602, %v1598
    %v2375 = vpack.c.b16 %v1607, %v1603
    %v2376 = vpack.c.b16 %v1608, %v1604
    %v2377 = vpack.c.b16 %v1609, %v1605
    %v2378 = vpack.c.b16 %v1610, %v1606
    %v2379 = vpack.c.b16 %v1615, %v1611
    %v2380 = vpack.c.b16 %v1616, %v1612
    %v2381 = vpack.c.b16 %v1617, %v1613
    %v2382 = vpack.c.b16 %v1618, %v1614
    %v2383 = vpack.c.b16 %v1623, %v1619
    %v2384 = vpack.c.b16 %v1624, %v1620
    %v2385 = vpack.c.b16 %v1625, %v1621
    %v2386 = vpack.c.b16 %v1626, %v1622
    %v2387 = vpack.c.b16 %v1631, %v1627
    %v2388 = vpack.c.b16 %v1632, %v1628
    %v2389 = vpack.c.b16 %v1633, %v1629
    %v2390 = vpack.c.b16 %v1634, %v1630
    %v2391 = vpack.c.b16 %v1639, %v1635
    %v2392 = vpack.c.b16 %v1640, %v1636
    %v2393 = vpack.c.b16 %v1641, %v1637
    %v2394 = vpack.c.b16 %v1642, %v1638
    %v2395 = vpack.c.b16 %v1647, %v1643
    %v2396 = vpack.c.b16 %v1648, %v1644
    %v2397 = vpack.c.b16 %v1649, %v1645
    %v2398 = vpack.c.b16 %v1650, %v1646
    %v2399 = vpack.c.b16 %v1655, %v1651
    %v2400 = vpack.c.b16 %v1656, %v1652
    %v2401 = vpack.c.b16 %v1657, %v1653
    %v2402 = vpack.c.b16 %v1658, %v1654
    %v2403 = vpack.c.b16 %v1663, %v1659
    %v2404 = vpack.c.b16 %v1664, %v1660
    %v2405 = vpack.c.b16 %v1665, %v1661
    %v2406 = vpack.c.b16 %v1666, %v1662
    %v2407 = vpack.c.b16 %v1671, %v1667
    %v2408 = vpack.c.b16 %v1672, %v1668
    %v2409 = vpack.c.b16 %v1673, %v1669
    %v2410 = vpack.c.b16 %v1674, %v1670
    %v2411 = vpack.c.b16 %v1679, %v1675
    %v2412 = vpack.c.b16 %v1680, %v1676
    %v2413 = vpack.c.b16 %v1681, %v1677
    %v2414 = vpack.c.b16 %v1682, %v1678
    %v2415 = vpack.c.b16 %v1687, %v1683
    %v2416 = vpack.c.b16 %v1688, %v1684
    %v2417 = vpack.c.b16 %v1689, %v1685
    %v2418 = vpack.c.b16 %v1690, %v1686
    %v2419 = vpack.c.b16 %v1695, %v1691
    %v2420 = vpack.c.b16 %v1696, %v1692
    %v2421 = vpack.c.b16 %v1697, %v1693
    %v2422 = vpack.c.b16 %v1698, %v1694
    %v2423 = vpack.c.b16 %v1703, %v1699
    %v2424 = vpack.c.b16 %v1704, %v1700
    %v2425 = vpack.c.b16 %v1705, %v1701
    %v2426 = vpack.c.b16 %v1706, %v1702
    %v2427 = vpack.c.b16 %v1711, %v1707
    %v2428 = vpack.c.b16 %v1712, %v1708
    %v2429 = vpack.c.b16 %v1713, %v1709
    %v2430 = vpack.c.b16 %v1714, %v1710
    %v2431 = vpack.c.b16 %v1719, %v1715
    %v2432 = vpack.c.b16 %v1720, %v1716
    %v2433 = vpack.c.b16 %v1721, %v1717
    %v2434 = vpack.c.b16 %v1722, %v1718
    %v2435 = vpack.c.b16 %v1727, %v1723
    %v2436 = vpack.c.b16 %v1728, %v1724
    %v2437 = vpack.c.b16 %v1729, %v1725
    %v2438 = vpack.c.b16 %v1730, %v1726
    %v2439 = vpack.c.b16 %v1735, %v1731
    %v2440 = vpack.c.b16 %v1736, %v1732
    %v2441 = vpack.c.b16 %v1737, %v1733
    %v2442 = vpack.c.b16 %v1738, %v1734
    %v2443 = vpack.c.b16 %v1743, %v1739
    %v2444 = vpack.c.b16 %v1744, %v1740
    %v2445 = vpack.c.b16 %v1745, %v1741
    %v2446 = vpack.c.b16 %v1746, %v1742
    %v2447 = vpack.c.b16 %v1751, %v1747
    %v2448 = vpack.c.b16 %v1752, %v1748
    %v2449 = vpack.c.b16 %v1753, %v1749
    %v2450 = vpack.c.b16 %v1754, %v1750
    %v2451 = vpack.c.b16 %v1759, %v1755
    %v2452 = vpack.c.b16 %v1760, %v1756
    %v2453 = vpack.c.b16 %v1761, %v1757
    %v2454 = vpack.c.b16 %v1762, %v1758
    %v2455 = vpack.c.b16 %v1767, %v1763
    %v2456 = vpack.c.b16 %v1768, %v1764
    %v2457 = vpack.c.b16 %v1769, %v1765
    %v2458 = vpack.c.b16 %v1770, %v1766
    %v2459 = vpack.c.b16 %v1775, %v1771
    %v2460 = vpack.c.b16 %v1776, %v1772
    %v2461 = vpack.c.b16 %v1777, %v1773
    %v2462 = vpack.c.b16 %v1778, %v1774
    %v2463 = vpack.c.b16 %v1783, %v1779
    %v2464 = vpack.c.b16 %v1784, %v1780
    %v2465 = vpack.c.b16 %v1785, %v1781
    %v2466 = vpack.c.b16 %v1786, %v1782
    %v2467 = vpack.c.b16 %v1791, %v1787
    %v2468 = vpack.c.b16 %v1792, %v1788
    %v2469 = vpack.c.b16 %v1793, %v1789
    %v2470 = vpack.c.b16 %v1794, %v1790
    %v2471 = vpack.c.b16 %v1799, %v1795
    %v2472 = vpack.c.b16 %v1800, %v1796
    %v2473 = vpack.c.b16 %v1801, %v1797
    %v2474 = vpack.c.b16 %v1802, %v1798
    %v2475 = vpack.c.b16 %v1807, %v1803
    %v2476 = vpack.c.b16 %v1808, %v1804
    %v2477 = vpack.c.b16 %v1809, %v1805
    %v2478 = vpack.c.b16 %v1810, %v1806
    %v2479 = vpack.c.b16 %v1815, %v1811
    %v2480 = vpack.c.b16 %v1816, %v1812
    %v2481 = vpack.c.b16 %v1817, %v1813
    %v2482 = vpack.c.b16 %v1818, %v1814
    %v2483 = vpack.c.b16 %v1823, %v1819
    %v2484 = vpack.c.b16 %v1824, %v1820
    %v2485 = vpack.c.b16 %v1825, %v1821
    %v2486 = vpack.c.b16 %v1826, %v1822
    %v2487 = vpack.c.b16 %v1831, %v1827
    %v2488 = vpack.c.b16 %v1832, %v1828
    %v2489 = vpack.c.b16 %v1833, %v1829
    %v2490 = vpack.c.b16 %v1834, %v1830
    %v2491 = vpack.c.b16 %v1839, %v1835
    %v2492 = vpack.c.b16 %v1840, %v1836
    %v2493 = vpack.c.b16 %v1841, %v1837
    %v2494 = vpack.c.b16 %v1842, %v1838
    %v2495 = vpack.c.b16 %v1847, %v1843
    %v2496 = vpack.c.b16 %v1848, %v1844
    %v2497 = vpack.c.b16 %v1849, %v1845
    %v2498 = vpack.c.b16 %v1850, %v1846
    %v2499 = vpack.c.b16 %v1855, %v1851
    %v2500 = vpack.c.b16 %v1856, %v1852
    %v2501 = vpack.c.b16 %v1857, %v1853
    %v2502 = vpack.c.b16 %v1858, %v1854
    %v2503 = vpack.c.b16 %v1863, %v1859
    %v2504 = vpack.c.b16 %v1864, %v1860
    %v2505 = vpack.c.b16 %v1865, %v1861
    %v2506 = vpack.c.b16 %v1866, %v1862
    %v2507 = vpack.c.b16 %v1871, %v1867
    %v2508 = vpack.c.b16 %v1872, %v1868
    %v2509 = vpack.c.b16 %v1873, %v1869
    %v2510 = vpack.c.b16 %v1874, %v1870
    %v2511 = vpack.c.b16 %v1879, %v1875
    %v2512 = vpack.c.b16 %v1880, %v1876
    %v2513 = vpack.c.b16 %v1881, %v1877
    %v2514 = vpack.c.b16 %v1882, %v1878
    %v2515 = vpack.c.b16 %v1887, %v1883
    %v2516 = vpack.c.b16 %v1888, %v1884
    %v2517 = vpack.c.b16 %v1889, %v1885
    %v2518 = vpack.c.b16 %v1890, %v1886
    %v2519 = vpack.c.b16 %v1895, %v1891
    %v2520 = vpack.c.b16 %v1896, %v1892
    %v2521 = vpack.c.b16 %v1897, %v1893
    %v2522 = vpack.c.b16 %v1898, %v1894
    %v2523 = vpack.c.b16 %v1903, %v1899
    %v2524 = vpack.c.b16 %v1904, %v1900
    %v2525 = vpack.c.b16 %v1905, %v1901
    %v2526 = vpack.c.b16 %v1906, %v1902
    %v2527 = vpack.c.b16 %v1911, %v1907
    %v2528 = vpack.c.b16 %v1912, %v1908
    %v2529 = vpack.c.b16 %v1913, %v1909
    %v2530 = vpack.c.b16 %v1914, %v1910
    %v2531 = vpack.c.b16 %v1919, %v1915
    %v2532 = vpack.c.b16 %v1920, %v1916
    %v2533 = vpack.c.b16 %v1921, %v1917
    %v2534 = vpack.c.b16 %v1922, %v1918
    %v2535 = vpack.c.b16 %v1927, %v1923
    %v2536 = vpack.c.b16 %v1928, %v1924
    %v2537 = vpack.c.b16 %v1929, %v1925
    %v2538 = vpack.c.b16 %v1930, %v1926
    %v2539 = vpack.c.b16 %v1935, %v1931
    %v2540 = vpack.c.b16 %v1936, %v1932
    %v2541 = vpack.c.b16 %v1937, %v1933
    %v2542 = vpack.c.b16 %v1938, %v1934
    %v2543 = vpack.c.b16 %v1943, %v1939
    %v2544 = vpack.c.b16 %v1944, %v1940
    %v2545 = vpack.c.b16 %v1945, %v1941
    %v2546 = vpack.c.b16 %v1946, %v1942
    %v2547 = vpack.c.b16 %v1951, %v1947
    %v2548 = vpack.c.b16 %v1952, %v1948
    %v2549 = vpack.c.b16 %v1953, %v1949
    %v2550 = vpack.c.b16 %v1954, %v1950
    %v2551 = vpack.c.b16 %v1959, %v1955
    %v2552 = vpack.c.b16 %v1960, %v1956
    %v2553 = vpack.c.b16 %v1961, %v1957
    %v2554 = vpack.c.b16 %v1962, %v1958
    %v2555 = vpack.c.b16 %v1967, %v1963
    %v2556 = vpack.c.b16 %v1968, %v1964
    %v2557 = vpack.c.b16 %v1969, %v1965
    %v2558 = vpack.c.b16 %v1970, %v1966
    %v2559 = vpack.c.b16 %v1975, %v1971
    %v2560 = vpack.c.b16 %v1976, %v1972
    %v2561 = vpack.c.b16 %v1977, %v1973
    %v2562 = vpack.c.b16 %v1978, %v1974
    %v2563 = vpack.c.b16 %v1983, %v1979
    %v2564 = vpack.c.b16 %v1984, %v1980
    %v2565 = vpack.c.b16 %v1985, %v1981
    %v2566 = vpack.c.b16 %v1986, %v1982
    %v2567 = vpack.c.b16 %v1991, %v1987
    %v2568 = vpack.c.b16 %v1992, %v1988
    %v2569 = vpack.c.b16 %v1993, %v1989
    %v2570 = vpack.c.b16 %v1994, %v1990
    %v2571 = vpack.c.b16 %v1999, %v1995
    %v2572 = vpack.c.b16 %v2000, %v1996
    %v2573 = vpack.c.b16 %v2001, %v1997
    %v2574 = vpack.c.b16 %v2002, %v1998
    %v2575 = vpack.c.b16 %v2007, %v2003
    %v2576 = vpack.c.b16 %v2008, %v2004
    %v2577 = vpack.c.b16 %v2009, %v2005
    %v2578 = vpack.c.b16 %v2010, %v2006
    %v2579 = vpack.c.b16 %v2015, %v2011
    %v2580 = vpack.c.b16 %v2016, %v2012
    %v2581 = vpack.c.b16 %v2017, %v2013
    %v2582 = vpack.c.b16 %v2018, %v2014
    %v2583 = vpack.c.b16 %v2023, %v2019
    %v2584 = vpack.c.b16 %v2024, %v2020
    %v2585 = vpack.c.b16 %v2025, %v2021
    %v2586 = vpack.c.b16 %v2026, %v2022
    %v2587 = vpack.c.b16 %v2031, %v2027
    %v2588 = vpack.c.b16 %v2032, %v2028
    %v2589 = vpack.c.b16 %v2033, %v2029
    %v2590 = vpack.c.b16 %v2034, %v2030
    %v2591 = vpack.c.b16 %v2039, %v2035
    %v2592 = vpack.c.b16 %v2040, %v2036
    %v2593 = vpack.c.b16 %v2041, %v2037
    %v2594 = vpack.c.b16 %v2042, %v2038
    %v2595 = vpack.c.b16 %v2047, %v2043
    %v2596 = vpack.c.b16 %v2048, %v2044
    %v2597 = vpack.c.b16 %v2049, %v2045
    %v2598 = vpack.c.b16 %v2050, %v2046
    %v2599 = vpack.c.b16 %v2055, %v2051
    %v2600 = vpack.c.b16 %v2056, %v2052
    %v2601 = vpack.c.b16 %v2057, %v2053
    %v2602 = vpack.c.b16 %v2058, %v2054
    %v2603 = vpack.c.b16 %v2063, %v2059
    %v2604 = vpack.c.b16 %v2064, %v2060
    %v2605 = vpack.c.b16 %v2065, %v2061
    %v2606 = vpack.c.b16 %v2066, %v2062
    %v2607 = vpack.c.b16 %v2071, %v2067
    %v2608 = vpack.c.b16 %v2072, %v2068
    %v2609 = vpack.c.b16 %v2073, %v2069
    %v2610 = vpack.c.b16 %v2074, %v2070
    %v2611 = vpack.c.b16 %v2079, %v2075
    %v2612 = vpack.c.b16 %v2080, %v2076
    %v2613 = vpack.c.b16 %v2081, %v2077
    %v2614 = vpack.c.b16 %v2082, %v2078
    %v2615 = vpack.c.b16 %v2087, %v2083
    %v2616 = vpack.c.b16 %v2088, %v2084
    %v2617 = vpack.c.b16 %v2089, %v2085
    %v2618 = vpack.c.b16 %v2090, %v2086
    %v2619 = vpack.c.b16 %v2095, %v2091
    %v2620 = vpack.c.b16 %v2096, %v2092
    %v2621 = vpack.c.b16 %v2097, %v2093
    %v2622 = vpack.c.b16 %v2098, %v2094
    %v2623 = vpack.c.b16 %v2103, %v2099
    %v2624 = vpack.c.b16 %v2104, %v2100
    %v2625 = vpack.c.b16 %v2105, %v2101
    %v2626 = vpack.c.b16 %v2106, %v2102
    %v2627 = vpack.c.b16 %v2111, %v2107
    %v2628 = vpack.c.b16 %v2112, %v2108
    %v2629 = vpack.c.b16 %v2113, %v2109
    %v2630 = vpack.c.b16 %v2114, %v2110
    %v2631 = vpack.c.b16 %v2119, %v2115
    %v2632 = vpack.c.b16 %v2120, %v2116
    %v2633 = vpack.c.b16 %v2121, %v2117
    %v2634 = vpack.c.b16 %v2122, %v2118
    %3147 = vmatpush.bf16.msra.mxu0 %v2151
    %3148 = vmatpush.bf16.msra.mxu0 %v2147
    %3149 = vmatpush.bf16.msra.mxu0 %v2143
    %3150 = vmatpush.bf16.msra.mxu0 %v2139
    %3151 = vmatpush.bf16.msra.mxu0 %v2135
    %3152 = vmatpush.bf16.msra.mxu0 %v2131
    %3153 = vmatpush.bf16.msra.mxu0 %v2127
    %3154 = vmatpush.bf16.msra.mxu0 %v2123
    %3155 = vmatmul.bf16.gmra.mxu0 %v553
    %v3156 = vpop.f32.mrf.mxu0
    %v3157 = vadd.f32 %v543, %v3156
    %v3158 = vpop.f32.mrf.mxu0
    %3159 = vdwg.mxu0
    %3160 = vmatpush.bf16.msra.mxu0 %v2183
    %3161 = vmatpush.bf16.msra.mxu0 %v2179
    %3162 = vmatpush.bf16.msra.mxu0 %v2175
    %3163 = vmatpush.bf16.msra.mxu0 %v2171
    %3164 = vmatpush.bf16.msra.mxu0 %v2167
    %3165 = vmatpush.bf16.msra.mxu0 %v2163
    %3166 = vmatpush.bf16.msra.mxu0 %v2159
    %3167 = vmatpush.bf16.msra.mxu0 %v2155
    %3168 = vmatmul.bf16.gmra.mxu0 %v554
    %v3169 = vpop.f32.mrf.mxu0
    %v3170 = vadd.f32 %v3157, %v3169
    %v3171 = vpop.f32.mrf.mxu0
    %3172 = vdwg.mxu0
    %3173 = vmatpush.bf16.msra.mxu0 %v2215
    %3174 = vmatpush.bf16.msra.mxu0 %v2211
    %3175 = vmatpush.bf16.msra.mxu0 %v2207
    %3176 = vmatpush.bf16.msra.mxu0 %v2203
    %3177 = vmatpush.bf16.msra.mxu0 %v2199
    %3178 = vmatpush.bf16.msra.mxu0 %v2195
    %3179 = vmatpush.bf16.msra.mxu0 %v2191
    %3180 = vmatpush.bf16.msra.mxu0 %v2187
    %3181 = vmatmul.bf16.gmra.mxu0 %v555
    %v3182 = vpop.f32.mrf.mxu0
    %v3183 = vadd.f32 %v3170, %v3182
    %v3184 = vpop.f32.mrf.mxu0
    %3185 = vdwg.mxu0
    %3186 = vmatpush.bf16.msra.mxu0 %v2247
    %3187 = vmatpush.bf16.msra.mxu0 %v2243
    %3188 = vmatpush.bf16.msra.mxu0 %v2239
    %3189 = vmatpush.bf16.msra.mxu0 %v2235
    %3190 = vmatpush.bf16.msra.mxu0 %v2231
    %3191 = vmatpush.bf16.msra.mxu0 %v2227
    %3192 = vmatpush.bf16.msra.mxu0 %v2223
    %3193 = vmatpush.bf16.msra.mxu0 %v2219
    %3194 = vmatmul.bf16.gmra.mxu0 %v556
    %v3195 = vpop.f32.mrf.mxu0
    %v3196 = vadd.f32 %v3183, %v3195
    %v3197 = vpop.f32.mrf.mxu0
    %3198 = vdwg.mxu0
    %3199 = vmatpush.bf16.msra.mxu0 %v2279
    %3200 = vmatpush.bf16.msra.mxu0 %v2275
    %3201 = vmatpush.bf16.msra.mxu0 %v2271
    %3202 = vmatpush.bf16.msra.mxu0 %v2267
    %3203 = vmatpush.bf16.msra.mxu0 %v2263
    %3204 = vmatpush.bf16.msra.mxu0 %v2259
    %3205 = vmatpush.bf16.msra.mxu0 %v2255
    %3206 = vmatpush.bf16.msra.mxu0 %v2251
    %3207 = vmatmul.bf16.gmra.mxu0 %v557
    %v3208 = vpop.f32.mrf.mxu0
    %v3209 = vadd.f32 %v3196, %v3208
    %v3210 = vpop.f32.mrf.mxu0
    %3211 = vdwg.mxu0
    %3212 = vmatpush.bf16.msra.mxu0 %v2311
    %3213 = vmatpush.bf16.msra.mxu0 %v2307
    %3214 = vmatpush.bf16.msra.mxu0 %v2303
    %3215 = vmatpush.bf16.msra.mxu0 %v2299
    %3216 = vmatpush.bf16.msra.mxu0 %v2295
    %3217 = vmatpush.bf16.msra.mxu0 %v2291
    %3218 = vmatpush.bf16.msra.mxu0 %v2287
    %3219 = vmatpush.bf16.msra.mxu0 %v2283
    %3220 = vmatmul.bf16.gmra.mxu0 %v558
    %v3221 = vpop.f32.mrf.mxu0
    %v3222 = vadd.f32 %v3209, %v3221
    %v3223 = vpop.f32.mrf.mxu0
    %3224 = vdwg.mxu0
    %3225 = vmatpush.bf16.msra.mxu0 %v2343
    %3226 = vmatpush.bf16.msra.mxu0 %v2339
    %3227 = vmatpush.bf16.msra.mxu0 %v2335
    %3228 = vmatpush.bf16.msra.mxu0 %v2331
    %3229 = vmatpush.bf16.msra.mxu0 %v2327
    %3230 = vmatpush.bf16.msra.mxu0 %v2323
    %3231 = vmatpush.bf16.msra.mxu0 %v2319
    %3232 = vmatpush.bf16.msra.mxu0 %v2315
    %3233 = vmatmul.bf16.gmra.mxu0 %v559
    %v3234 = vpop.f32.mrf.mxu0
    %v3235 = vadd.f32 %v3222, %v3234
    %v3236 = vpop.f32.mrf.mxu0
    %3237 = vdwg.mxu0
    %3238 = vmatpush.bf16.msra.mxu0 %v2375
    %3239 = vmatpush.bf16.msra.mxu0 %v2371
    %3240 = vmatpush.bf16.msra.mxu0 %v2367
    %3241 = vmatpush.bf16.msra.mxu0 %v2363
    %3242 = vmatpush.bf16.msra.mxu0 %v2359
    %3243 = vmatpush.bf16.msra.mxu0 %v2355
    %3244 = vmatpush.bf16.msra.mxu0 %v2351
    %3245 = vmatpush.bf16.msra.mxu0 %v2347
    %3246 = vmatmul.bf16.gmra.mxu0 %v560
    %v3247 = vpop.f32.mrf.mxu0
    %v3248 = vadd.f32 %v3235, %v3247
    %v3249 = vpop.f32.mrf.mxu0
    %3250 = vdwg.mxu0
    %3251 = vmatpush.bf16.msra.mxu0 %v2407
    %3252 = vmatpush.bf16.msra.mxu0 %v2403
    %3253 = vmatpush.bf16.msra.mxu0 %v2399
    %3254 = vmatpush.bf16.msra.mxu0 %v2395
    %3255 = vmatpush.bf16.msra.mxu0 %v2391
    %3256 = vmatpush.bf16.msra.mxu0 %v2387
    %3257 = vmatpush.bf16.msra.mxu0 %v2383
    %3258 = vmatpush.bf16.msra.mxu0 %v2379
    %3259 = vmatmul.bf16.gmra.mxu0 %v563
    %v3260 = vpop.f32.mrf.mxu0
    %v3261 = vadd.f32 %v3248, %v3260
    %v3262 = vpop.f32.mrf.mxu0
    %3263 = vdwg.mxu0
    %3264 = vmatpush.bf16.msra.mxu0 %v2439
    %3265 = vmatpush.bf16.msra.mxu0 %v2435
    %3266 = vmatpush.bf16.msra.mxu0 %v2431
    %3267 = vmatpush.bf16.msra.mxu0 %v2427
    %3268 = vmatpush.bf16.msra.mxu0 %v2423
    %3269 = vmatpush.bf16.msra.mxu0 %v2419
    %3270 = vmatpush.bf16.msra.mxu0 %v2415
    %3271 = vmatpush.bf16.msra.mxu0 %v2411
    %3272 = vmatmul.bf16.gmra.mxu0 %v564
    %v3273 = vpop.f32.mrf.mxu0
    %v3274 = vadd.f32 %v3261, %v3273
    %v3275 = vpop.f32.mrf.mxu0
    %3276 = vdwg.mxu0
    %3277 = vmatpush.bf16.msra.mxu0 %v2471
    %3278 = vmatpush.bf16.msra.mxu0 %v2467
    %3279 = vmatpush.bf16.msra.mxu0 %v2463
    %3280 = vmatpush.bf16.msra.mxu0 %v2459
    %3281 = vmatpush.bf16.msra.mxu0 %v2455
    %3282 = vmatpush.bf16.msra.mxu0 %v2451
    %3283 = vmatpush.bf16.msra.mxu0 %v2447
    %3284 = vmatpush.bf16.msra.mxu0 %v2443
    %3285 = vmatmul.bf16.gmra.mxu0 %v565
    %v3286 = vpop.f32.mrf.mxu0
    %v3287 = vadd.f32 %v3274, %v3286
    %v3288 = vpop.f32.mrf.mxu0
    %3289 = vdwg.mxu0
    %3290 = vmatpush.bf16.msra.mxu0 %v2503
    %3291 = vmatpush.bf16.msra.mxu0 %v2499
    %3292 = vmatpush.bf16.msra.mxu0 %v2495
    %3293 = vmatpush.bf16.msra.mxu0 %v2491
    %3294 = vmatpush.bf16.msra.mxu0 %v2487
    %3295 = vmatpush.bf16.msra.mxu0 %v2483
    %3296 = vmatpush.bf16.msra.mxu0 %v2479
    %3297 = vmatpush.bf16.msra.mxu0 %v2475
    %3298 = vmatmul.bf16.gmra.mxu0 %v566
    %v3299 = vpop.f32.mrf.mxu0
    %v3300 = vadd.f32 %v3287, %v3299
    %v3301 = vpop.f32.mrf.mxu0
    %3302 = vdwg.mxu0
    %3303 = vmatpush.bf16.msra.mxu0 %v2535
    %3304 = vmatpush.bf16.msra.mxu0 %v2531
    %3305 = vmatpush.bf16.msra.mxu0 %v2527
    %3306 = vmatpush.bf16.msra.mxu0 %v2523
    %3307 = vmatpush.bf16.msra.mxu0 %v2519
    %3308 = vmatpush.bf16.msra.mxu0 %v2515
    %3309 = vmatpush.bf16.msra.mxu0 %v2511
    %3310 = vmatpush.bf16.msra.mxu0 %v2507
    %3311 = vmatmul.bf16.gmra.mxu0 %v567
    %v3312 = vpop.f32.mrf.mxu0
    %v3313 = vadd.f32 %v3300, %v3312
    %v3314 = vpop.f32.mrf.mxu0
    %3315 = vdwg.mxu0
    %3316 = vmatpush.bf16.msra.mxu0 %v2567
    %3317 = vmatpush.bf16.msra.mxu0 %v2563
    %3318 = vmatpush.bf16.msra.mxu0 %v2559
    %3319 = vmatpush.bf16.msra.mxu0 %v2555
    %3320 = vmatpush.bf16.msra.mxu0 %v2551
    %3321 = vmatpush.bf16.msra.mxu0 %v2547
    %3322 = vmatpush.bf16.msra.mxu0 %v2543
    %3323 = vmatpush.bf16.msra.mxu0 %v2539
    %3324 = vmatmul.bf16.gmra.mxu0 %v568
    %v3325 = vpop.f32.mrf.mxu0
    %v3326 = vadd.f32 %v3313, %v3325
    %v3327 = vpop.f32.mrf.mxu0
    %3328 = vdwg.mxu0
    %3329 = vmatpush.bf16.msra.mxu0 %v2599
    %3330 = vmatpush.bf16.msra.mxu0 %v2595
    %3331 = vmatpush.bf16.msra.mxu0 %v2591
    %3332 = vmatpush.bf16.msra.mxu0 %v2587
    %3333 = vmatpush.bf16.msra.mxu0 %v2583
    %3334 = vmatpush.bf16.msra.mxu0 %v2579
    %3335 = vmatpush.bf16.msra.mxu0 %v2575
    %3336 = vmatpush.bf16.msra.mxu0 %v2571
    %3337 = vmatmul.bf16.gmra.mxu0 %v569
    %v3338 = vpop.f32.mrf.mxu0
    %v3339 = vadd.f32 %v3326, %v3338
    %v3340 = vpop.f32.mrf.mxu0
    %3341 = vdwg.mxu0
    %3342 = vmatpush.bf16.msra.mxu0 %v2631
    %3343 = vmatpush.bf16.msra.mxu0 %v2627
    %3344 = vmatpush.bf16.msra.mxu0 %v2623
    %3345 = vmatpush.bf16.msra.mxu0 %v2619
    %3346 = vmatpush.bf16.msra.mxu0 %v2615
    %3347 = vmatpush.bf16.msra.mxu0 %v2611
    %3348 = vmatpush.bf16.msra.mxu0 %v2607
    %3349 = vmatpush.bf16.msra.mxu0 %v2603
    %3350 = vmatmul.bf16.gmra.mxu0 %v570
    %v3351 = vpop.f32.mrf.mxu0
    %v3352 = vadd.f32 %v3339, %v3351
    %v3353 = vpop.f32.mrf.mxu0
    %3354 = vdwg.mxu0
    %3355 = vmatpush.bf16.msra.mxu0 %v2152
    %3356 = vmatpush.bf16.msra.mxu0 %v2148
    %3357 = vmatpush.bf16.msra.mxu0 %v2144
    %3358 = vmatpush.bf16.msra.mxu0 %v2140
    %3359 = vmatpush.bf16.msra.mxu0 %v2136
    %3360 = vmatpush.bf16.msra.mxu0 %v2132
    %3361 = vmatpush.bf16.msra.mxu0 %v2128
    %3362 = vmatpush.bf16.msra.mxu0 %v2124
    %3363 = vmatmul.bf16.gmra.mxu0 %v553
    %v3364 = vpop.f32.mrf.mxu0
    %v3365 = vadd.f32 %v544, %v3364
    %v3366 = vpop.f32.mrf.mxu0
    %3367 = vdwg.mxu0
    %3368 = vmatpush.bf16.msra.mxu0 %v2184
    %3369 = vmatpush.bf16.msra.mxu0 %v2180
    %3370 = vmatpush.bf16.msra.mxu0 %v2176
    %3371 = vmatpush.bf16.msra.mxu0 %v2172
    %3372 = vmatpush.bf16.msra.mxu0 %v2168
    %3373 = vmatpush.bf16.msra.mxu0 %v2164
    %3374 = vmatpush.bf16.msra.mxu0 %v2160
    %3375 = vmatpush.bf16.msra.mxu0 %v2156
    %3376 = vmatmul.bf16.gmra.mxu0 %v554
    %v3377 = vpop.f32.mrf.mxu0
    %v3378 = vadd.f32 %v3365, %v3377
    %v3379 = vpop.f32.mrf.mxu0
    %3380 = vdwg.mxu0
    %3381 = vmatpush.bf16.msra.mxu0 %v2216
    %3382 = vmatpush.bf16.msra.mxu0 %v2212
    %3383 = vmatpush.bf16.msra.mxu0 %v2208
    %3384 = vmatpush.bf16.msra.mxu0 %v2204
    %3385 = vmatpush.bf16.msra.mxu0 %v2200
    %3386 = vmatpush.bf16.msra.mxu0 %v2196
    %3387 = vmatpush.bf16.msra.mxu0 %v2192
    %3388 = vmatpush.bf16.msra.mxu0 %v2188
    %3389 = vmatmul.bf16.gmra.mxu0 %v555
    %v3390 = vpop.f32.mrf.mxu0
    %v3391 = vadd.f32 %v3378, %v3390
    %v3392 = vpop.f32.mrf.mxu0
    %3393 = vdwg.mxu0
    %3394 = vmatpush.bf16.msra.mxu0 %v2248
    %3395 = vmatpush.bf16.msra.mxu0 %v2244
    %3396 = vmatpush.bf16.msra.mxu0 %v2240
    %3397 = vmatpush.bf16.msra.mxu0 %v2236
    %3398 = vmatpush.bf16.msra.mxu0 %v2232
    %3399 = vmatpush.bf16.msra.mxu0 %v2228
    %3400 = vmatpush.bf16.msra.mxu0 %v2224
    %3401 = vmatpush.bf16.msra.mxu0 %v2220
    %3402 = vmatmul.bf16.gmra.mxu0 %v556
    %v3403 = vpop.f32.mrf.mxu0
    %v3404 = vadd.f32 %v3391, %v3403
    %v3405 = vpop.f32.mrf.mxu0
    %3406 = vdwg.mxu0
    %3407 = vmatpush.bf16.msra.mxu0 %v2280
    %3408 = vmatpush.bf16.msra.mxu0 %v2276
    %3409 = vmatpush.bf16.msra.mxu0 %v2272
    %3410 = vmatpush.bf16.msra.mxu0 %v2268
    %3411 = vmatpush.bf16.msra.mxu0 %v2264
    %3412 = vmatpush.bf16.msra.mxu0 %v2260
    %3413 = vmatpush.bf16.msra.mxu0 %v2256
    %3414 = vmatpush.bf16.msra.mxu0 %v2252
    %3415 = vmatmul.bf16.gmra.mxu0 %v557
    %v3416 = vpop.f32.mrf.mxu0
    %v3417 = vadd.f32 %v3404, %v3416
    %v3418 = vpop.f32.mrf.mxu0
    %3419 = vdwg.mxu0
    %3420 = vmatpush.bf16.msra.mxu0 %v2312
    %3421 = vmatpush.bf16.msra.mxu0 %v2308
    %3422 = vmatpush.bf16.msra.mxu0 %v2304
    %3423 = vmatpush.bf16.msra.mxu0 %v2300
    %3424 = vmatpush.bf16.msra.mxu0 %v2296
    %3425 = vmatpush.bf16.msra.mxu0 %v2292
    %3426 = vmatpush.bf16.msra.mxu0 %v2288
    %3427 = vmatpush.bf16.msra.mxu0 %v2284
    %3428 = vmatmul.bf16.gmra.mxu0 %v558
    %v3429 = vpop.f32.mrf.mxu0
    %v3430 = vadd.f32 %v3417, %v3429
    %v3431 = vpop.f32.mrf.mxu0
    %3432 = vdwg.mxu0
    %3433 = vmatpush.bf16.msra.mxu0 %v2344
    %3434 = vmatpush.bf16.msra.mxu0 %v2340
    %3435 = vmatpush.bf16.msra.mxu0 %v2336
    %3436 = vmatpush.bf16.msra.mxu0 %v2332
    %3437 = vmatpush.bf16.msra.mxu0 %v2328
    %3438 = vmatpush.bf16.msra.mxu0 %v2324
    %3439 = vmatpush.bf16.msra.mxu0 %v2320
    %3440 = vmatpush.bf16.msra.mxu0 %v2316
    %3441 = vmatmul.bf16.gmra.mxu0 %v559
    %v3442 = vpop.f32.mrf.mxu0
    %v3443 = vadd.f32 %v3430, %v3442
    %v3444 = vpop.f32.mrf.mxu0
    %3445 = vdwg.mxu0
    %3446 = vmatpush.bf16.msra.mxu0 %v2376
    %3447 = vmatpush.bf16.msra.mxu0 %v2372
    %3448 = vmatpush.bf16.msra.mxu0 %v2368
    %3449 = vmatpush.bf16.msra.mxu0 %v2364
    %3450 = vmatpush.bf16.msra.mxu0 %v2360
    %3451 = vmatpush.bf16.msra.mxu0 %v2356
    %3452 = vmatpush.bf16.msra.mxu0 %v2352
    %3453 = vmatpush.bf16.msra.mxu0 %v2348
    %3454 = vmatmul.bf16.gmra.mxu0 %v560
    %v3455 = vpop.f32.mrf.mxu0
    %v3456 = vadd.f32 %v3443, %v3455
    %v3457 = vpop.f32.mrf.mxu0
    %3458 = vdwg.mxu0
    %3459 = vmatpush.bf16.msra.mxu0 %v2408
    %3460 = vmatpush.bf16.msra.mxu0 %v2404
    %3461 = vmatpush.bf16.msra.mxu0 %v2400
    %3462 = vmatpush.bf16.msra.mxu0 %v2396
    %3463 = vmatpush.bf16.msra.mxu0 %v2392
    %3464 = vmatpush.bf16.msra.mxu0 %v2388
    %3465 = vmatpush.bf16.msra.mxu0 %v2384
    %3466 = vmatpush.bf16.msra.mxu0 %v2380
    %3467 = vmatmul.bf16.gmra.mxu0 %v563
    %v3468 = vpop.f32.mrf.mxu0
    %v3469 = vadd.f32 %v3456, %v3468
    %v3470 = vpop.f32.mrf.mxu0
    %3471 = vdwg.mxu0
    %3472 = vmatpush.bf16.msra.mxu0 %v2440
    %3473 = vmatpush.bf16.msra.mxu0 %v2436
    %3474 = vmatpush.bf16.msra.mxu0 %v2432
    %3475 = vmatpush.bf16.msra.mxu0 %v2428
    %3476 = vmatpush.bf16.msra.mxu0 %v2424
    %3477 = vmatpush.bf16.msra.mxu0 %v2420
    %3478 = vmatpush.bf16.msra.mxu0 %v2416
    %3479 = vmatpush.bf16.msra.mxu0 %v2412
    %3480 = vmatmul.bf16.gmra.mxu0 %v564
    %v3481 = vpop.f32.mrf.mxu0
    %v3482 = vadd.f32 %v3469, %v3481
    %v3483 = vpop.f32.mrf.mxu0
    %3484 = vdwg.mxu0
    %3485 = vmatpush.bf16.msra.mxu0 %v2472
    %3486 = vmatpush.bf16.msra.mxu0 %v2468
    %3487 = vmatpush.bf16.msra.mxu0 %v2464
    %3488 = vmatpush.bf16.msra.mxu0 %v2460
    %3489 = vmatpush.bf16.msra.mxu0 %v2456
    %3490 = vmatpush.bf16.msra.mxu0 %v2452
    %3491 = vmatpush.bf16.msra.mxu0 %v2448
    %3492 = vmatpush.bf16.msra.mxu0 %v2444
    %3493 = vmatmul.bf16.gmra.mxu0 %v565
    %v3494 = vpop.f32.mrf.mxu0
    %v3495 = vadd.f32 %v3482, %v3494
    %v3496 = vpop.f32.mrf.mxu0
    %3497 = vdwg.mxu0
    %3498 = vmatpush.bf16.msra.mxu0 %v2504
    %3499 = vmatpush.bf16.msra.mxu0 %v2500
    %3500 = vmatpush.bf16.msra.mxu0 %v2496
    %3501 = vmatpush.bf16.msra.mxu0 %v2492
    %3502 = vmatpush.bf16.msra.mxu0 %v2488
    %3503 = vmatpush.bf16.msra.mxu0 %v2484
    %3504 = vmatpush.bf16.msra.mxu0 %v2480
    %3505 = vmatpush.bf16.msra.mxu0 %v2476
    %3506 = vmatmul.bf16.gmra.mxu0 %v566
    %v3507 = vpop.f32.mrf.mxu0
    %v3508 = vadd.f32 %v3495, %v3507
    %v3509 = vpop.f32.mrf.mxu0
    %3510 = vdwg.mxu0
    %3511 = vmatpush.bf16.msra.mxu0 %v2536
    %3512 = vmatpush.bf16.msra.mxu0 %v2532
    %3513 = vmatpush.bf16.msra.mxu0 %v2528
    %3514 = vmatpush.bf16.msra.mxu0 %v2524
    %3515 = vmatpush.bf16.msra.mxu0 %v2520
    %3516 = vmatpush.bf16.msra.mxu0 %v2516
    %3517 = vmatpush.bf16.msra.mxu0 %v2512
    %3518 = vmatpush.bf16.msra.mxu0 %v2508
    %3519 = vmatmul.bf16.gmra.mxu0 %v567
    %v3520 = vpop.f32.mrf.mxu0
    %v3521 = vadd.f32 %v3508, %v3520
    %v3522 = vpop.f32.mrf.mxu0
    %3523 = vdwg.mxu0
    %3524 = vmatpush.bf16.msra.mxu0 %v2568
    %3525 = vmatpush.bf16.msra.mxu0 %v2564
    %3526 = vmatpush.bf16.msra.mxu0 %v2560
    %3527 = vmatpush.bf16.msra.mxu0 %v2556
    %3528 = vmatpush.bf16.msra.mxu0 %v2552
    %3529 = vmatpush.bf16.msra.mxu0 %v2548
    %3530 = vmatpush.bf16.msra.mxu0 %v2544
    %3531 = vmatpush.bf16.msra.mxu0 %v2540
    %3532 = vmatmul.bf16.gmra.mxu0 %v568
    %v3533 = vpop.f32.mrf.mxu0
    %v3534 = vadd.f32 %v3521, %v3533
    %v3535 = vpop.f32.mrf.mxu0
    %3536 = vdwg.mxu0
    %3537 = vmatpush.bf16.msra.mxu0 %v2600
    %3538 = vmatpush.bf16.msra.mxu0 %v2596
    %3539 = vmatpush.bf16.msra.mxu0 %v2592
    %3540 = vmatpush.bf16.msra.mxu0 %v2588
    %3541 = vmatpush.bf16.msra.mxu0 %v2584
    %3542 = vmatpush.bf16.msra.mxu0 %v2580
    %3543 = vmatpush.bf16.msra.mxu0 %v2576
    %3544 = vmatpush.bf16.msra.mxu0 %v2572
    %3545 = vmatmul.bf16.gmra.mxu0 %v569
    %v3546 = vpop.f32.mrf.mxu0
    %v3547 = vadd.f32 %v3534, %v3546
    %v3548 = vpop.f32.mrf.mxu0
    %3549 = vdwg.mxu0
    %3550 = vmatpush.bf16.msra.mxu0 %v2632
    %3551 = vmatpush.bf16.msra.mxu0 %v2628
    %3552 = vmatpush.bf16.msra.mxu0 %v2624
    %3553 = vmatpush.bf16.msra.mxu0 %v2620
    %3554 = vmatpush.bf16.msra.mxu0 %v2616
    %3555 = vmatpush.bf16.msra.mxu0 %v2612
    %3556 = vmatpush.bf16.msra.mxu0 %v2608
    %3557 = vmatpush.bf16.msra.mxu0 %v2604
    %3558 = vmatmul.bf16.gmra.mxu0 %v570
    %v3559 = vpop.f32.mrf.mxu0
    %v3560 = vadd.f32 %v3547, %v3559
    %v3561 = vpop.f32.mrf.mxu0
    %3562 = vdwg.mxu0
    %3563 = vmatpush.bf16.msra.mxu0 %v2153
    %3564 = vmatpush.bf16.msra.mxu0 %v2149
    %3565 = vmatpush.bf16.msra.mxu0 %v2145
    %3566 = vmatpush.bf16.msra.mxu0 %v2141
    %3567 = vmatpush.bf16.msra.mxu0 %v2137
    %3568 = vmatpush.bf16.msra.mxu0 %v2133
    %3569 = vmatpush.bf16.msra.mxu0 %v2129
    %3570 = vmatpush.bf16.msra.mxu0 %v2125
    %3571 = vmatmul.bf16.gmra.mxu0 %v553
    %v3572 = vpop.f32.mrf.mxu0
    %v3573 = vadd.f32 %v545, %v3572
    %v3574 = vpop.f32.mrf.mxu0
    %3575 = vdwg.mxu0
    %3576 = vmatpush.bf16.msra.mxu0 %v2185
    %3577 = vmatpush.bf16.msra.mxu0 %v2181
    %3578 = vmatpush.bf16.msra.mxu0 %v2177
    %3579 = vmatpush.bf16.msra.mxu0 %v2173
    %3580 = vmatpush.bf16.msra.mxu0 %v2169
    %3581 = vmatpush.bf16.msra.mxu0 %v2165
    %3582 = vmatpush.bf16.msra.mxu0 %v2161
    %3583 = vmatpush.bf16.msra.mxu0 %v2157
    %3584 = vmatmul.bf16.gmra.mxu0 %v554
    %v3585 = vpop.f32.mrf.mxu0
    %v3586 = vadd.f32 %v3573, %v3585
    %v3587 = vpop.f32.mrf.mxu0
    %3588 = vdwg.mxu0
    %3589 = vmatpush.bf16.msra.mxu0 %v2217
    %3590 = vmatpush.bf16.msra.mxu0 %v2213
    %3591 = vmatpush.bf16.msra.mxu0 %v2209
    %3592 = vmatpush.bf16.msra.mxu0 %v2205
    %3593 = vmatpush.bf16.msra.mxu0 %v2201
    %3594 = vmatpush.bf16.msra.mxu0 %v2197
    %3595 = vmatpush.bf16.msra.mxu0 %v2193
    %3596 = vmatpush.bf16.msra.mxu0 %v2189
    %3597 = vmatmul.bf16.gmra.mxu0 %v555
    %v3598 = vpop.f32.mrf.mxu0
    %v3599 = vadd.f32 %v3586, %v3598
    %v3600 = vpop.f32.mrf.mxu0
    %3601 = vdwg.mxu0
    %3602 = vmatpush.bf16.msra.mxu0 %v2249
    %3603 = vmatpush.bf16.msra.mxu0 %v2245
    %3604 = vmatpush.bf16.msra.mxu0 %v2241
    %3605 = vmatpush.bf16.msra.mxu0 %v2237
    %3606 = vmatpush.bf16.msra.mxu0 %v2233
    %3607 = vmatpush.bf16.msra.mxu0 %v2229
    %3608 = vmatpush.bf16.msra.mxu0 %v2225
    %3609 = vmatpush.bf16.msra.mxu0 %v2221
    %3610 = vmatmul.bf16.gmra.mxu0 %v556
    %v3611 = vpop.f32.mrf.mxu0
    %v3612 = vadd.f32 %v3599, %v3611
    %v3613 = vpop.f32.mrf.mxu0
    %3614 = vdwg.mxu0
    %3615 = vmatpush.bf16.msra.mxu0 %v2281
    %3616 = vmatpush.bf16.msra.mxu0 %v2277
    %3617 = vmatpush.bf16.msra.mxu0 %v2273
    %3618 = vmatpush.bf16.msra.mxu0 %v2269
    %3619 = vmatpush.bf16.msra.mxu0 %v2265
    %3620 = vmatpush.bf16.msra.mxu0 %v2261
    %3621 = vmatpush.bf16.msra.mxu0 %v2257
    %3622 = vmatpush.bf16.msra.mxu0 %v2253
    %3623 = vmatmul.bf16.gmra.mxu0 %v557
    %v3624 = vpop.f32.mrf.mxu0
    %v3625 = vadd.f32 %v3612, %v3624
    %v3626 = vpop.f32.mrf.mxu0
    %3627 = vdwg.mxu0
    %3628 = vmatpush.bf16.msra.mxu0 %v2313
    %3629 = vmatpush.bf16.msra.mxu0 %v2309
    %3630 = vmatpush.bf16.msra.mxu0 %v2305
    %3631 = vmatpush.bf16.msra.mxu0 %v2301
    %3632 = vmatpush.bf16.msra.mxu0 %v2297
    %3633 = vmatpush.bf16.msra.mxu0 %v2293
    %3634 = vmatpush.bf16.msra.mxu0 %v2289
    %3635 = vmatpush.bf16.msra.mxu0 %v2285
    %3636 = vmatmul.bf16.gmra.mxu0 %v558
    %v3637 = vpop.f32.mrf.mxu0
    %v3638 = vadd.f32 %v3625, %v3637
    %v3639 = vpop.f32.mrf.mxu0
    %3640 = vdwg.mxu0
    %3641 = vmatpush.bf16.msra.mxu0 %v2345
    %3642 = vmatpush.bf16.msra.mxu0 %v2341
    %3643 = vmatpush.bf16.msra.mxu0 %v2337
    %3644 = vmatpush.bf16.msra.mxu0 %v2333
    %3645 = vmatpush.bf16.msra.mxu0 %v2329
    %3646 = vmatpush.bf16.msra.mxu0 %v2325
    %3647 = vmatpush.bf16.msra.mxu0 %v2321
    %3648 = vmatpush.bf16.msra.mxu0 %v2317
    %3649 = vmatmul.bf16.gmra.mxu0 %v559
    %v3650 = vpop.f32.mrf.mxu0
    %v3651 = vadd.f32 %v3638, %v3650
    %v3652 = vpop.f32.mrf.mxu0
    %3653 = vdwg.mxu0
    %3654 = vmatpush.bf16.msra.mxu0 %v2377
    %3655 = vmatpush.bf16.msra.mxu0 %v2373
    %3656 = vmatpush.bf16.msra.mxu0 %v2369
    %3657 = vmatpush.bf16.msra.mxu0 %v2365
    %3658 = vmatpush.bf16.msra.mxu0 %v2361
    %3659 = vmatpush.bf16.msra.mxu0 %v2357
    %3660 = vmatpush.bf16.msra.mxu0 %v2353
    %3661 = vmatpush.bf16.msra.mxu0 %v2349
    %3662 = vmatmul.bf16.gmra.mxu0 %v560
    %v3663 = vpop.f32.mrf.mxu0
    %v3664 = vadd.f32 %v3651, %v3663
    %v3665 = vpop.f32.mrf.mxu0
    %3666 = vdwg.mxu0
    %3667 = vmatpush.bf16.msra.mxu0 %v2409
    %3668 = vmatpush.bf16.msra.mxu0 %v2405
    %3669 = vmatpush.bf16.msra.mxu0 %v2401
    %3670 = vmatpush.bf16.msra.mxu0 %v2397
    %3671 = vmatpush.bf16.msra.mxu0 %v2393
    %3672 = vmatpush.bf16.msra.mxu0 %v2389
    %3673 = vmatpush.bf16.msra.mxu0 %v2385
    %3674 = vmatpush.bf16.msra.mxu0 %v2381
    %3675 = vmatmul.bf16.gmra.mxu0 %v563
    %v3676 = vpop.f32.mrf.mxu0
    %v3677 = vadd.f32 %v3664, %v3676
    %v3678 = vpop.f32.mrf.mxu0
    %3679 = vdwg.mxu0
    %3680 = vmatpush.bf16.msra.mxu0 %v2441
    %3681 = vmatpush.bf16.msra.mxu0 %v2437
    %3682 = vmatpush.bf16.msra.mxu0 %v2433
    %3683 = vmatpush.bf16.msra.mxu0 %v2429
    %3684 = vmatpush.bf16.msra.mxu0 %v2425
    %3685 = vmatpush.bf16.msra.mxu0 %v2421
    %3686 = vmatpush.bf16.msra.mxu0 %v2417
    %3687 = vmatpush.bf16.msra.mxu0 %v2413
    %3688 = vmatmul.bf16.gmra.mxu0 %v564
    %v3689 = vpop.f32.mrf.mxu0
    %v3690 = vadd.f32 %v3677, %v3689
    %v3691 = vpop.f32.mrf.mxu0
    %3692 = vdwg.mxu0
    %3693 = vmatpush.bf16.msra.mxu0 %v2473
    %3694 = vmatpush.bf16.msra.mxu0 %v2469
    %3695 = vmatpush.bf16.msra.mxu0 %v2465
    %3696 = vmatpush.bf16.msra.mxu0 %v2461
    %3697 = vmatpush.bf16.msra.mxu0 %v2457
    %3698 = vmatpush.bf16.msra.mxu0 %v2453
    %3699 = vmatpush.bf16.msra.mxu0 %v2449
    %3700 = vmatpush.bf16.msra.mxu0 %v2445
    %3701 = vmatmul.bf16.gmra.mxu0 %v565
    %v3702 = vpop.f32.mrf.mxu0
    %v3703 = vadd.f32 %v3690, %v3702
    %v3704 = vpop.f32.mrf.mxu0
    %3705 = vdwg.mxu0
    %3706 = vmatpush.bf16.msra.mxu0 %v2505
    %3707 = vmatpush.bf16.msra.mxu0 %v2501
    %3708 = vmatpush.bf16.msra.mxu0 %v2497
    %3709 = vmatpush.bf16.msra.mxu0 %v2493
    %3710 = vmatpush.bf16.msra.mxu0 %v2489
    %3711 = vmatpush.bf16.msra.mxu0 %v2485
    %3712 = vmatpush.bf16.msra.mxu0 %v2481
    %3713 = vmatpush.bf16.msra.mxu0 %v2477
    %3714 = vmatmul.bf16.gmra.mxu0 %v566
    %v3715 = vpop.f32.mrf.mxu0
    %v3716 = vadd.f32 %v3703, %v3715
    %v3717 = vpop.f32.mrf.mxu0
    %3718 = vdwg.mxu0
    %3719 = vmatpush.bf16.msra.mxu0 %v2537
    %3720 = vmatpush.bf16.msra.mxu0 %v2533
    %3721 = vmatpush.bf16.msra.mxu0 %v2529
    %3722 = vmatpush.bf16.msra.mxu0 %v2525
    %3723 = vmatpush.bf16.msra.mxu0 %v2521
    %3724 = vmatpush.bf16.msra.mxu0 %v2517
    %3725 = vmatpush.bf16.msra.mxu0 %v2513
    %3726 = vmatpush.bf16.msra.mxu0 %v2509
    %3727 = vmatmul.bf16.gmra.mxu0 %v567
    %v3728 = vpop.f32.mrf.mxu0
    %v3729 = vadd.f32 %v3716, %v3728
    %v3730 = vpop.f32.mrf.mxu0
    %3731 = vdwg.mxu0
    %3732 = vmatpush.bf16.msra.mxu0 %v2569
    %3733 = vmatpush.bf16.msra.mxu0 %v2565
    %3734 = vmatpush.bf16.msra.mxu0 %v2561
    %3735 = vmatpush.bf16.msra.mxu0 %v2557
    %3736 = vmatpush.bf16.msra.mxu0 %v2553
    %3737 = vmatpush.bf16.msra.mxu0 %v2549
    %3738 = vmatpush.bf16.msra.mxu0 %v2545
    %3739 = vmatpush.bf16.msra.mxu0 %v2541
    %3740 = vmatmul.bf16.gmra.mxu0 %v568
    %v3741 = vpop.f32.mrf.mxu0
    %v3742 = vadd.f32 %v3729, %v3741
    %v3743 = vpop.f32.mrf.mxu0
    %3744 = vdwg.mxu0
    %3745 = vmatpush.bf16.msra.mxu0 %v2601
    %3746 = vmatpush.bf16.msra.mxu0 %v2597
    %3747 = vmatpush.bf16.msra.mxu0 %v2593
    %3748 = vmatpush.bf16.msra.mxu0 %v2589
    %3749 = vmatpush.bf16.msra.mxu0 %v2585
    %3750 = vmatpush.bf16.msra.mxu0 %v2581
    %3751 = vmatpush.bf16.msra.mxu0 %v2577
    %3752 = vmatpush.bf16.msra.mxu0 %v2573
    %3753 = vmatmul.bf16.gmra.mxu0 %v569
    %v3754 = vpop.f32.mrf.mxu0
    %v3755 = vadd.f32 %v3742, %v3754
    %v3756 = vpop.f32.mrf.mxu0
    %3757 = vdwg.mxu0
    %3758 = vmatpush.bf16.msra.mxu0 %v2633
    %3759 = vmatpush.bf16.msra.mxu0 %v2629
    %3760 = vmatpush.bf16.msra.mxu0 %v2625
    %3761 = vmatpush.bf16.msra.mxu0 %v2621
    %3762 = vmatpush.bf16.msra.mxu0 %v2617
    %3763 = vmatpush.bf16.msra.mxu0 %v2613
    %3764 = vmatpush.bf16.msra.mxu0 %v2609
    %3765 = vmatpush.bf16.msra.mxu0 %v2605
    %3766 = vmatmul.bf16.gmra.mxu0 %v570
    %v3767 = vpop.f32.mrf.mxu0
    %v3768 = vadd.f32 %v3755, %v3767
    %v3769 = vpop.f32.mrf.mxu0
    %3770 = vdwg.mxu0
    %3771 = vmatpush.bf16.msra.mxu0 %v2154
    %3772 = vmatpush.bf16.msra.mxu0 %v2150
    %3773 = vmatpush.bf16.msra.mxu0 %v2146
    %3774 = vmatpush.bf16.msra.mxu0 %v2142
    %3775 = vmatpush.bf16.msra.mxu0 %v2138
    %3776 = vmatpush.bf16.msra.mxu0 %v2134
    %3777 = vmatpush.bf16.msra.mxu0 %v2130
    %3778 = vmatpush.bf16.msra.mxu0 %v2126
    %3779 = vmatmul.bf16.gmra.mxu0 %v553
    %v3780 = vpop.f32.mrf.mxu0
    %v3781 = vadd.f32 %v546, %v3780
    %v3782 = vpop.f32.mrf.mxu0
    %3783 = vdwg.mxu0
    %3784 = vmatpush.bf16.msra.mxu0 %v2186
    %3785 = vmatpush.bf16.msra.mxu0 %v2182
    %3786 = vmatpush.bf16.msra.mxu0 %v2178
    %3787 = vmatpush.bf16.msra.mxu0 %v2174
    %3788 = vmatpush.bf16.msra.mxu0 %v2170
    %3789 = vmatpush.bf16.msra.mxu0 %v2166
    %3790 = vmatpush.bf16.msra.mxu0 %v2162
    %3791 = vmatpush.bf16.msra.mxu0 %v2158
    %3792 = vmatmul.bf16.gmra.mxu0 %v554
    %v3793 = vpop.f32.mrf.mxu0
    %v3794 = vadd.f32 %v3781, %v3793
    %v3795 = vpop.f32.mrf.mxu0
    %3796 = vdwg.mxu0
    %3797 = vmatpush.bf16.msra.mxu0 %v2218
    %3798 = vmatpush.bf16.msra.mxu0 %v2214
    %3799 = vmatpush.bf16.msra.mxu0 %v2210
    %3800 = vmatpush.bf16.msra.mxu0 %v2206
    %3801 = vmatpush.bf16.msra.mxu0 %v2202
    %3802 = vmatpush.bf16.msra.mxu0 %v2198
    %3803 = vmatpush.bf16.msra.mxu0 %v2194
    %3804 = vmatpush.bf16.msra.mxu0 %v2190
    %3805 = vmatmul.bf16.gmra.mxu0 %v555
    %v3806 = vpop.f32.mrf.mxu0
    %v3807 = vadd.f32 %v3794, %v3806
    %v3808 = vpop.f32.mrf.mxu0
    %3809 = vdwg.mxu0
    %3810 = vmatpush.bf16.msra.mxu0 %v2250
    %3811 = vmatpush.bf16.msra.mxu0 %v2246
    %3812 = vmatpush.bf16.msra.mxu0 %v2242
    %3813 = vmatpush.bf16.msra.mxu0 %v2238
    %3814 = vmatpush.bf16.msra.mxu0 %v2234
    %3815 = vmatpush.bf16.msra.mxu0 %v2230
    %3816 = vmatpush.bf16.msra.mxu0 %v2226
    %3817 = vmatpush.bf16.msra.mxu0 %v2222
    %3818 = vmatmul.bf16.gmra.mxu0 %v556
    %v3819 = vpop.f32.mrf.mxu0
    %v3820 = vadd.f32 %v3807, %v3819
    %v3821 = vpop.f32.mrf.mxu0
    %3822 = vdwg.mxu0
    %3823 = vmatpush.bf16.msra.mxu0 %v2282
    %3824 = vmatpush.bf16.msra.mxu0 %v2278
    %3825 = vmatpush.bf16.msra.mxu0 %v2274
    %3826 = vmatpush.bf16.msra.mxu0 %v2270
    %3827 = vmatpush.bf16.msra.mxu0 %v2266
    %3828 = vmatpush.bf16.msra.mxu0 %v2262
    %3829 = vmatpush.bf16.msra.mxu0 %v2258
    %3830 = vmatpush.bf16.msra.mxu0 %v2254
    %3831 = vmatmul.bf16.gmra.mxu0 %v557
    %v3832 = vpop.f32.mrf.mxu0
    %v3833 = vadd.f32 %v3820, %v3832
    %v3834 = vpop.f32.mrf.mxu0
    %3835 = vdwg.mxu0
    %3836 = vmatpush.bf16.msra.mxu0 %v2314
    %3837 = vmatpush.bf16.msra.mxu0 %v2310
    %3838 = vmatpush.bf16.msra.mxu0 %v2306
    %3839 = vmatpush.bf16.msra.mxu0 %v2302
    %3840 = vmatpush.bf16.msra.mxu0 %v2298
    %3841 = vmatpush.bf16.msra.mxu0 %v2294
    %3842 = vmatpush.bf16.msra.mxu0 %v2290
    %3843 = vmatpush.bf16.msra.mxu0 %v2286
    %3844 = vmatmul.bf16.gmra.mxu0 %v558
    %v3845 = vpop.f32.mrf.mxu0
    %v3846 = vadd.f32 %v3833, %v3845
    %v3847 = vpop.f32.mrf.mxu0
    %3848 = vdwg.mxu0
    %3849 = vmatpush.bf16.msra.mxu0 %v2346
    %3850 = vmatpush.bf16.msra.mxu0 %v2342
    %3851 = vmatpush.bf16.msra.mxu0 %v2338
    %3852 = vmatpush.bf16.msra.mxu0 %v2334
    %3853 = vmatpush.bf16.msra.mxu0 %v2330
    %3854 = vmatpush.bf16.msra.mxu0 %v2326
    %3855 = vmatpush.bf16.msra.mxu0 %v2322
    %3856 = vmatpush.bf16.msra.mxu0 %v2318
    %3857 = vmatmul.bf16.gmra.mxu0 %v559
    %v3858 = vpop.f32.mrf.mxu0
    %v3859 = vadd.f32 %v3846, %v3858
    %v3860 = vpop.f32.mrf.mxu0
    %3861 = vdwg.mxu0
    %3862 = vmatpush.bf16.msra.mxu0 %v2378
    %3863 = vmatpush.bf16.msra.mxu0 %v2374
    %3864 = vmatpush.bf16.msra.mxu0 %v2370
    %3865 = vmatpush.bf16.msra.mxu0 %v2366
    %3866 = vmatpush.bf16.msra.mxu0 %v2362
    %3867 = vmatpush.bf16.msra.mxu0 %v2358
    %3868 = vmatpush.bf16.msra.mxu0 %v2354
    %3869 = vmatpush.bf16.msra.mxu0 %v2350
    %3870 = vmatmul.bf16.gmra.mxu0 %v560
    %v3871 = vpop.f32.mrf.mxu0
    %v3872 = vadd.f32 %v3859, %v3871
    %v3873 = vpop.f32.mrf.mxu0
    %3874 = vdwg.mxu0
    %3875 = vmatpush.bf16.msra.mxu0 %v2410
    %3876 = vmatpush.bf16.msra.mxu0 %v2406
    %3877 = vmatpush.bf16.msra.mxu0 %v2402
    %3878 = vmatpush.bf16.msra.mxu0 %v2398
    %3879 = vmatpush.bf16.msra.mxu0 %v2394
    %3880 = vmatpush.bf16.msra.mxu0 %v2390
    %3881 = vmatpush.bf16.msra.mxu0 %v2386
    %3882 = vmatpush.bf16.msra.mxu0 %v2382
    %3883 = vmatmul.bf16.gmra.mxu0 %v563
    %v3884 = vpop.f32.mrf.mxu0
    %v3885 = vadd.f32 %v3872, %v3884
    %v3886 = vpop.f32.mrf.mxu0
    %3887 = vdwg.mxu0
    %3888 = vmatpush.bf16.msra.mxu0 %v2442
    %3889 = vmatpush.bf16.msra.mxu0 %v2438
    %3890 = vmatpush.bf16.msra.mxu0 %v2434
    %3891 = vmatpush.bf16.msra.mxu0 %v2430
    %3892 = vmatpush.bf16.msra.mxu0 %v2426
    %3893 = vmatpush.bf16.msra.mxu0 %v2422
    %3894 = vmatpush.bf16.msra.mxu0 %v2418
    %3895 = vmatpush.bf16.msra.mxu0 %v2414
    %3896 = vmatmul.bf16.gmra.mxu0 %v564
    %v3897 = vpop.f32.mrf.mxu0
    %v3898 = vadd.f32 %v3885, %v3897
    %v3899 = vpop.f32.mrf.mxu0
    %3900 = vdwg.mxu0
    %3901 = vmatpush.bf16.msra.mxu0 %v2474
    %3902 = vmatpush.bf16.msra.mxu0 %v2470
    %3903 = vmatpush.bf16.msra.mxu0 %v2466
    %3904 = vmatpush.bf16.msra.mxu0 %v2462
    %3905 = vmatpush.bf16.msra.mxu0 %v2458
    %3906 = vmatpush.bf16.msra.mxu0 %v2454
    %3907 = vmatpush.bf16.msra.mxu0 %v2450
    %3908 = vmatpush.bf16.msra.mxu0 %v2446
    %3909 = vmatmul.bf16.gmra.mxu0 %v565
    %v3910 = vpop.f32.mrf.mxu0
    %v3911 = vadd.f32 %v3898, %v3910
    %v3912 = vpop.f32.mrf.mxu0
    %3913 = vdwg.mxu0
    %3914 = vmatpush.bf16.msra.mxu0 %v2506
    %3915 = vmatpush.bf16.msra.mxu0 %v2502
    %3916 = vmatpush.bf16.msra.mxu0 %v2498
    %3917 = vmatpush.bf16.msra.mxu0 %v2494
    %3918 = vmatpush.bf16.msra.mxu0 %v2490
    %3919 = vmatpush.bf16.msra.mxu0 %v2486
    %3920 = vmatpush.bf16.msra.mxu0 %v2482
    %3921 = vmatpush.bf16.msra.mxu0 %v2478
    %3922 = vmatmul.bf16.gmra.mxu0 %v566
    %v3923 = vpop.f32.mrf.mxu0
    %v3924 = vadd.f32 %v3911, %v3923
    %v3925 = vpop.f32.mrf.mxu0
    %3926 = vdwg.mxu0
    %3927 = vmatpush.bf16.msra.mxu0 %v2538
    %3928 = vmatpush.bf16.msra.mxu0 %v2534
    %3929 = vmatpush.bf16.msra.mxu0 %v2530
    %3930 = vmatpush.bf16.msra.mxu0 %v2526
    %3931 = vmatpush.bf16.msra.mxu0 %v2522
    %3932 = vmatpush.bf16.msra.mxu0 %v2518
    %3933 = vmatpush.bf16.msra.mxu0 %v2514
    %3934 = vmatpush.bf16.msra.mxu0 %v2510
    %3935 = vmatmul.bf16.gmra.mxu0 %v567
    %v3936 = vpop.f32.mrf.mxu0
    %v3937 = vadd.f32 %v3924, %v3936
    %v3938 = vpop.f32.mrf.mxu0
    %3939 = vdwg.mxu0
    %3940 = vmatpush.bf16.msra.mxu0 %v2570
    %3941 = vmatpush.bf16.msra.mxu0 %v2566
    %3942 = vmatpush.bf16.msra.mxu0 %v2562
    %3943 = vmatpush.bf16.msra.mxu0 %v2558
    %3944 = vmatpush.bf16.msra.mxu0 %v2554
    %3945 = vmatpush.bf16.msra.mxu0 %v2550
    %3946 = vmatpush.bf16.msra.mxu0 %v2546
    %3947 = vmatpush.bf16.msra.mxu0 %v2542
    %3948 = vmatmul.bf16.gmra.mxu0 %v568
    %v3949 = vpop.f32.mrf.mxu0
    %v3950 = vadd.f32 %v3937, %v3949
    %v3951 = vpop.f32.mrf.mxu0
    %3952 = vdwg.mxu0
    %3953 = vmatpush.bf16.msra.mxu0 %v2602
    %3954 = vmatpush.bf16.msra.mxu0 %v2598
    %3955 = vmatpush.bf16.msra.mxu0 %v2594
    %3956 = vmatpush.bf16.msra.mxu0 %v2590
    %3957 = vmatpush.bf16.msra.mxu0 %v2586
    %3958 = vmatpush.bf16.msra.mxu0 %v2582
    %3959 = vmatpush.bf16.msra.mxu0 %v2578
    %3960 = vmatpush.bf16.msra.mxu0 %v2574
    %3961 = vmatmul.bf16.gmra.mxu0 %v569
    %v3962 = vpop.f32.mrf.mxu0
    %v3963 = vadd.f32 %v3950, %v3962
    %v3964 = vpop.f32.mrf.mxu0
    %3965 = vdwg.mxu0
    %3966 = vmatpush.bf16.msra.mxu0 %v2634
    %3967 = vmatpush.bf16.msra.mxu0 %v2630
    %3968 = vmatpush.bf16.msra.mxu0 %v2626
    %3969 = vmatpush.bf16.msra.mxu0 %v2622
    %3970 = vmatpush.bf16.msra.mxu0 %v2618
    %3971 = vmatpush.bf16.msra.mxu0 %v2614
    %3972 = vmatpush.bf16.msra.mxu0 %v2610
    %3973 = vmatpush.bf16.msra.mxu0 %v2606
    %3974 = vmatmul.bf16.gmra.mxu0 %v570
    %v3975 = vpop.f32.mrf.mxu0
    %v3976 = vadd.f32 %v3963, %v3975
    %v3977 = vpop.f32.mrf.mxu0
    %3978 = vdwg.mxu0
    %v3979 = vpack.c.bf16 %v3352, %v3352
    %v3980 = vpack.c.bf16 %v3560, %v3560
    %v3981 = vpack.c.bf16 %v3768, %v3768
    %v3982 = vpack.c.bf16 %v3976, %v3976
    %v3983 = vld [vmem:[%s3] sm:$0xff]
    %v3984 = vld [vmem:[%s3 + $0x8] sm:$0xff]
    %v3985 = vld [vmem:[%s3 + $0x10] sm:$0xff]
    %v3986 = vld [vmem:[%s3 + $0x18] sm:$0xff]
    %v3987 = vld [vmem:[%s3 + $0x20] sm:$0xff]
    %v3988 = vld [vmem:[%s3 + $0x28] sm:$0xff]
    %v3989 = vld [vmem:[%s3 + $0x30] sm:$0xff]
    %v3990 = vld [vmem:[%s3 + $0x38] sm:$0xff]
    %v3991 = vld [vmem:[%s3 + $0x40] sm:$0xff]
    %v3992 = vld [vmem:[%s3 + $0x48] sm:$0xff]
    %v3993 = vld [vmem:[%s3 + $0x50] sm:$0xff]
    %v3994 = vld [vmem:[%s3 + $0x58] sm:$0xff]
    %v3995 = vld [vmem:[%s3 + $0x60] sm:$0xff]
    %v3996 = vld [vmem:[%s3 + $0x68] sm:$0xff]
    %v3997 = vld [vmem:[%s3 + $0x70] sm:$0xff]
    %v3998 = vld [vmem:[%s3 + $0x78] sm:$0xff]
    %v3999 = vld [vmem:[%s3 + $0x80] sm:$0xff]
    %v4000 = vld [vmem:[%s3 + $0x88] sm:$0xff]
    %v4001 = vld [vmem:[%s3 + $0x90] sm:$0xff]
    %v4002 = vld [vmem:[%s3 + $0x98] sm:$0xff]
    %v4003 = vld [vmem:[%s3 + $0xa0] sm:$0xff]
    %v4004 = vld [vmem:[%s3 + $0xa8] sm:$0xff]
    %v4005 = vld [vmem:[%s3 + $0xb0] sm:$0xff]
    %v4006 = vld [vmem:[%s3 + $0xb8] sm:$0xff]
    %v4007 = vld [vmem:[%s3 + $0xc0] sm:$0xff]
    %v4008 = vld [vmem:[%s3 + $0xc8] sm:$0xff]
    %v4009 = vld [vmem:[%s3 + $0xd0] sm:$0xff]
    %v4010 = vld [vmem:[%s3 + $0xd8] sm:$0xff]
    %v4011 = vld [vmem:[%s3 + $0xe0] sm:$0xff]
    %v4012 = vld [vmem:[%s3 + $0xe8] sm:$0xff]
    %v4013 = vld [vmem:[%s3 + $0xf0] sm:$0xff]
    %v4014 = vld [vmem:[%s3 + $0xf8] sm:$0xff]
    %v4015 = vld [vmem:[%s3 + $0x100] sm:$0xff]
    %v4016 = vld [vmem:[%s3 + $0x108] sm:$0xff]
    %v4017 = vld [vmem:[%s3 + $0x110] sm:$0xff]
    %v4018 = vld [vmem:[%s3 + $0x118] sm:$0xff]
    %v4019 = vld [vmem:[%s3 + $0x120] sm:$0xff]
    %v4020 = vld [vmem:[%s3 + $0x128] sm:$0xff]
    %v4021 = vld [vmem:[%s3 + $0x130] sm:$0xff]
    %v4022 = vld [vmem:[%s3 + $0x138] sm:$0xff]
    %v4023 = vld [vmem:[%s3 + $0x140] sm:$0xff]
    %v4024 = vld [vmem:[%s3 + $0x148] sm:$0xff]
    %v4025 = vld [vmem:[%s3 + $0x150] sm:$0xff]
    %v4026 = vld [vmem:[%s3 + $0x158] sm:$0xff]
    %v4027 = vld [vmem:[%s3 + $0x160] sm:$0xff]
    %v4028 = vld [vmem:[%s3 + $0x168] sm:$0xff]
    %v4029 = vld [vmem:[%s3 + $0x170] sm:$0xff]
    %v4030 = vld [vmem:[%s3 + $0x178] sm:$0xff]
    %v4031 = vld [vmem:[%s3 + $0x180] sm:$0xff]
    %v4032 = vld [vmem:[%s3 + $0x188] sm:$0xff]
    %v4033 = vld [vmem:[%s3 + $0x190] sm:$0xff]
    %v4034 = vld [vmem:[%s3 + $0x198] sm:$0xff]
    %v4035 = vld [vmem:[%s3 + $0x1a0] sm:$0xff]
    %v4036 = vld [vmem:[%s3 + $0x1a8] sm:$0xff]
    %v4037 = vld [vmem:[%s3 + $0x1b0] sm:$0xff]
    %v4038 = vld [vmem:[%s3 + $0x1b8] sm:$0xff]
    %v4039 = vld [vmem:[%s3 + $0x1c0] sm:$0xff]
    %v4040 = vld [vmem:[%s3 + $0x1c8] sm:$0xff]
    %v4041 = vld [vmem:[%s3 + $0x1d0] sm:$0xff]
    %v4042 = vld [vmem:[%s3 + $0x1d8] sm:$0xff]
    %v4043 = vld [vmem:[%s3 + $0x1e0] sm:$0xff]
    %v4044 = vld [vmem:[%s3 + $0x1e8] sm:$0xff]
    %v4045 = vld [vmem:[%s3 + $0x1f0] sm:$0xff]
    %v4046 = vld [vmem:[%s3 + $0x1f8] sm:$0xff]
    %v4047 = vld [vmem:[%s3 + $0x200] sm:$0xff]
    %v4048 = vld [vmem:[%s3 + $0x208] sm:$0xff]
    %v4049 = vld [vmem:[%s3 + $0x210] sm:$0xff]
    %v4050 = vld [vmem:[%s3 + $0x218] sm:$0xff]
    %v4051 = vld [vmem:[%s3 + $0x220] sm:$0xff]
    %v4052 = vld [vmem:[%s3 + $0x228] sm:$0xff]
    %v4053 = vld [vmem:[%s3 + $0x230] sm:$0xff]
    %v4054 = vld [vmem:[%s3 + $0x238] sm:$0xff]
    %v4055 = vld [vmem:[%s3 + $0x240] sm:$0xff]
    %v4056 = vld [vmem:[%s3 + $0x248] sm:$0xff]
    %v4057 = vld [vmem:[%s3 + $0x250] sm:$0xff]
    %v4058 = vld [vmem:[%s3 + $0x258] sm:$0xff]
    %v4059 = vld [vmem:[%s3 + $0x260] sm:$0xff]
    %v4060 = vld [vmem:[%s3 + $0x268] sm:$0xff]
    %v4061 = vld [vmem:[%s3 + $0x270] sm:$0xff]
    %v4062 = vld [vmem:[%s3 + $0x278] sm:$0xff]
    %v4063 = vld [vmem:[%s3 + $0x280] sm:$0xff]
    %v4064 = vld [vmem:[%s3 + $0x288] sm:$0xff]
    %v4065 = vld [vmem:[%s3 + $0x290] sm:$0xff]
    %v4066 = vld [vmem:[%s3 + $0x298] sm:$0xff]
    %v4067 = vld [vmem:[%s3 + $0x2a0] sm:$0xff]
    %v4068 = vld [vmem:[%s3 + $0x2a8] sm:$0xff]
    %v4069 = vld [vmem:[%s3 + $0x2b0] sm:$0xff]
    %v4070 = vld [vmem:[%s3 + $0x2b8] sm:$0xff]
    %v4071 = vld [vmem:[%s3 + $0x2c0] sm:$0xff]
    %v4072 = vld [vmem:[%s3 + $0x2c8] sm:$0xff]
    %v4073 = vld [vmem:[%s3 + $0x2d0] sm:$0xff]
    %v4074 = vld [vmem:[%s3 + $0x2d8] sm:$0xff]
    %v4075 = vld [vmem:[%s3 + $0x2e0] sm:$0xff]
    %v4076 = vld [vmem:[%s3 + $0x2e8] sm:$0xff]
    %v4077 = vld [vmem:[%s3 + $0x2f0] sm:$0xff]
    %v4078 = vld [vmem:[%s3 + $0x2f8] sm:$0xff]
    %v4079 = vld [vmem:[%s3 + $0x300] sm:$0xff]
    %v4080 = vld [vmem:[%s3 + $0x308] sm:$0xff]
    %v4081 = vld [vmem:[%s3 + $0x310] sm:$0xff]
    %v4082 = vld [vmem:[%s3 + $0x318] sm:$0xff]
    %v4083 = vld [vmem:[%s3 + $0x320] sm:$0xff]
    %v4084 = vld [vmem:[%s3 + $0x328] sm:$0xff]
    %v4085 = vld [vmem:[%s3 + $0x330] sm:$0xff]
    %v4086 = vld [vmem:[%s3 + $0x338] sm:$0xff]
    %v4087 = vld [vmem:[%s3 + $0x340] sm:$0xff]
    %v4088 = vld [vmem:[%s3 + $0x348] sm:$0xff]
    %v4089 = vld [vmem:[%s3 + $0x350] sm:$0xff]
    %v4090 = vld [vmem:[%s3 + $0x358] sm:$0xff]
    %v4091 = vld [vmem:[%s3 + $0x360] sm:$0xff]
    %v4092 = vld [vmem:[%s3 + $0x368] sm:$0xff]
    %v4093 = vld [vmem:[%s3 + $0x370] sm:$0xff]
    %v4094 = vld [vmem:[%s3 + $0x378] sm:$0xff]
    %v4095 = vld [vmem:[%s3 + $0x380] sm:$0xff]
    %v4096 = vld [vmem:[%s3 + $0x388] sm:$0xff]
    %v4097 = vld [vmem:[%s3 + $0x390] sm:$0xff]
    %v4098 = vld [vmem:[%s3 + $0x398] sm:$0xff]
    %v4099 = vld [vmem:[%s3 + $0x3a0] sm:$0xff]
    %v4100 = vld [vmem:[%s3 + $0x3a8] sm:$0xff]
    %v4101 = vld [vmem:[%s3 + $0x3b0] sm:$0xff]
    %v4102 = vld [vmem:[%s3 + $0x3b8] sm:$0xff]
    %v4103 = vld [vmem:[%s3 + $0x3c0] sm:$0xff]
    %v4104 = vld [vmem:[%s3 + $0x3c8] sm:$0xff]
    %v4105 = vld [vmem:[%s3 + $0x3d0] sm:$0xff]
    %v4106 = vld [vmem:[%s3 + $0x3d8] sm:$0xff]
    %v4107 = vld [vmem:[%s3 + $0x3e0] sm:$0xff]
    %v4108 = vld [vmem:[%s3 + $0x3e8] sm:$0xff]
    %v4109 = vld [vmem:[%s3 + $0x3f0] sm:$0xff]
    %v4110 = vld [vmem:[%s3 + $0x3f8] sm:$0xff]
    %v4111 = vld [vmem:[%s4] sm:$0xf]
    %v4113 = vperm.slane %v4111, 0
    %v4114 = vperm.slane %v4111, 1
    %v4115 = vperm.slane %v4111, 2
    %v4116 = vperm.slane %v4111, 3
    %v4249 = vunpack.c.l.b16 %v3983
    %v4250 = vunpack.c.h.b16 %v3983
    %v4251 = vunpack.c.l.b16 %v3984
    %v4252 = vunpack.c.h.b16 %v3984
    %v4253 = vunpack.c.l.b16 %v3985
    %v4254 = vunpack.c.h.b16 %v3985
    %v4255 = vunpack.c.l.b16 %v3986
    %v4256 = vunpack.c.h.b16 %v3986
    %v4257 = vunpack.c.l.b16 %v3987
    %v4258 = vunpack.c.h.b16 %v3987
    %v4259 = vunpack.c.l.b16 %v3988
    %v4260 = vunpack.c.h.b16 %v3988
    %v4261 = vunpack.c.l.b16 %v3989
    %v4262 = vunpack.c.h.b16 %v3989
    %v4263 = vunpack.c.l.b16 %v3990
    %v4264 = vunpack.c.h.b16 %v3990
    %v4265 = vunpack.c.l.b16 %v3991
    %v4266 = vunpack.c.h.b16 %v3991
    %v4267 = vunpack.c.l.b16 %v3992
    %v4268 = vunpack.c.h.b16 %v3992
    %v4269 = vunpack.c.l.b16 %v3993
    %v4270 = vunpack.c.h.b16 %v3993
    %v4271 = vunpack.c.l.b16 %v3994
    %v4272 = vunpack.c.h.b16 %v3994
    %v4273 = vunpack.c.l.b16 %v3995
    %v4274 = vunpack.c.h.b16 %v3995
    %v4275 = vunpack.c.l.b16 %v3996
    %v4276 = vunpack.c.h.b16 %v3996
    %v4277 = vunpack.c.l.b16 %v3997
    %v4278 = vunpack.c.h.b16 %v3997
    %v4279 = vunpack.c.l.b16 %v3998
    %v4280 = vunpack.c.h.b16 %v3998
    %v4281 = vunpack.c.l.b16 %v3999
    %v4282 = vunpack.c.h.b16 %v3999
    %v4283 = vunpack.c.l.b16 %v4000
    %v4284 = vunpack.c.h.b16 %v4000
    %v4285 = vunpack.c.l.b16 %v4001
    %v4286 = vunpack.c.h.b16 %v4001
    %v4287 = vunpack.c.l.b16 %v4002
    %v4288 = vunpack.c.h.b16 %v4002
    %v4289 = vunpack.c.l.b16 %v4003
    %v4290 = vunpack.c.h.b16 %v4003
    %v4291 = vunpack.c.l.b16 %v4004
    %v4292 = vunpack.c.h.b16 %v4004
    %v4293 = vunpack.c.l.b16 %v4005
    %v4294 = vunpack.c.h.b16 %v4005
    %v4295 = vunpack.c.l.b16 %v4006
    %v4296 = vunpack.c.h.b16 %v4006
    %v4297 = vunpack.c.l.b16 %v4007
    %v4298 = vunpack.c.h.b16 %v4007
    %v4299 = vunpack.c.l.b16 %v4008
    %v4300 = vunpack.c.h.b16 %v4008
    %v4301 = vunpack.c.l.b16 %v4009
    %v4302 = vunpack.c.h.b16 %v4009
    %v4303 = vunpack.c.l.b16 %v4010
    %v4304 = vunpack.c.h.b16 %v4010
    %v4305 = vunpack.c.l.b16 %v4011
    %v4306 = vunpack.c.h.b16 %v4011
    %v4307 = vunpack.c.l.b16 %v4012
    %v4308 = vunpack.c.h.b16 %v4012
    %v4309 = vunpack.c.l.b16 %v4013
    %v4310 = vunpack.c.h.b16 %v4013
    %v4311 = vunpack.c.l.b16 %v4014
    %v4312 = vunpack.c.h.b16 %v4014
    %v4313 = vunpack.c.l.b16 %v4015
    %v4314 = vunpack.c.h.b16 %v4015
    %v4315 = vunpack.c.l.b16 %v4016
    %v4316 = vunpack.c.h.b16 %v4016
    %v4317 = vunpack.c.l.b16 %v4017
    %v4318 = vunpack.c.h.b16 %v4017
    %v4319 = vunpack.c.l.b16 %v4018
    %v4320 = vunpack.c.h.b16 %v4018
    %v4321 = vunpack.c.l.b16 %v4019
    %v4322 = vunpack.c.h.b16 %v4019
    %v4323 = vunpack.c.l.b16 %v4020
    %v4324 = vunpack.c.h.b16 %v4020
    %v4325 = vunpack.c.l.b16 %v4021
    %v4326 = vunpack.c.h.b16 %v4021
    %v4327 = vunpack.c.l.b16 %v4022
    %v4328 = vunpack.c.h.b16 %v4022
    %v4329 = vunpack.c.l.b16 %v4023
    %v4330 = vunpack.c.h.b16 %v4023
    %v4331 = vunpack.c.l.b16 %v4024
    %v4332 = vunpack.c.h.b16 %v4024
    %v4333 = vunpack.c.l.b16 %v4025
    %v4334 = vunpack.c.h.b16 %v4025
    %v4335 = vunpack.c.l.b16 %v4026
    %v4336 = vunpack.c.h.b16 %v4026
    %v4337 = vunpack.c.l.b16 %v4027
    %v4338 = vunpack.c.h.b16 %v4027
    %v4339 = vunpack.c.l.b16 %v4028
    %v4340 = vunpack.c.h.b16 %v4028
    %v4341 = vunpack.c.l.b16 %v4029
    %v4342 = vunpack.c.h.b16 %v4029
    %v4343 = vunpack.c.l.b16 %v4030
    %v4344 = vunpack.c.h.b16 %v4030
    %v4345 = vunpack.c.l.b16 %v4031
    %v4346 = vunpack.c.h.b16 %v4031
    %v4347 = vunpack.c.l.b16 %v4032
    %v4348 = vunpack.c.h.b16 %v4032
    %v4349 = vunpack.c.l.b16 %v4033
    %v4350 = vunpack.c.h.b16 %v4033
    %v4351 = vunpack.c.l.b16 %v4034
    %v4352 = vunpack.c.h.b16 %v4034
    %v4353 = vunpack.c.l.b16 %v4035
    %v4354 = vunpack.c.h.b16 %v4035
    %v4355 = vunpack.c.l.b16 %v4036
    %v4356 = vunpack.c.h.b16 %v4036
    %v4357 = vunpack.c.l.b16 %v4037
    %v4358 = vunpack.c.h.b16 %v4037
    %v4359 = vunpack.c.l.b16 %v4038
    %v4360 = vunpack.c.h.b16 %v4038
    %v4361 = vunpack.c.l.b16 %v4039
    %v4362 = vunpack.c.h.b16 %v4039
    %v4363 = vunpack.c.l.b16 %v4040
    %v4364 = vunpack.c.h.b16 %v4040
    %v4365 = vunpack.c.l.b16 %v4041
    %v4366 = vunpack.c.h.b16 %v4041
    %v4367 = vunpack.c.l.b16 %v4042
    %v4368 = vunpack.c.h.b16 %v4042
    %v4369 = vunpack.c.l.b16 %v4043
    %v4370 = vunpack.c.h.b16 %v4043
    %v4371 = vunpack.c.l.b16 %v4044
    %v4372 = vunpack.c.h.b16 %v4044
    %v4373 = vunpack.c.l.b16 %v4045
    %v4374 = vunpack.c.h.b16 %v4045
    %v4375 = vunpack.c.l.b16 %v4046
    %v4376 = vunpack.c.h.b16 %v4046
    %v4377 = vunpack.c.l.b16 %v4047
    %v4378 = vunpack.c.h.b16 %v4047
    %v4379 = vunpack.c.l.b16 %v4048
    %v4380 = vunpack.c.h.b16 %v4048
    %v4381 = vunpack.c.l.b16 %v4049
    %v4382 = vunpack.c.h.b16 %v4049
    %v4383 = vunpack.c.l.b16 %v4050
    %v4384 = vunpack.c.h.b16 %v4050
    %v4385 = vunpack.c.l.b16 %v4051
    %v4386 = vunpack.c.h.b16 %v4051
    %v4387 = vunpack.c.l.b16 %v4052
    %v4388 = vunpack.c.h.b16 %v4052
    %v4389 = vunpack.c.l.b16 %v4053
    %v4390 = vunpack.c.h.b16 %v4053
    %v4391 = vunpack.c.l.b16 %v4054
    %v4392 = vunpack.c.h.b16 %v4054
    %v4393 = vunpack.c.l.b16 %v4055
    %v4394 = vunpack.c.h.b16 %v4055
    %v4395 = vunpack.c.l.b16 %v4056
    %v4396 = vunpack.c.h.b16 %v4056
    %v4397 = vunpack.c.l.b16 %v4057
    %v4398 = vunpack.c.h.b16 %v4057
    %v4399 = vunpack.c.l.b16 %v4058
    %v4400 = vunpack.c.h.b16 %v4058
    %v4401 = vunpack.c.l.b16 %v4059
    %v4402 = vunpack.c.h.b16 %v4059
    %v4403 = vunpack.c.l.b16 %v4060
    %v4404 = vunpack.c.h.b16 %v4060
    %v4405 = vunpack.c.l.b16 %v4061
    %v4406 = vunpack.c.h.b16 %v4061
    %v4407 = vunpack.c.l.b16 %v4062
    %v4408 = vunpack.c.h.b16 %v4062
    %v4409 = vunpack.c.l.b16 %v4063
    %v4410 = vunpack.c.h.b16 %v4063
    %v4411 = vunpack.c.l.b16 %v4064
    %v4412 = vunpack.c.h.b16 %v4064
    %v4413 = vunpack.c.l.b16 %v4065
    %v4414 = vunpack.c.h.b16 %v4065
    %v4415 = vunpack.c.l.b16 %v4066
    %v4416 = vunpack.c.h.b16 %v4066
    %v4417 = vunpack.c.l.b16 %v4067
    %v4418 = vunpack.c.h.b16 %v4067
    %v4419 = vunpack.c.l.b16 %v4068
    %v4420 = vunpack.c.h.b16 %v4068
    %v4421 = vunpack.c.l.b16 %v4069
    %v4422 = vunpack.c.h.b16 %v4069
    %v4423 = vunpack.c.l.b16 %v4070
    %v4424 = vunpack.c.h.b16 %v4070
    %v4425 = vunpack.c.l.b16 %v4071
    %v4426 = vunpack.c.h.b16 %v4071
    %v4427 = vunpack.c.l.b16 %v4072
    %v4428 = vunpack.c.h.b16 %v4072
    %v4429 = vunpack.c.l.b16 %v4073
    %v4430 = vunpack.c.h.b16 %v4073
    %v4431 = vunpack.c.l.b16 %v4074
    %v4432 = vunpack.c.h.b16 %v4074
    %v4433 = vunpack.c.l.b16 %v4075
    %v4434 = vunpack.c.h.b16 %v4075
    %v4435 = vunpack.c.l.b16 %v4076
    %v4436 = vunpack.c.h.b16 %v4076
    %v4437 = vunpack.c.l.b16 %v4077
    %v4438 = vunpack.c.h.b16 %v4077
    %v4439 = vunpack.c.l.b16 %v4078
    %v4440 = vunpack.c.h.b16 %v4078
    %v4441 = vunpack.c.l.b16 %v4079
    %v4442 = vunpack.c.h.b16 %v4079
    %v4443 = vunpack.c.l.b16 %v4080
    %v4444 = vunpack.c.h.b16 %v4080
    %v4445 = vunpack.c.l.b16 %v4081
    %v4446 = vunpack.c.h.b16 %v4081
    %v4447 = vunpack.c.l.b16 %v4082
    %v4448 = vunpack.c.h.b16 %v4082
    %v4449 = vunpack.c.l.b16 %v4083
    %v4450 = vunpack.c.h.b16 %v4083
    %v4451 = vunpack.c.l.b16 %v4084
    %v4452 = vunpack.c.h.b16 %v4084
    %v4453 = vunpack.c.l.b16 %v4085
    %v4454 = vunpack.c.h.b16 %v4085
    %v4455 = vunpack.c.l.b16 %v4086
    %v4456 = vunpack.c.h.b16 %v4086
    %v4457 = vunpack.c.l.b16 %v4087
    %v4458 = vunpack.c.h.b16 %v4087
    %v4459 = vunpack.c.l.b16 %v4088
    %v4460 = vunpack.c.h.b16 %v4088
    %v4461 = vunpack.c.l.b16 %v4089
    %v4462 = vunpack.c.h.b16 %v4089
    %v4463 = vunpack.c.l.b16 %v4090
    %v4464 = vunpack.c.h.b16 %v4090
    %v4465 = vunpack.c.l.b16 %v4091
    %v4466 = vunpack.c.h.b16 %v4091
    %v4467 = vunpack.c.l.b16 %v4092
    %v4468 = vunpack.c.h.b16 %v4092
    %v4469 = vunpack.c.l.b16 %v4093
    %v4470 = vunpack.c.h.b16 %v4093
    %v4471 = vunpack.c.l.b16 %v4094
    %v4472 = vunpack.c.h.b16 %v4094
    %v4473 = vunpack.c.l.b16 %v4095
    %v4474 = vunpack.c.h.b16 %v4095
    %v4475 = vunpack.c.l.b16 %v4096
    %v4476 = vunpack.c.h.b16 %v4096
    %v4477 = vunpack.c.l.b16 %v4097
    %v4478 = vunpack.c.h.b16 %v4097
    %v4479 = vunpack.c.l.b16 %v4098
    %v4480 = vunpack.c.h.b16 %v4098
    %v4481 = vunpack.c.l.b16 %v4099
    %v4482 = vunpack.c.h.b16 %v4099
    %v4483 = vunpack.c.l.b16 %v4100
    %v4484 = vunpack.c.h.b16 %v4100
    %v4485 = vunpack.c.l.b16 %v4101
    %v4486 = vunpack.c.h.b16 %v4101
    %v4487 = vunpack.c.l.b16 %v4102
    %v4488 = vunpack.c.h.b16 %v4102
    %v4489 = vunpack.c.l.b16 %v4103
    %v4490 = vunpack.c.h.b16 %v4103
    %v4491 = vunpack.c.l.b16 %v4104
    %v4492 = vunpack.c.h.b16 %v4104
    %v4493 = vunpack.c.l.b16 %v4105
    %v4494 = vunpack.c.h.b16 %v4105
    %v4495 = vunpack.c.l.b16 %v4106
    %v4496 = vunpack.c.h.b16 %v4106
    %v4497 = vunpack.c.l.b16 %v4107
    %v4498 = vunpack.c.h.b16 %v4107
    %v4499 = vunpack.c.l.b16 %v4108
    %v4500 = vunpack.c.h.b16 %v4108
    %v4501 = vunpack.c.l.b16 %v4109
    %v4502 = vunpack.c.h.b16 %v4109
    %v4503 = vunpack.c.l.b16 %v4110
    %v4504 = vunpack.c.h.b16 %v4110
    %v4505 = vpack.c.b16 %v4253, %v4249
    %v4506 = vpack.c.b16 %v4254, %v4250
    %v4507 = vpack.c.b16 %v4255, %v4251
    %v4508 = vpack.c.b16 %v4256, %v4252
    %v4509 = vpack.c.b16 %v4261, %v4257
    %v4510 = vpack.c.b16 %v4262, %v4258
    %v4511 = vpack.c.b16 %v4263, %v4259
    %v4512 = vpack.c.b16 %v4264, %v4260
    %v4513 = vpack.c.b16 %v4269, %v4265
    %v4514 = vpack.c.b16 %v4270, %v4266
    %v4515 = vpack.c.b16 %v4271, %v4267
    %v4516 = vpack.c.b16 %v4272, %v4268
    %v4517 = vpack.c.b16 %v4277, %v4273
    %v4518 = vpack.c.b16 %v4278, %v4274
    %v4519 = vpack.c.b16 %v4279, %v4275
    %v4520 = vpack.c.b16 %v4280, %v4276
    %v4521 = vpack.c.b16 %v4285, %v4281
    %v4522 = vpack.c.b16 %v4286, %v4282
    %v4523 = vpack.c.b16 %v4287, %v4283
    %v4524 = vpack.c.b16 %v4288, %v4284
    %v4525 = vpack.c.b16 %v4293, %v4289
    %v4526 = vpack.c.b16 %v4294, %v4290
    %v4527 = vpack.c.b16 %v4295, %v4291
    %v4528 = vpack.c.b16 %v4296, %v4292
    %v4529 = vpack.c.b16 %v4301, %v4297
    %v4530 = vpack.c.b16 %v4302, %v4298
    %v4531 = vpack.c.b16 %v4303, %v4299
    %v4532 = vpack.c.b16 %v4304, %v4300
    %v4533 = vpack.c.b16 %v4309, %v4305
    %v4534 = vpack.c.b16 %v4310, %v4306
    %v4535 = vpack.c.b16 %v4311, %v4307
    %v4536 = vpack.c.b16 %v4312, %v4308
    %v4537 = vpack.c.b16 %v4317, %v4313
    %v4538 = vpack.c.b16 %v4318, %v4314
    %v4539 = vpack.c.b16 %v4319, %v4315
    %v4540 = vpack.c.b16 %v4320, %v4316
    %v4541 = vpack.c.b16 %v4325, %v4321
    %v4542 = vpack.c.b16 %v4326, %v4322
    %v4543 = vpack.c.b16 %v4327, %v4323
    %v4544 = vpack.c.b16 %v4328, %v4324
    %v4545 = vpack.c.b16 %v4333, %v4329
    %v4546 = vpack.c.b16 %v4334, %v4330
    %v4547 = vpack.c.b16 %v4335, %v4331
    %v4548 = vpack.c.b16 %v4336, %v4332
    %v4549 = vpack.c.b16 %v4341, %v4337
    %v4550 = vpack.c.b16 %v4342, %v4338
    %v4551 = vpack.c.b16 %v4343, %v4339
    %v4552 = vpack.c.b16 %v4344, %v4340
    %v4553 = vpack.c.b16 %v4349, %v4345
    %v4554 = vpack.c.b16 %v4350, %v4346
    %v4555 = vpack.c.b16 %v4351, %v4347
    %v4556 = vpack.c.b16 %v4352, %v4348
    %v4557 = vpack.c.b16 %v4357, %v4353
    %v4558 = vpack.c.b16 %v4358, %v4354
    %v4559 = vpack.c.b16 %v4359, %v4355
    %v4560 = vpack.c.b16 %v4360, %v4356
    %v4561 = vpack.c.b16 %v4365, %v4361
    %v4562 = vpack.c.b16 %v4366, %v4362
    %v4563 = vpack.c.b16 %v4367, %v4363
    %v4564 = vpack.c.b16 %v4368, %v4364
    %v4565 = vpack.c.b16 %v4373, %v4369
    %v4566 = vpack.c.b16 %v4374, %v4370
    %v4567 = vpack.c.b16 %v4375, %v4371
    %v4568 = vpack.c.b16 %v4376, %v4372
    %v4569 = vpack.c.b16 %v4381, %v4377
    %v4570 = vpack.c.b16 %v4382, %v4378
    %v4571 = vpack.c.b16 %v4383, %v4379
    %v4572 = vpack.c.b16 %v4384, %v4380
    %v4573 = vpack.c.b16 %v4389, %v4385
    %v4574 = vpack.c.b16 %v4390, %v4386
    %v4575 = vpack.c.b16 %v4391, %v4387
    %v4576 = vpack.c.b16 %v4392, %v4388
    %v4577 = vpack.c.b16 %v4397, %v4393
    %v4578 = vpack.c.b16 %v4398, %v4394
    %v4579 = vpack.c.b16 %v4399, %v4395
    %v4580 = vpack.c.b16 %v4400, %v4396
    %v4581 = vpack.c.b16 %v4405, %v4401
    %v4582 = vpack.c.b16 %v4406, %v4402
    %v4583 = vpack.c.b16 %v4407, %v4403
    %v4584 = vpack.c.b16 %v4408, %v4404
    %v4585 = vpack.c.b16 %v4413, %v4409
    %v4586 = vpack.c.b16 %v4414, %v4410
    %v4587 = vpack.c.b16 %v4415, %v4411
    %v4588 = vpack.c.b16 %v4416, %v4412
    %v4589 = vpack.c.b16 %v4421, %v4417
    %v4590 = vpack.c.b16 %v4422, %v4418
    %v4591 = vpack.c.b16 %v4423, %v4419
    %v4592 = vpack.c.b16 %v4424, %v4420
    %v4593 = vpack.c.b16 %v4429, %v4425
    %v4594 = vpack.c.b16 %v4430, %v4426
    %v4595 = vpack.c.b16 %v4431, %v4427
    %v4596 = vpack.c.b16 %v4432, %v4428
    %v4597 = vpack.c.b16 %v4437, %v4433
    %v4598 = vpack.c.b16 %v4438, %v4434
    %v4599 = vpack.c.b16 %v4439, %v4435
    %v4600 = vpack.c.b16 %v4440, %v4436
    %v4601 = vpack.c.b16 %v4445, %v4441
    %v4602 = vpack.c.b16 %v4446, %v4442
    %v4603 = vpack.c.b16 %v4447, %v4443
    %v4604 = vpack.c.b16 %v4448, %v4444
    %v4605 = vpack.c.b16 %v4453, %v4449
    %v4606 = vpack.c.b16 %v4454, %v4450
    %v4607 = vpack.c.b16 %v4455, %v4451
    %v4608 = vpack.c.b16 %v4456, %v4452
    %v4609 = vpack.c.b16 %v4461, %v4457
    %v4610 = vpack.c.b16 %v4462, %v4458
    %v4611 = vpack.c.b16 %v4463, %v4459
    %v4612 = vpack.c.b16 %v4464, %v4460
    %v4613 = vpack.c.b16 %v4469, %v4465
    %v4614 = vpack.c.b16 %v4470, %v4466
    %v4615 = vpack.c.b16 %v4471, %v4467
    %v4616 = vpack.c.b16 %v4472, %v4468
    %v4617 = vpack.c.b16 %v4477, %v4473
    %v4618 = vpack.c.b16 %v4478, %v4474
    %v4619 = vpack.c.b16 %v4479, %v4475
    %v4620 = vpack.c.b16 %v4480, %v4476
    %v4621 = vpack.c.b16 %v4485, %v4481
    %v4622 = vpack.c.b16 %v4486, %v4482
    %v4623 = vpack.c.b16 %v4487, %v4483
    %v4624 = vpack.c.b16 %v4488, %v4484
    %v4625 = vpack.c.b16 %v4493, %v4489
    %v4626 = vpack.c.b16 %v4494, %v4490
    %v4627 = vpack.c.b16 %v4495, %v4491
    %v4628 = vpack.c.b16 %v4496, %v4492
    %v4629 = vpack.c.b16 %v4501, %v4497
    %v4630 = vpack.c.b16 %v4502, %v4498
    %v4631 = vpack.c.b16 %v4503, %v4499
    %v4632 = vpack.c.b16 %v4504, %v4500
    %4761 = vmatpush.bf16.msra.mxu0 %v4533
    %4762 = vmatpush.bf16.msra.mxu0 %v4529
    %4763 = vmatpush.bf16.msra.mxu0 %v4525
    %4764 = vmatpush.bf16.msra.mxu0 %v4521
    %4765 = vmatpush.bf16.msra.mxu0 %v4517
    %4766 = vmatpush.bf16.msra.mxu0 %v4513
    %4767 = vmatpush.bf16.msra.mxu0 %v4509
    %4768 = vmatpush.bf16.msra.mxu0 %v4505
    %4769 = vmatmul.bf16.gmra.mxu0 %v3979
    %v4770 = vpop.f32.mrf.mxu0
    %v4771 = vadd.f32 %v4113, %v4770
    %v4772 = vpop.f32.mrf.mxu0
    %4773 = vdwg.mxu0
    %4774 = vmatpush.bf16.msra.mxu0 %v4565
    %4775 = vmatpush.bf16.msra.mxu0 %v4561
    %4776 = vmatpush.bf16.msra.mxu0 %v4557
    %4777 = vmatpush.bf16.msra.mxu0 %v4553
    %4778 = vmatpush.bf16.msra.mxu0 %v4549
    %4779 = vmatpush.bf16.msra.mxu0 %v4545
    %4780 = vmatpush.bf16.msra.mxu0 %v4541
    %4781 = vmatpush.bf16.msra.mxu0 %v4537
    %4782 = vmatmul.bf16.gmra.mxu0 %v3980
    %v4783 = vpop.f32.mrf.mxu0
    %v4784 = vadd.f32 %v4771, %v4783
    %v4785 = vpop.f32.mrf.mxu0
    %4786 = vdwg.mxu0
    %4787 = vmatpush.bf16.msra.mxu0 %v4597
    %4788 = vmatpush.bf16.msra.mxu0 %v4593
    %4789 = vmatpush.bf16.msra.mxu0 %v4589
    %4790 = vmatpush.bf16.msra.mxu0 %v4585
    %4791 = vmatpush.bf16.msra.mxu0 %v4581
    %4792 = vmatpush.bf16.msra.mxu0 %v4577
    %4793 = vmatpush.bf16.msra.mxu0 %v4573
    %4794 = vmatpush.bf16.msra.mxu0 %v4569
    %4795 = vmatmul.bf16.gmra.mxu0 %v3981
    %v4796 = vpop.f32.mrf.mxu0
    %v4797 = vadd.f32 %v4784, %v4796
    %v4798 = vpop.f32.mrf.mxu0
    %4799 = vdwg.mxu0
    %4800 = vmatpush.bf16.msra.mxu0 %v4629
    %4801 = vmatpush.bf16.msra.mxu0 %v4625
    %4802 = vmatpush.bf16.msra.mxu0 %v4621
    %4803 = vmatpush.bf16.msra.mxu0 %v4617
    %4804 = vmatpush.bf16.msra.mxu0 %v4613
    %4805 = vmatpush.bf16.msra.mxu0 %v4609
    %4806 = vmatpush.bf16.msra.mxu0 %v4605
    %4807 = vmatpush.bf16.msra.mxu0 %v4601
    %4808 = vmatmul.bf16.gmra.mxu0 %v3982
    %v4809 = vpop.f32.mrf.mxu0
    %v4810 = vadd.f32 %v4797, %v4809
    %v4811 = vpop.f32.mrf.mxu0
    %4812 = vdwg.mxu0
    %4813 = vmatpush.bf16.msra.mxu0 %v4534
    %4814 = vmatpush.bf16.msra.mxu0 %v4530
    %4815 = vmatpush.bf16.msra.mxu0 %v4526
    %4816 = vmatpush.bf16.msra.mxu0 %v4522
    %4817 = vmatpush.bf16.msra.mxu0 %v4518
    %4818 = vmatpush.bf16.msra.mxu0 %v4514
    %4819 = vmatpush.bf16.msra.mxu0 %v4510
    %4820 = vmatpush.bf16.msra.mxu0 %v4506
    %4821 = vmatmul.bf16.gmra.mxu0 %v3979
    %v4822 = vpop.f32.mrf.mxu0
    %v4823 = vadd.f32 %v4114, %v4822
    %v4824 = vpop.f32.mrf.mxu0
    %4825 = vdwg.mxu0
    %4826 = vmatpush.bf16.msra.mxu0 %v4566
    %4827 = vmatpush.bf16.msra.mxu0 %v4562
    %4828 = vmatpush.bf16.msra.mxu0 %v4558
    %4829 = vmatpush.bf16.msra.mxu0 %v4554
    %4830 = vmatpush.bf16.msra.mxu0 %v4550
    %4831 = vmatpush.bf16.msra.mxu0 %v4546
    %4832 = vmatpush.bf16.msra.mxu0 %v4542
    %4833 = vmatpush.bf16.msra.mxu0 %v4538
    %4834 = vmatmul.bf16.gmra.mxu0 %v3980
    %v4835 = vpop.f32.mrf.mxu0
    %v4836 = vadd.f32 %v4823, %v4835
    %v4837 = vpop.f32.mrf.mxu0
    %4838 = vdwg.mxu0
    %4839 = vmatpush.bf16.msra.mxu0 %v4598
    %4840 = vmatpush.bf16.msra.mxu0 %v4594
    %4841 = vmatpush.bf16.msra.mxu0 %v4590
    %4842 = vmatpush.bf16.msra.mxu0 %v4586
    %4843 = vmatpush.bf16.msra.mxu0 %v4582
    %4844 = vmatpush.bf16.msra.mxu0 %v4578
    %4845 = vmatpush.bf16.msra.mxu0 %v4574
    %4846 = vmatpush.bf16.msra.mxu0 %v4570
    %4847 = vmatmul.bf16.gmra.mxu0 %v3981
    %v4848 = vpop.f32.mrf.mxu0
    %v4849 = vadd.f32 %v4836, %v4848
    %v4850 = vpop.f32.mrf.mxu0
    %4851 = vdwg.mxu0
    %4852 = vmatpush.bf16.msra.mxu0 %v4630
    %4853 = vmatpush.bf16.msra.mxu0 %v4626
    %4854 = vmatpush.bf16.msra.mxu0 %v4622
    %4855 = vmatpush.bf16.msra.mxu0 %v4618
    %4856 = vmatpush.bf16.msra.mxu0 %v4614
    %4857 = vmatpush.bf16.msra.mxu0 %v4610
    %4858 = vmatpush.bf16.msra.mxu0 %v4606
    %4859 = vmatpush.bf16.msra.mxu0 %v4602
    %4860 = vmatmul.bf16.gmra.mxu0 %v3982
    %v4861 = vpop.f32.mrf.mxu0
    %v4862 = vadd.f32 %v4849, %v4861
    %v4863 = vpop.f32.mrf.mxu0
    %4864 = vdwg.mxu0
    %4865 = vmatpush.bf16.msra.mxu0 %v4535
    %4866 = vmatpush.bf16.msra.mxu0 %v4531
    %4867 = vmatpush.bf16.msra.mxu0 %v4527
    %4868 = vmatpush.bf16.msra.mxu0 %v4523
    %4869 = vmatpush.bf16.msra.mxu0 %v4519
    %4870 = vmatpush.bf16.msra.mxu0 %v4515
    %4871 = vmatpush.bf16.msra.mxu0 %v4511
    %4872 = vmatpush.bf16.msra.mxu0 %v4507
    %4873 = vmatmul.bf16.gmra.mxu0 %v3979
    %v4874 = vpop.f32.mrf.mxu0
    %v4875 = vadd.f32 %v4115, %v4874
    %v4876 = vpop.f32.mrf.mxu0
    %4877 = vdwg.mxu0
    %4878 = vmatpush.bf16.msra.mxu0 %v4567
    %4879 = vmatpush.bf16.msra.mxu0 %v4563
    %4880 = vmatpush.bf16.msra.mxu0 %v4559
    %4881 = vmatpush.bf16.msra.mxu0 %v4555
    %4882 = vmatpush.bf16.msra.mxu0 %v4551
    %4883 = vmatpush.bf16.msra.mxu0 %v4547
    %4884 = vmatpush.bf16.msra.mxu0 %v4543
    %4885 = vmatpush.bf16.msra.mxu0 %v4539
    %4886 = vmatmul.bf16.gmra.mxu0 %v3980
    %v4887 = vpop.f32.mrf.mxu0
    %v4888 = vadd.f32 %v4875, %v4887
    %v4889 = vpop.f32.mrf.mxu0
    %4890 = vdwg.mxu0
    %4891 = vmatpush.bf16.msra.mxu0 %v4599
    %4892 = vmatpush.bf16.msra.mxu0 %v4595
    %4893 = vmatpush.bf16.msra.mxu0 %v4591
    %4894 = vmatpush.bf16.msra.mxu0 %v4587
    %4895 = vmatpush.bf16.msra.mxu0 %v4583
    %4896 = vmatpush.bf16.msra.mxu0 %v4579
    %4897 = vmatpush.bf16.msra.mxu0 %v4575
    %4898 = vmatpush.bf16.msra.mxu0 %v4571
    %4899 = vmatmul.bf16.gmra.mxu0 %v3981
    %v4900 = vpop.f32.mrf.mxu0
    %v4901 = vadd.f32 %v4888, %v4900
    %v4902 = vpop.f32.mrf.mxu0
    %4903 = vdwg.mxu0
    %4904 = vmatpush.bf16.msra.mxu0 %v4631
    %4905 = vmatpush.bf16.msra.mxu0 %v4627
    %4906 = vmatpush.bf16.msra.mxu0 %v4623
    %4907 = vmatpush.bf16.msra.mxu0 %v4619
    %4908 = vmatpush.bf16.msra.mxu0 %v4615
    %4909 = vmatpush.bf16.msra.mxu0 %v4611
    %4910 = vmatpush.bf16.msra.mxu0 %v4607
    %4911 = vmatpush.bf16.msra.mxu0 %v4603
    %4912 = vmatmul.bf16.gmra.mxu0 %v3982
    %v4913 = vpop.f32.mrf.mxu0
    %v4914 = vadd.f32 %v4901, %v4913
    %v4915 = vpop.f32.mrf.mxu0
    %4916 = vdwg.mxu0
    %4917 = vmatpush.bf16.msra.mxu0 %v4536
    %4918 = vmatpush.bf16.msra.mxu0 %v4532
    %4919 = vmatpush.bf16.msra.mxu0 %v4528
    %4920 = vmatpush.bf16.msra.mxu0 %v4524
    %4921 = vmatpush.bf16.msra.mxu0 %v4520
    %4922 = vmatpush.bf16.msra.mxu0 %v4516
    %4923 = vmatpush.bf16.msra.mxu0 %v4512
    %4924 = vmatpush.bf16.msra.mxu0 %v4508
    %4925 = vmatmul.bf16.gmra.mxu0 %v3979
    %v4926 = vpop.f32.mrf.mxu0
    %v4927 = vadd.f32 %v4116, %v4926
    %v4928 = vpop.f32.mrf.mxu0
    %4929 = vdwg.mxu0
    %4930 = vmatpush.bf16.msra.mxu0 %v4568
    %4931 = vmatpush.bf16.msra.mxu0 %v4564
    %4932 = vmatpush.bf16.msra.mxu0 %v4560
    %4933 = vmatpush.bf16.msra.mxu0 %v4556
    %4934 = vmatpush.bf16.msra.mxu0 %v4552
    %4935 = vmatpush.bf16.msra.mxu0 %v4548
    %4936 = vmatpush.bf16.msra.mxu0 %v4544
    %4937 = vmatpush.bf16.msra.mxu0 %v4540
    %4938 = vmatmul.bf16.gmra.mxu0 %v3980
    %v4939 = vpop.f32.mrf.mxu0
    %v4940 = vadd.f32 %v4927, %v4939
    %v4941 = vpop.f32.mrf.mxu0
    %4942 = vdwg.mxu0
    %4943 = vmatpush.bf16.msra.mxu0 %v4600
    %4944 = vmatpush.bf16.msra.mxu0 %v4596
    %4945 = vmatpush.bf16.msra.mxu0 %v4592
    %4946 = vmatpush.bf16.msra.mxu0 %v4588
    %4947 = vmatpush.bf16.msra.mxu0 %v4584
    %4948 = vmatpush.bf16.msra.mxu0 %v4580
    %4949 = vmatpush.bf16.msra.mxu0 %v4576
    %4950 = vmatpush.bf16.msra.mxu0 %v4572
    %4951 = vmatmul.bf16.gmra.mxu0 %v3981
    %v4952 = vpop.f32.mrf.mxu0
    %v4953 = vadd.f32 %v4940, %v4952
    %v4954 = vpop.f32.mrf.mxu0
    %4955 = vdwg.mxu0
    %4956 = vmatpush.bf16.msra.mxu0 %v4632
    %4957 = vmatpush.bf16.msra.mxu0 %v4628
    %4958 = vmatpush.bf16.msra.mxu0 %v4624
    %4959 = vmatpush.bf16.msra.mxu0 %v4620
    %4960 = vmatpush.bf16.msra.mxu0 %v4616
    %4961 = vmatpush.bf16.msra.mxu0 %v4612
    %4962 = vmatpush.bf16.msra.mxu0 %v4608
    %4963 = vmatpush.bf16.msra.mxu0 %v4604
    %4964 = vmatmul.bf16.gmra.mxu0 %v3982
    %v4965 = vpop.f32.mrf.mxu0
    %v4966 = vadd.f32 %v4953, %v4965
    %v4967 = vpop.f32.mrf.mxu0
    %4968 = vdwg.mxu0
    %v4969 = vpack.c.bf16 %v4810, %v4810
    %v4970 = vpack.c.bf16 %v4862, %v4862
    %v4971 = vpack.c.bf16 %v4914, %v4914
    %v4972 = vpack.c.bf16 %v4966, %v4966
    %v4973 = vld [vmem:[%s5] sm:$0xf]
    %v4974 = vld [vmem:[%s5 + $0x4] sm:$0xf]
    %v4975 = vld [vmem:[%s5 + $0x8] sm:$0xf]
    %v4976 = vld [vmem:[%s5 + $0xc] sm:$0xf]
    %v4977 = vld [vmem:[%s5 + $0x10] sm:$0xf]
    %v4978 = vld [vmem:[%s5 + $0x14] sm:$0xf]
    %v4979 = vld [vmem:[%s5 + $0x18] sm:$0xf]
    %v4980 = vld [vmem:[%s5 + $0x1c] sm:$0xf]
    %v4981 = vld [vmem:[%s5 + $0x20] sm:$0xf]
    %v4982 = vld [vmem:[%s5 + $0x24] sm:$0xf]
    %v4983 = vld [vmem:[%s5 + $0x28] sm:$0xf]
    %v4984 = vld [vmem:[%s5 + $0x2c] sm:$0xf]
    %v4985 = vld [vmem:[%s5 + $0x30] sm:$0xf]
    %v4986 = vld [vmem:[%s5 + $0x34] sm:$0xf]
    %v4987 = vld [vmem:[%s5 + $0x38] sm:$0xf]
    %v4988 = vld [vmem:[%s5 + $0x3c] sm:$0xf]
    %v4989 = vld [vmem:[%s5 + $0x40] sm:$0xf]
    %v4990 = vld [vmem:[%s5 + $0x44] sm:$0xf]
    %v4991 = vld [vmem:[%s5 + $0x48] sm:$0xf]
    %v4992 = vld [vmem:[%s5 + $0x4c] sm:$0xf]
    %v4993 = vld [vmem:[%s5 + $0x50] sm:$0xf]
    %v4994 = vld [vmem:[%s5 + $0x54] sm:$0xf]
    %v4995 = vld [vmem:[%s5 + $0x58] sm:$0xf]
    %v4996 = vld [vmem:[%s5 + $0x5c] sm:$0xf]
    %v4997 = vld [vmem:[%s5 + $0x60] sm:$0xf]
    %v4998 = vld [vmem:[%s5 + $0x64] sm:$0xf]
    %v4999 = vld [vmem:[%s5 + $0x68] sm:$0xf]
    %v5000 = vld [vmem:[%s5 + $0x6c] sm:$0xf]
    %v5001 = vld [vmem:[%s5 + $0x70] sm:$0xf]
    %v5002 = vld [vmem:[%s5 + $0x74] sm:$0xf]
    %v5003 = vld [vmem:[%s5 + $0x78] sm:$0xf]
    %v5004 = vld [vmem:[%s5 + $0x7c] sm:$0xf]
    %v5005 = vld [vmem:[%s5 + $0x80] sm:$0xf]
    %v5006 = vld [vmem:[%s5 + $0x84] sm:$0xf]
    %v5007 = vld [vmem:[%s5 + $0x88] sm:$0xf]
    %v5008 = vld [vmem:[%s5 + $0x8c] sm:$0xf]
    %v5009 = vld [vmem:[%s5 + $0x90] sm:$0xf]
    %v5010 = vld [vmem:[%s5 + $0x94] sm:$0xf]
    %v5011 = vld [vmem:[%s5 + $0x98] sm:$0xf]
    %v5012 = vld [vmem:[%s5 + $0x9c] sm:$0xf]
    %v5013 = vld [vmem:[%s5 + $0xa0] sm:$0xf]
    %v5014 = vld [vmem:[%s5 + $0xa4] sm:$0xf]
    %v5015 = vld [vmem:[%s5 + $0xa8] sm:$0xf]
    %v5016 = vld [vmem:[%s5 + $0xac] sm:$0xf]
    %v5017 = vld [vmem:[%s5 + $0xb0] sm:$0xf]
    %v5018 = vld [vmem:[%s5 + $0xb4] sm:$0xf]
    %v5019 = vld [vmem:[%s5 + $0xb8] sm:$0xf]
    %v5020 = vld [vmem:[%s5 + $0xbc] sm:$0xf]
    %v5021 = vld [vmem:[%s5 + $0xc0] sm:$0xf]
    %v5022 = vld [vmem:[%s5 + $0xc4] sm:$0xf]
    %v5023 = vld [vmem:[%s5 + $0xc8] sm:$0xf]
    %v5024 = vld [vmem:[%s5 + $0xcc] sm:$0xf]
    %v5025 = vld [vmem:[%s5 + $0xd0] sm:$0xf]
    %v5026 = vld [vmem:[%s5 + $0xd4] sm:$0xf]
    %v5027 = vld [vmem:[%s5 + $0xd8] sm:$0xf]
    %v5028 = vld [vmem:[%s5 + $0xdc] sm:$0xf]
    %v5029 = vld [vmem:[%s5 + $0xe0] sm:$0xf]
    %v5030 = vld [vmem:[%s5 + $0xe4] sm:$0xf]
    %v5031 = vld [vmem:[%s5 + $0xe8] sm:$0xf]
    %v5032 = vld [vmem:[%s5 + $0xec] sm:$0xf]
    %v5033 = vld [vmem:[%s5 + $0xf0] sm:$0xf]
    %v5034 = vld [vmem:[%s5 + $0xf4] sm:$0xf]
    %v5035 = vld [vmem:[%s5 + $0xf8] sm:$0xf]
    %v5036 = vld [vmem:[%s5 + $0xfc] sm:$0xf]
    %v5037 = vld [vmem:[%s6] sm:$0x1]
    %v5039 = vperm.slane %v5037, 0
    %v5105 = vunpack.c.l.b16 %v4973
    %v5106 = vunpack.c.l.b16 %v4974
    %v5107 = vunpack.c.l.b16 %v4975
    %v5108 = vunpack.c.l.b16 %v4976
    %v5109 = vunpack.c.l.b16 %v4977
    %v5110 = vunpack.c.l.b16 %v4978
    %v5111 = vunpack.c.l.b16 %v4979
    %v5112 = vunpack.c.l.b16 %v4980
    %v5113 = vunpack.c.l.b16 %v4981
    %v5114 = vunpack.c.l.b16 %v4982
    %v5115 = vunpack.c.l.b16 %v4983
    %v5116 = vunpack.c.l.b16 %v4984
    %v5117 = vunpack.c.l.b16 %v4985
    %v5118 = vunpack.c.l.b16 %v4986
    %v5119 = vunpack.c.l.b16 %v4987
    %v5120 = vunpack.c.l.b16 %v4988
    %v5121 = vunpack.c.l.b16 %v4989
    %v5122 = vunpack.c.l.b16 %v4990
    %v5123 = vunpack.c.l.b16 %v4991
    %v5124 = vunpack.c.l.b16 %v4992
    %v5125 = vunpack.c.l.b16 %v4993
    %v5126 = vunpack.c.l.b16 %v4994
    %v5127 = vunpack.c.l.b16 %v4995
    %v5128 = vunpack.c.l.b16 %v4996
    %v5129 = vunpack.c.l.b16 %v4997
    %v5130 = vunpack.c.l.b16 %v4998
    %v5131 = vunpack.c.l.b16 %v4999
    %v5132 = vunpack.c.l.b16 %v5000
    %v5133 = vunpack.c.l.b16 %v5001
    %v5134 = vunpack.c.l.b16 %v5002
    %v5135 = vunpack.c.l.b16 %v5003
    %v5136 = vunpack.c.l.b16 %v5004
    %v5137 = vunpack.c.l.b16 %v5005
    %v5138 = vunpack.c.l.b16 %v5006
    %v5139 = vunpack.c.l.b16 %v5007
    %v5140 = vunpack.c.l.b16 %v5008
    %v5141 = vunpack.c.l.b16 %v5009
    %v5142 = vunpack.c.l.b16 %v5010
    %v5143 = vunpack.c.l.b16 %v5011
    %v5144 = vunpack.c.l.b16 %v5012
    %v5145 = vunpack.c.l.b16 %v5013
    %v5146 = vunpack.c.l.b16 %v5014
    %v5147 = vunpack.c.l.b16 %v5015
    %v5148 = vunpack.c.l.b16 %v5016
    %v5149 = vunpack.c.l.b16 %v5017
    %v5150 = vunpack.c.l.b16 %v5018
    %v5151 = vunpack.c.l.b16 %v5019
    %v5152 = vunpack.c.l.b16 %v5020
    %v5153 = vunpack.c.l.b16 %v5021
    %v5154 = vunpack.c.l.b16 %v5022
    %v5155 = vunpack.c.l.b16 %v5023
    %v5156 = vunpack.c.l.b16 %v5024
    %v5157 = vunpack.c.l.b16 %v5025
    %v5158 = vunpack.c.l.b16 %v5026
    %v5159 = vunpack.c.l.b16 %v5027
    %v5160 = vunpack.c.l.b16 %v5028
    %v5161 = vunpack.c.l.b16 %v5029
    %v5162 = vunpack.c.l.b16 %v5030
    %v5163 = vunpack.c.l.b16 %v5031
    %v5164 = vunpack.c.l.b16 %v5032
    %v5165 = vunpack.c.l.b16 %v5033
    %v5166 = vunpack.c.l.b16 %v5034
    %v5167 = vunpack.c.l.b16 %v5035
    %v5168 = vunpack.c.l.b16 %v5036
    %v5169 = vpack.c.b16 %v5106, %v5105
    %v5170 = vpack.c.b16 %v5108, %v5107
    %v5171 = vpack.c.b16 %v5110, %v5109
    %v5172 = vpack.c.b16 %v5112, %v5111
    %v5173 = vpack.c.b16 %v5114, %v5113
    %v5174 = vpack.c.b16 %v5116, %v5115
    %v5175 = vpack.c.b16 %v5118, %v5117
    %v5176 = vpack.c.b16 %v5120, %v5119
    %v5177 = vpack.c.b16 %v5122, %v5121
    %v5178 = vpack.c.b16 %v5124, %v5123
    %v5179 = vpack.c.b16 %v5126, %v5125
    %v5180 = vpack.c.b16 %v5128, %v5127
    %v5181 = vpack.c.b16 %v5130, %v5129
    %v5182 = vpack.c.b16 %v5132, %v5131
    %v5183 = vpack.c.b16 %v5134, %v5133
    %v5184 = vpack.c.b16 %v5136, %v5135
    %v5185 = vpack.c.b16 %v5138, %v5137
    %v5186 = vpack.c.b16 %v5140, %v5139
    %v5187 = vpack.c.b16 %v5142, %v5141
    %v5188 = vpack.c.b16 %v5144, %v5143
    %v5189 = vpack.c.b16 %v5146, %v5145
    %v5190 = vpack.c.b16 %v5148, %v5147
    %v5191 = vpack.c.b16 %v5150, %v5149
    %v5192 = vpack.c.b16 %v5152, %v5151
    %v5193 = vpack.c.b16 %v5154, %v5153
    %v5194 = vpack.c.b16 %v5156, %v5155
    %v5195 = vpack.c.b16 %v5158, %v5157
    %v5196 = vpack.c.b16 %v5160, %v5159
    %v5197 = vpack.c.b16 %v5162, %v5161
    %v5198 = vpack.c.b16 %v5164, %v5163
    %v5199 = vpack.c.b16 %v5166, %v5165
    %v5200 = vpack.c.b16 %v5168, %v5167
    %5233 = vmatpush.bf16.msra.mxu0 %v5176
    %5234 = vmatpush.bf16.msra.mxu0 %v5175
    %5235 = vmatpush.bf16.msra.mxu0 %v5174
    %5236 = vmatpush.bf16.msra.mxu0 %v5173
    %5237 = vmatpush.bf16.msra.mxu0 %v5172
    %5238 = vmatpush.bf16.msra.mxu0 %v5171
    %5239 = vmatpush.bf16.msra.mxu0 %v5170
    %5240 = vmatpush.bf16.msra.mxu0 %v5169
    %5241 = vmatmul.bf16.gmra.mxu0 %v4969
    %v5242 = vpop.f32.mrf.mxu0
    %v5243 = vadd.f32 %v5039, %v5242
    %v5244 = vpop.f32.mrf.mxu0
    %5245 = vdwg.mxu0
    %5246 = vmatpush.bf16.msra.mxu0 %v5184
    %5247 = vmatpush.bf16.msra.mxu0 %v5183
    %5248 = vmatpush.bf16.msra.mxu0 %v5182
    %5249 = vmatpush.bf16.msra.mxu0 %v5181
    %5250 = vmatpush.bf16.msra.mxu0 %v5180
    %5251 = vmatpush.bf16.msra.mxu0 %v5179
    %5252 = vmatpush.bf16.msra.mxu0 %v5178
    %5253 = vmatpush.bf16.msra.mxu0 %v5177
    %5254 = vmatmul.bf16.gmra.mxu0 %v4970
    %v5255 = vpop.f32.mrf.mxu0
    %v5256 = vadd.f32 %v5243, %v5255
    %v5257 = vpop.f32.mrf.mxu0
    %5258 = vdwg.mxu0
    %5259 = vmatpush.bf16.msra.mxu0 %v5192
    %5260 = vmatpush.bf16.msra.mxu0 %v5191
    %5261 = vmatpush.bf16.msra.mxu0 %v5190
    %5262 = vmatpush.bf16.msra.mxu0 %v5189
    %5263 = vmatpush.bf16.msra.mxu0 %v5188
    %5264 = vmatpush.bf16.msra.mxu0 %v5187
    %5265 = vmatpush.bf16.msra.mxu0 %v5186
    %5266 = vmatpush.bf16.msra.mxu0 %v5185
    %5267 = vmatmul.bf16.gmra.mxu0 %v4971
    %v5268 = vpop.f32.mrf.mxu0
    %v5269 = vadd.f32 %v5256, %v5268
    %v5270 = vpop.f32.mrf.mxu0
    %5271 = vdwg.mxu0
    %5272 = vmatpush.bf16.msra.mxu0 %v5200
    %5273 = vmatpush.bf16.msra.mxu0 %v5199
    %5274 = vmatpush.bf16.msra.mxu0 %v5198
    %5275 = vmatpush.bf16.msra.mxu0 %v5197
    %5276 = vmatpush.bf16.msra.mxu0 %v5196
    %5277 = vmatpush.bf16.msra.mxu0 %v5195
    %5278 = vmatpush.bf16.msra.mxu0 %v5194
    %5279 = vmatpush.bf16.msra.mxu0 %v5193
    %5280 = vmatmul.bf16.gmra.mxu0 %v4972
    %v5281 = vpop.f32.mrf.mxu0
    %v5282 = vadd.f32 %v5269, %v5281
    %v5283 = vpop.f32.mrf.mxu0
    %5284 = vdwg.mxu0
    %vm5285 = vcmask 74752
    %5286 = vst.msk [vmem:[#allocation2] sm:$0x3] %vm5285, %v5282
    // Predicated region
    $region30: #{ae_forward.5} parent=1 // pred_check
      _
    $region31: #{ae_forward.5} parent=1 // pred_check_branch
      %5288 = sbr.rel (0) target = $region33
    $region32: #{ae_forward.5} parent=1 // pred_region
      %5290 = vsyncadd [#allocation3], 0
      %s5292 = sshll.u32 [#allocation2], 4
      %s5293 = int_to_ptr.vmem [resolvable:$true] %s5292
      %s5294 = sshll.u32 %s7, 4
      %s5295 = int_to_ptr.hbm [resolvable:$true] %s5294
      %5297 = dma.vmem_to_hbm [thread:$0]  %s5293, 32, %s5295, [#allocation3]
    $region33: #{ae_forward.5} parent=1 // pred_fallthru
      _
    // Predicated region
    $region34: #{ae_forward.5} parent=1 // pred_check
      _
    $region35: #{ae_forward.5} parent=1 // pred_check_branch
      %5299 = sbr.rel (0) target = $region37
    $region36: #{ae_forward.5} parent=1 // pred_region
      %5301 = dma.done [#allocation3], 32
    $region37: #{ae_forward.5} parent=1 // pred_fallthru
      _
    %5302 = vsyncpa [#allocation3], 1

</llo_original>
